<compile_context>
chip_gen: v6e
topology: v6e:2x2x1
jax: 0.10.0
libtpu: 0.0.40
codegen_flags: <defaults>
</compile_context>

<pallas_src>
import jax
import jax.numpy as jnp
from jax.experimental import pallas as pl
from jax.experimental.pallas import tpu as pltpu


def _round_up(x, m):
    return ((x + m - 1) // m) * m


def _pad2d(x, rows, cols):
    return jnp.pad(x, ((0, rows - x.shape[0]), (0, cols - x.shape[1])))


# -----------------------------------------------------------------------------
# Pallas kernel: grid = (graph, edge_tile).
# Edge tiles reduce into per-node scratch; node MLPs run in the last-tile epilogue.
# -----------------------------------------------------------------------------
def _schnet_conv_kernel(bf_ref, eh_ref, nh_ref, src_ref, dst_ref,
                        w1_ref, b1_ref, w2_ref, b2_ref,
                        w3_ref, b3_ref, w4_ref, b4_ref,
                        out_ref, acc_ref, deg_ref):
    t = pl.program_id(1)
    f32, bf16 = jnp.float32, jnp.bfloat16

    @pl.when(t == 0)
    def _init():
        acc_ref[...] = jnp.zeros_like(acc_ref)
        deg_ref[...] = jnp.zeros_like(deg_ref)

    # ---- edge MLPs (FGN_MLP1 / FGN_MLP2): bf16 MXU operands, f32 accumulation.
    x = jnp.dot(bf_ref[...], w1_ref[...], preferred_element_type=f32)
    x = jax.nn.silu(x + b1_ref[...])
    x = jnp.dot(x.astype(bf16), w2_ref[...], preferred_element_type=f32)
    x = jax.nn.silu(x + b2_ref[...])

    # edata['h'] = bf * edata['h']   (padded edges have edge_h == 0 -> eh == 0)
    eh = x * eh_ref[...].astype(f32)

    # ---- u_mul_e: gather node_h[src[e]] via an in-kernel one-hot built from iota.
    # 0/1 is exact in bf16; the gather matrix never touches HBM.
    te = bf_ref.shape[0]
    npad = nh_ref.shape[0]
    src_oh = (jax.lax.broadcasted_iota(jnp.int32, (te, npad), 1)
              == src_ref[...]).astype(bf16)                       # [TE, Npad]
    src_h = jnp.dot(src_oh, nh_ref[...], preferred_element_type=f32)  # [TE, Fp]
    m = src_h * eh

    # ---- scatter-sum by destination + degree accumulation (mean applied later).
    # Padded edges carry dst == Npad -> all-zero column -> no contribution.
    agg = (jax.lax.broadcasted_iota(jnp.int32, (npad, te), 0)
           == dst_ref[...]).astype(f32)                           # [Npad, TE]
    acc_ref[...] += jnp.dot(agg.astype(bf16), m.astype(bf16),
                            preferred_element_type=f32)
    deg_ref[...] += jnp.sum(agg, axis=1, keepdims=True)

    # ---- epilogue: mean + node MLPs (IB_MLP1 / IB_MLP2), lane-dense store.
    @pl.when(t == pl.num_programs(1) - 1)
    def _finish():
        nh_new = acc_ref[...] / jnp.maximum(deg_ref[...], 1.0)
        o = jnp.dot(nh_new.astype(bf16), w3_ref[...], preferred_element_type=f32)
        o = jax.nn.silu(o + b3_ref[...])
        o = jnp.dot(o.astype(bf16), w4_ref[...], preferred_element_type=f32)
        o = jax.nn.silu(o + b4_ref[...])
        out_ref[...] = o.astype(out_ref.dtype)


# -----------------------------------------------------------------------------
# Wrapper: pad features to lane-dense 128, pad/stack both graphs, one pallas_call.
# -----------------------------------------------------------------------------
def alignn_conv(params_r, params_a, graph_r, graph_a, *, edge_tile=256):
    """Returns (v, e) = (radius-graph node output, angle-graph node output).

    graph_* = (bf [E,R], edge_h [E,F], node_h [N,F], src [E], dst [E], num_nodes).
    edge_tile: edges per grid step (multiple of 128; use 512-1024 for real graphs).
    """
    assert edge_tile % 128 == 0
    graphs = (graph_r, graph_a)
    params = (params_r, params_a)
    f32, bf16 = jnp.float32, jnp.bfloat16

    feat_dims = [p[k].shape[d]
                 for p in params for k in ("w1", "w2", "w3", "w4") for d in (0, 1)]
    fp = _round_up(max(feat_dims), 128)                    # lane-dense features
    n_pad = _round_up(max(g[5] for g in graphs), 8)
    e_pad = _round_up(max(g[0].shape[0] for g in graphs), edge_tile)
    n_tiles = e_pad // edge_tile

    # ---- pad + stack per-graph tensors along a leading "graph" axis of size 2.
    # Edge / node feature streams go to HBM as bf16 (MXU operands anyway).
    bf_s, eh_s, nh_s, src_s, dst_s = [], [], [], [], []
    for bf, edge_h, node_h, src, dst, _n in graphs:
        e = bf.shape[0]
        bf_s.append(_pad2d(bf.astype(f32), e_pad, fp).astype(bf16))
        eh_s.append(_pad2d(edge_h.astype(f32), e_pad, fp).astype(bf16))
        nh_s.append(_pad2d(node_h.astype(f32), n_pad, fp).astype(bf16))
        src_s.append(jnp.pad(src.astype(jnp.int32), (0, e_pad - e))[:, None])
        dst_s.append(jnp.pad(dst.astype(jnp.int32), (0, e_pad - e),
                             constant_values=n_pad)[None, :])
    stacked = [jnp.stack(a) for a in (bf_s, eh_s, nh_s, src_s, dst_s)]

    w_b = []
    for k in ("w1", "b1", "w2", "b2", "w3", "b3", "w4", "b4"):
        if k.startswith("w"):
            w_b.append(jnp.stack([_pad2d(p[k].astype(f32), fp, fp)
                                  for p in params]).astype(bf16))
        else:
            w_b.append(jnp.stack(
                [_pad2d(p[k].astype(f32).reshape(1, -1), 1, fp)
                 for p in params]))

    # ---- BlockSpecs (leading graph dim squeezed out of the kernel view).
    edge_map = lambda g, t: (g, t, 0)
    graph_map = lambda g, t: (g, 0, 0)
    dst_map = lambda g, t: (g, 0, t)

    in_specs = [
        pl.BlockSpec((None, edge_tile, fp), edge_map),     # bf (bf16)
        pl.BlockSpec((None, edge_tile, fp), edge_map),     # edge_h (bf16)
        pl.BlockSpec((None, n_pad, fp), graph_map),        # node_h (resident, bf16)
        pl.BlockSpec((None, edge_tile, 1), edge_map),      # src indices
        pl.BlockSpec((None, 1, edge_tile), dst_map),       # dst indices
    ]
    for k in ("w1", "b1", "w2", "b2", "w3", "b3", "w4", "b4"):
        shape = (None, fp, fp) if k.startswith("w") else (None, 1, fp)
        in_specs.append(pl.BlockSpec(shape, graph_map))
    out_specs = pl.BlockSpec((None, n_pad, fp), graph_map)

    per_graph_flops = (2 * e_pad * fp * fp * 2        # FGN_MLP1 + FGN_MLP2
                       + 2 * e_pad * n_pad * fp       # one-hot gather
                       + 2 * n_pad * e_pad * fp       # scatter-sum
                       + 2 * n_pad * fp * fp * 2)     # IB_MLP1 + IB_MLP2
    bytes_accessed = (sum(int(a.size) * a.dtype.itemsize for a in stacked)
                      + sum(int(a.size) * a.dtype.itemsize for a in w_b)
                      + 2 * n_pad * fp * 4)
    cost = pl.CostEstimate(flops=2 * per_graph_flops,
                           transcendentals=2 * (2 * e_pad * fp + 2 * n_pad * fp),
                           bytes_accessed=bytes_accessed)

    out = pl.pallas_call(
        _schnet_conv_kernel,
        out_shape=jax.ShapeDtypeStruct((2, n_pad, fp), jnp.float32),
        grid_spec=pltpu.PrefetchScalarGridSpec(
            num_scalar_prefetch=0,
            grid=(2, n_tiles),
            in_specs=in_specs,
            out_specs=out_specs,
            scratch_shapes=[pltpu.VMEM((n_pad, fp), jnp.float32),   # node sums
                            pltpu.VMEM((n_pad, 1), jnp.float32)]),  # degrees
        compiler_params=pltpu.CompilerParams(
            dimension_semantics=("parallel", "arbitrary")),
        cost_estimate=cost,
    )(*stacked, *w_b)

    v = out[0, :graph_r[5], :params_r["w4"].shape[1]]
    e = out[1, :graph_a[5], :params_a["w4"].shape[1]]
    return v, e


# -----------------------------------------------------------------------------
# Pure-JAX references for correctness checking
# -----------------------------------------------------------------------------
def schnet_conv_ref_f32(params, bf, edge_h, node_h, src, dst, num_nodes):
    x = jax.nn.silu(bf @ params["w1"] + params["b1"])
    x = jax.nn.silu(x @ params["w2"] + params["b2"])
    eh = x * edge_h
    m = node_h[src] * eh
    sums = jnp.zeros((num_nodes, m.shape[1]), jnp.float32).at[dst].add(m)
    cnt = jnp.zeros((num_nodes,), jnp.float32).at[dst].add(1.0)
    nh = sums / jnp.maximum(cnt, 1.0)[:, None]
    o = jax.nn.silu(nh @ params["w3"] + params["b3"])
    return jax.nn.silu(o @ params["w4"] + params["b4"])


def schnet_conv_ref_bf16(params, bf, edge_h, node_h, src, dst, num_nodes):
    """Mirrors the kernel's bf16-stream / bf16-MXU / f32-accumulate structure."""
    bf16, f32 = jnp.bfloat16, jnp.float32
    q = lambda a: a.astype(bf16).astype(f32)          # bf16 HBM quantization
    bdot = lambda a, b: jnp.dot(a.astype(bf16), b.astype(bf16),
                                preferred_element_type=f32)
    x = jax.nn.silu(bdot(q(bf), params["w1"]) + params["b1"])
    x = jax.nn.silu(bdot(x, params["w2"]) + params["b2"])
    eh = x * q(edge_h)
    src_h = q(node_h)[src]
    m = (src_h * eh).astype(bf16).astype(f32)
    sums = jnp.zeros((num_nodes, m.shape[1]), f32).at[dst].add(m)
    cnt = jnp.zeros((num_nodes,), f32).at[dst].add(1.0)
    nh = sums / jnp.maximum(cnt, 1.0)[:, None]
    o = jax.nn.silu(bdot(nh, params["w3"]) + params["b3"])
    return jax.nn.silu(bdot(o, params["w4"]) + params["b4"])


# -----------------------------------------------------------------------------
# Deterministic parameter / input construction
# -----------------------------------------------------------------------------
def make_mlp_params(key, shapes):
    """shapes: list of (din, dout) for (FGN_MLP1, FGN_MLP2, IB_MLP1, IB_MLP2)."""
    params = {}
    for i, (din, dout) in enumerate(shapes, start=1):
        key, kw, kb = jax.random.split(key, 3)
        params[f"w{i}"] = (jax.random.normal(kw, (din, dout), jnp.float32)
                           / jnp.sqrt(jnp.float32(din)))
        params[f"b{i}"] = 0.01 * jax.random.normal(kb, (1, dout), jnp.float32)
    return params


if __name__ == "__main__":
    # AlignnConv(in_feats=64, out_feats=64):
    #   r_conv / angle_conv = SchnetConv(in_feats=64, radial_feats=64, out_feats=64)
    F = 64
    key = jax.random.PRNGKey(0)
    k_r, k_a, k_in = jax.random.split(key, 3)

    mlp_shapes = [(F, F), (F, F), (F, F), (F, F)]
    params_r = make_mlp_params(k_r, mlp_shapes)
    params_a = make_mlp_params(k_a, mlp_shapes)

    # radius graph: 16 nodes, 32 edges
    N_r, E_r = 16, 32
    e_r = jnp.arange(E_r)
    src_r = (e_r * 3) % N_r
    dst_r = (e_r * 5 + 1) % N_r

    # angle (line) graph: 32 nodes, 48 edges
    N_a, E_a = 32, 48
    e_a = jnp.arange(E_a)
    src_a = (e_a * 7) % N_a
    dst_a = (e_a * 11 + 3) % N_a

    ks = jax.random.split(k_in, 6)
    bf_r = jax.random.normal(ks[0], (E_r, F), jnp.float32)
    edge_h_r = jax.random.normal(ks[1], (E_r, F), jnp.float32)
    node_h_r = jax.random.normal(ks[2], (N_r, F), jnp.float32)
    bf_a = jax.random.normal(ks[3], (E_a, F), jnp.float32)
    edge_h_a = jax.random.normal(ks[4], (E_a, F), jnp.float32)
    node_h_a = jax.random.normal(ks[5], (N_a, F), jnp.float32)

    graph_r = (bf_r, edge_h_r, node_h_r, src_r, dst_r, N_r)
    graph_a = (bf_a, edge_h_a, node_h_a, src_a, dst_a, N_a)

    v, e = alignn_conv(params_r, params_a, graph_r, graph_a)
    jax.block_until_ready((v, e))

    # Tight check vs a reference that mirrors the kernel's bf16 math.
    v_m = schnet_conv_ref_bf16(params_r, *graph_r)
    e_m = schnet_conv_ref_bf16(params_a, *graph_a)
    assert jnp.allclose(v, v_m, atol=1e-3, rtol=1e-3), "radius-graph mismatch (bf16 ref)"
    assert jnp.allclose(e, e_m, atol=1e-3, rtol=1e-3), "angle-graph mismatch (bf16 ref)"

    # Loose sanity check vs the original full-f32 semantics.
    v_f = schnet_conv_ref_f32(params_r, *graph_r)
    e_f = schnet_conv_ref_f32(params_a, *graph_a)
    assert jnp.allclose(v, v_f, atol=0.25, rtol=0.25), "radius-graph mismatch (f32 ref)"
    assert jnp.allclose(e, e_f, atol=0.25, rtol=0.25), "angle-graph mismatch (f32 ref)"

    print("KERNEL_OK")
</pallas_src>

<mosaic_0001>
module attributes {stable_mosaic.version = 11 : i64} {
  func.func @_schnet_conv_kernel(%arg0: i32, %arg1: i32, %arg2: memref<1x256x128xbf16, #tpu.memory_space<vmem>>, %arg3: memref<1x256x128xbf16, #tpu.memory_space<vmem>>, %arg4: memref<1x32x128xbf16, #tpu.memory_space<vmem>>, %arg5: memref<1x256x1xi32, #tpu.memory_space<vmem>>, %arg6: memref<1x1x256xi32, #tpu.memory_space<vmem>>, %arg7: memref<1x128x128xbf16, #tpu.memory_space<vmem>>, %arg8: memref<1x1x128xf32, #tpu.memory_space<vmem>>, %arg9: memref<1x128x128xbf16, #tpu.memory_space<vmem>>, %arg10: memref<1x1x128xf32, #tpu.memory_space<vmem>>, %arg11: memref<1x128x128xbf16, #tpu.memory_space<vmem>>, %arg12: memref<1x1x128xf32, #tpu.memory_space<vmem>>, %arg13: memref<1x128x128xbf16, #tpu.memory_space<vmem>>, %arg14: memref<1x1x128xf32, #tpu.memory_space<vmem>>, %arg15: memref<1x32x128xf32, #tpu.memory_space<vmem>>, %arg16: memref<32x128xf32, #tpu.memory_space<vmem>>, %arg17: memref<32x1xf32, #tpu.memory_space<vmem>>) attributes {dimension_semantics = [#tpu.dimension_semantics<parallel>, #tpu.dimension_semantics<arbitrary>], iteration_bounds = array<i64: 2, 1>, scalar_prefetch = 0 : i64, scratch_operands = 2 : i64, tpu.core_type = #tpu.core_type<tc>, window_params = [{transform_indices = @transform_0, window_bounds = array<i64: 1, 256, 128>}, {transform_indices = @transform_1, window_bounds = array<i64: 1, 256, 128>}, {transform_indices = @transform_2, window_bounds = array<i64: 1, 32, 128>}, {transform_indices = @transform_3, window_bounds = array<i64: 1, 256, 1>}, {transform_indices = @transform_4, window_bounds = array<i64: 1, 1, 256>}, {transform_indices = @transform_5, window_bounds = array<i64: 1, 128, 128>}, {transform_indices = @transform_6, window_bounds = array<i64: 1, 1, 128>}, {transform_indices = @transform_7, window_bounds = array<i64: 1, 128, 128>}, {transform_indices = @transform_8, window_bounds = array<i64: 1, 1, 128>}, {transform_indices = @transform_9, window_bounds = array<i64: 1, 128, 128>}, {transform_indices = @transform_10, window_bounds = array<i64: 1, 1, 128>}, {transform_indices = @transform_11, window_bounds = array<i64: 1, 128, 128>}, {transform_indices = @transform_12, window_bounds = array<i64: 1, 1, 128>}, {transform_indices = @transform_13, window_bounds = array<i64: 1, 32, 128>}]} {
    %c0_i32 = arith.constant 0 : i32
    %0 = arith.cmpi eq, %arg1, %c0_i32 : i32
    %1 = arith.extui %0 : i1 to i32
    %c0_i32_0 = arith.constant 0 : i32
    %2 = arith.cmpi ne, %1, %c0_i32_0 : i32
    scf.if %2 {
      %cst_43 = arith.constant 0.000000e+00 : f32
      %69 = vector.broadcast %cst_43 : f32 to vector<32x128xf32>
      %c0_44 = arith.constant 0 : index
      %c0_45 = arith.constant 0 : index
      %70 = vector.load %arg16[%c0_44, %c0_45] : memref<32x128xf32, #tpu.memory_space<vmem>>, vector<32x128xf32>
      tpu.vector_store %arg16[%c0_44, %c0_45], %69 {strides = array<i32>} : memref<32x128xf32, #tpu.memory_space<vmem>>, vector<32x128xf32>,
      %cst_46 = arith.constant 0.000000e+00 : f32
      %71 = vector.broadcast %cst_46 : f32 to vector<32x1xf32>
      %c0_47 = arith.constant 0 : index
      %c0_48 = arith.constant 0 : index
      %72 = vector.load %arg17[%c0_47, %c0_48] : memref<32x1xf32, #tpu.memory_space<vmem>>, vector<32x1xf32>
      tpu.vector_store %arg17[%c0_47, %c0_48], %71 {strides = array<i32>} : memref<32x1xf32, #tpu.memory_space<vmem>>, vector<32x1xf32>,
    } else {
    }
    %c0 = arith.constant 0 : index
    %c0_1 = arith.constant 0 : index
    %c0_2 = arith.constant 0 : index
    %3 = vector.load %arg2[%c0, %c0_1, %c0_2] : memref<1x256x128xbf16, #tpu.memory_space<vmem>>, vector<1x256x128xbf16>
    %4 = vector.shape_cast %3 : vector<1x256x128xbf16> to vector<256x128xbf16>
    %c0_3 = arith.constant 0 : index
    %c0_4 = arith.constant 0 : index
    %c0_5 = arith.constant 0 : index
    %5 = vector.load %arg7[%c0_3, %c0_4, %c0_5] : memref<1x128x128xbf16, #tpu.memory_space<vmem>>, vector<1x128x128xbf16>
    %6 = vector.shape_cast %5 : vector<1x128x128xbf16> to vector<128x128xbf16>
    %cst = arith.constant dense<0.000000e+00> : vector<256x128xf32>
    %7 = tpu.matmul %4, %6, %cst {dimension_numbers = #tpu.dot_dimension_numbers<[1], [0], [0], [1], [0, 0, 1, 1], [], []>} : vector<256x128xbf16>, vector<128x128xbf16>, vector<256x128xf32> -> vector<256x128xf32>
    %c0_6 = arith.constant 0 : index
    %c0_7 = arith.constant 0 : index
    %c0_8 = arith.constant 0 : index
    %8 = vector.load %arg8[%c0_6, %c0_7, %c0_8] : memref<1x1x128xf32, #tpu.memory_space<vmem>>, vector<1x1x128xf32>
    %9 = vector.shape_cast %8 : vector<1x1x128xf32> to vector<1x128xf32>
    %10 = vector.broadcast %9 : vector<1x128xf32> to vector<256x128xf32>
    %11 = arith.addf %7, %10 : vector<256x128xf32>
    %12 = arith.negf %11 : vector<256x128xf32>
    %13 = math.exp %12 : vector<256x128xf32>
    %cst_9 = arith.constant 1.000000e+00 : f32
    %14 = vector.broadcast %cst_9 : f32 to vector<256x128xf32>
    %15 = arith.addf %14, %13 : vector<256x128xf32>
    %16 = arith.divf %14, %15 : vector<256x128xf32>
    %17 = arith.mulf %11, %16 : vector<256x128xf32>
    %18 = arith.truncf %17 : vector<256x128xf32> to vector<256x128xbf16>
    %c0_10 = arith.constant 0 : index
    %c0_11 = arith.constant 0 : index
    %c0_12 = arith.constant 0 : index
    %19 = vector.load %arg9[%c0_10, %c0_11, %c0_12] : memref<1x128x128xbf16, #tpu.memory_space<vmem>>, vector<1x128x128xbf16>
    %20 = vector.shape_cast %19 : vector<1x128x128xbf16> to vector<128x128xbf16>
    %cst_13 = arith.constant dense<0.000000e+00> : vector<256x128xf32>
    %21 = tpu.matmul %18, %20, %cst_13 {dimension_numbers = #tpu.dot_dimension_numbers<[1], [0], [0], [1], [0, 0, 1, 1], [], []>} : vector<256x128xbf16>, vector<128x128xbf16>, vector<256x128xf32> -> vector<256x128xf32>
    %c0_14 = arith.constant 0 : index
    %c0_15 = arith.constant 0 : index
    %c0_16 = arith.constant 0 : index
    %22 = vector.load %arg10[%c0_14, %c0_15, %c0_16] : memref<1x1x128xf32, #tpu.memory_space<vmem>>, vector<1x1x128xf32>
    %23 = vector.shape_cast %22 : vector<1x1x128xf32> to vector<1x128xf32>
    %24 = vector.broadcast %23 : vector<1x128xf32> to vector<256x128xf32>
    %25 = arith.addf %21, %24 : vector<256x128xf32>
    %26 = arith.negf %25 : vector<256x128xf32>
    %27 = math.exp %26 : vector<256x128xf32>
    %cst_17 = arith.constant 1.000000e+00 : f32
    %28 = vector.broadcast %cst_17 : f32 to vector<256x128xf32>
    %29 = arith.addf %28, %27 : vector<256x128xf32>
    %30 = arith.divf %28, %29 : vector<256x128xf32>
    %31 = arith.mulf %25, %30 : vector<256x128xf32>
    %c0_18 = arith.constant 0 : index
    %c0_19 = arith.constant 0 : index
    %c0_20 = arith.constant 0 : index
    %32 = vector.load %arg3[%c0_18, %c0_19, %c0_20] : memref<1x256x128xbf16, #tpu.memory_space<vmem>>, vector<1x256x128xbf16>
    %33 = vector.shape_cast %32 : vector<1x256x128xbf16> to vector<256x128xbf16>
    %34 = arith.extf %33 : vector<256x128xbf16> to vector<256x128xf32>
    %35 = arith.mulf %31, %34 : vector<256x128xf32>
    %36 = tpu.iota {dimensions = array<i32: 1>} : vector<256x32xi32>
    %c0_21 = arith.constant 0 : index
    %c0_22 = arith.constant 0 : index
    %c0_23 = arith.constant 0 : index
    %37 = vector.load %arg5[%c0_21, %c0_22, %c0_23] : memref<1x256x1xi32, #tpu.memory_space<vmem>>, vector<1x256x1xi32>
    %38 = vector.shape_cast %37 : vector<1x256x1xi32> to vector<256x1xi32>
    %39 = vector.broadcast %38 : vector<256x1xi32> to vector<256x32xi32>
    %40 = arith.cmpi eq, %36, %39 : vector<256x32xi32>
    %41 = arith.extui %40 : vector<256x32xi1> to vector<256x32xi32>
    %42 = arith.sitofp %41 : vector<256x32xi32> to vector<256x32xf32>
    %43 = arith.truncf %42 : vector<256x32xf32> to vector<256x32xbf16>
    %c0_24 = arith.constant 0 : index
    %c0_25 = arith.constant 0 : index
    %c0_26 = arith.constant 0 : index
    %44 = vector.load %arg4[%c0_24, %c0_25, %c0_26] : memref<1x32x128xbf16, #tpu.memory_space<vmem>>, vector<1x32x128xbf16>
    %45 = vector.shape_cast %44 : vector<1x32x128xbf16> to vector<32x128xbf16>
    %cst_27 = arith.constant dense<0.000000e+00> : vector<256x128xf32>
    %46 = tpu.matmul %43, %45, %cst_27 {dimension_numbers = #tpu.dot_dimension_numbers<[1], [0], [0], [1], [0, 0, 1, 1], [], []>} : vector<256x32xbf16>, vector<32x128xbf16>, vector<256x128xf32> -> vector<256x128xf32>
    %47 = arith.mulf %46, %35 : vector<256x128xf32>
    %48 = tpu.iota {dimensions = array<i32: 0>} : vector<32x256xi32>
    %c0_28 = arith.constant 0 : index
    %c0_29 = arith.constant 0 : index
    %c0_30 = arith.constant 0 : index
    %49 = vector.load %arg6[%c0_28, %c0_29, %c0_30] : memref<1x1x256xi32, #tpu.memory_space<vmem>>, vector<1x1x256xi32>
    %50 = vector.shape_cast %49 : vector<1x1x256xi32> to vector<1x256xi32>
    %51 = vector.broadcast %50 : vector<1x256xi32> to vector<32x256xi32>
    %52 = arith.cmpi eq, %48, %51 : vector<32x256xi32>
    %53 = arith.extui %52 : vector<32x256xi1> to vector<32x256xi32>
    %54 = arith.sitofp %53 : vector<32x256xi32> to vector<32x256xf32>
    %c0_31 = arith.constant 0 : index
    %c0_32 = arith.constant 0 : index
    %55 = vector.load %arg16[%c0_31, %c0_32] : memref<32x128xf32, #tpu.memory_space<vmem>>, vector<32x128xf32>
    %56 = arith.truncf %54 : vector<32x256xf32> to vector<32x256xbf16>
    %57 = arith.truncf %47 : vector<256x128xf32> to vector<256x128xbf16>
    %cst_33 = arith.constant dense<0.000000e+00> : vector<32x128xf32>
    %58 = tpu.matmul %56, %57, %cst_33 {dimension_numbers = #tpu.dot_dimension_numbers<[1], [0], [0], [1], [0, 0, 1, 1], [], []>} : vector<32x256xbf16>, vector<256x128xbf16>, vector<32x128xf32> -> vector<32x128xf32>
    %59 = arith.addf %55, %58 : vector<32x128xf32>
    %c0_34 = arith.constant 0 : index
    %c0_35 = arith.constant 0 : index
    %60 = vector.load %arg16[%c0_34, %c0_35] : memref<32x128xf32, #tpu.memory_space<vmem>>, vector<32x128xf32>
    tpu.vector_store %arg16[%c0_34, %c0_35], %59 {strides = array<i32>} : memref<32x128xf32, #tpu.memory_space<vmem>>, vector<32x128xf32>,
    %c0_36 = arith.constant 0 : index
    %c0_37 = arith.constant 0 : index
    %61 = vector.load %arg17[%c0_36, %c0_37] : memref<32x1xf32, #tpu.memory_space<vmem>>, vector<32x1xf32>
    %cst_38 = arith.constant dense<0.000000e+00> : vector<32xf32>
    %62 = vector.multi_reduction <add>, %54, %cst_38 [1] : vector<32x256xf32> to vector<32xf32>
    %63 = vector.shape_cast %62 : vector<32xf32> to vector<32x1xf32>
    %64 = arith.addf %61, %63 : vector<32x1xf32>
    %c0_39 = arith.constant 0 : index
    %c0_40 = arith.constant 0 : index
    %65 = vector.load %arg17[%c0_39, %c0_40] : memref<32x1xf32, #tpu.memory_space<vmem>>, vector<32x1xf32>
    tpu.vector_store %arg17[%c0_39, %c0_40], %64 {strides = array<i32>} : memref<32x1xf32, #tpu.memory_space<vmem>>, vector<32x1xf32>,
    %c0_i32_41 = arith.constant 0 : i32
    %66 = arith.cmpi eq, %arg1, %c0_i32_41 : i32
    %67 = arith.extui %66 : i1 to i32
    %c0_i32_42 = arith.constant 0 : i32
    %68 = arith.cmpi ne, %67, %c0_i32_42 : i32
    scf.if %68 {
      %c0_43 = arith.constant 0 : index
      %c0_44 = arith.constant 0 : index
      %69 = vector.load %arg16[%c0_43, %c0_44] : memref<32x128xf32, #tpu.memory_space<vmem>>, vector<32x128xf32>
      %c0_45 = arith.constant 0 : index
      %c0_46 = arith.constant 0 : index
      %70 = vector.load %arg17[%c0_45, %c0_46] : memref<32x1xf32, #tpu.memory_space<vmem>>, vector<32x1xf32>
      %cst_47 = arith.constant 1.000000e+00 : f32
      %71 = vector.broadcast %cst_47 : f32 to vector<32x1xf32>
      %72 = arith.maximumf %70, %71 : vector<32x1xf32>
      %73 = vector.broadcast %72 : vector<32x1xf32> to vector<32x128xf32>
      %74 = arith.divf %69, %73 : vector<32x128xf32>
      %75 = arith.truncf %74 : vector<32x128xf32> to vector<32x128xbf16>
      %c0_48 = arith.constant 0 : index
      %c0_49 = arith.constant 0 : index
      %c0_50 = arith.constant 0 : index
      %76 = vector.load %arg11[%c0_48, %c0_49, %c0_50] : memref<1x128x128xbf16, #tpu.memory_space<vmem>>, vector<1x128x128xbf16>
      %77 = vector.shape_cast %76 : vector<1x128x128xbf16> to vector<128x128xbf16>
      %cst_51 = arith.constant dense<0.000000e+00> : vector<32x128xf32>
      %78 = tpu.matmul %75, %77, %cst_51 {dimension_numbers = #tpu.dot_dimension_numbers<[1], [0], [0], [1], [0, 0, 1, 1], [], []>} : vector<32x128xbf16>, vector<128x128xbf16>, vector<32x128xf32> -> vector<32x128xf32>
      %c0_52 = arith.constant 0 : index
      %c0_53 = arith.constant 0 : index
      %c0_54 = arith.constant 0 : index
      %79 = vector.load %arg12[%c0_52, %c0_53, %c0_54] : memref<1x1x128xf32, #tpu.memory_space<vmem>>, vector<1x1x128xf32>
      %80 = vector.shape_cast %79 : vector<1x1x128xf32> to vector<1x128xf32>
      %81 = vector.broadcast %80 : vector<1x128xf32> to vector<32x128xf32>
      %82 = arith.addf %78, %81 : vector<32x128xf32>
      %83 = arith.negf %82 : vector<32x128xf32>
      %84 = math.exp %83 : vector<32x128xf32>
      %cst_55 = arith.constant 1.000000e+00 : f32
      %85 = vector.broadcast %cst_55 : f32 to vector<32x128xf32>
      %86 = arith.addf %85, %84 : vector<32x128xf32>
      %87 = arith.divf %85, %86 : vector<32x128xf32>
      %88 = arith.mulf %82, %87 : vector<32x128xf32>
      %89 = arith.truncf %88 : vector<32x128xf32> to vector<32x128xbf16>
      %c0_56 = arith.constant 0 : index
      %c0_57 = arith.constant 0 : index
      %c0_58 = arith.constant 0 : index
      %90 = vector.load %arg13[%c0_56, %c0_57, %c0_58] : memref<1x128x128xbf16, #tpu.memory_space<vmem>>, vector<1x128x128xbf16>
      %91 = vector.shape_cast %90 : vector<1x128x128xbf16> to vector<128x128xbf16>
      %cst_59 = arith.constant dense<0.000000e+00> : vector<32x128xf32>
      %92 = tpu.matmul %89, %91, %cst_59 {dimension_numbers = #tpu.dot_dimension_numbers<[1], [0], [0], [1], [0, 0, 1, 1], [], []>} : vector<32x128xbf16>, vector<128x128xbf16>, vector<32x128xf32> -> vector<32x128xf32>
      %c0_60 = arith.constant 0 : index
      %c0_61 = arith.constant 0 : index
      %c0_62 = arith.constant 0 : index
      %93 = vector.load %arg14[%c0_60, %c0_61, %c0_62] : memref<1x1x128xf32, #tpu.memory_space<vmem>>, vector<1x1x128xf32>
      %94 = vector.shape_cast %93 : vector<1x1x128xf32> to vector<1x128xf32>
      %95 = vector.broadcast %94 : vector<1x128xf32> to vector<32x128xf32>
      %96 = arith.addf %92, %95 : vector<32x128xf32>
      %97 = arith.negf %96 : vector<32x128xf32>
      %98 = math.exp %97 : vector<32x128xf32>
      %cst_63 = arith.constant 1.000000e+00 : f32
      %99 = vector.broadcast %cst_63 : f32 to vector<32x128xf32>
      %100 = arith.addf %99, %98 : vector<32x128xf32>
      %101 = arith.divf %99, %100 : vector<32x128xf32>
      %102 = arith.mulf %96, %101 : vector<32x128xf32>
      %c0_64 = arith.constant 0 : index
      %c0_65 = arith.constant 0 : index
      %c0_66 = arith.constant 0 : index
      %103 = vector.load %arg15[%c0_64, %c0_65, %c0_66] : memref<1x32x128xf32, #tpu.memory_space<vmem>>, vector<1x32x128xf32>
      %104 = vector.shape_cast %103 : vector<1x32x128xf32> to vector<32x128xf32>
      %105 = vector.shape_cast %102 : vector<32x128xf32> to vector<1x32x128xf32>
      tpu.vector_store %arg15[%c0_64, %c0_65, %c0_66], %105 {strides = array<i32>} : memref<1x32x128xf32, #tpu.memory_space<vmem>>, vector<1x32x128xf32>,
    } else {
    }
    return
  }
  func.func @transform_0(%arg0: i32, %arg1: i32) -> (i32, i32, i32) {
    %c0_i32 = arith.constant 0 : i32
    %c0_i32_0 = arith.constant 0 : i32
    return %arg0, %arg1, %c0_i32 : i32, i32, i32
  }
  func.func @transform_1(%arg0: i32, %arg1: i32) -> (i32, i32, i32) {
    %c0_i32 = arith.constant 0 : i32
    %c0_i32_0 = arith.constant 0 : i32
    return %arg0, %arg1, %c0_i32 : i32, i32, i32
  }
  func.func @transform_2(%arg0: i32, %arg1: i32) -> (i32, i32, i32) {
    %c0_i32 = arith.constant 0 : i32
    %c0_i32_0 = arith.constant 0 : i32
    %c0_i32_1 = arith.constant 0 : i32
    return %arg0, %c0_i32, %c0_i32_0 : i32, i32, i32
  }
  func.func @transform_3(%arg0: i32, %arg1: i32) -> (i32, i32, i32) {
    %c0_i32 = arith.constant 0 : i32
    %c0_i32_0 = arith.constant 0 : i32
    return %arg0, %arg1, %c0_i32 : i32, i32, i32
  }
  func.func @transform_4(%arg0: i32, %arg1: i32) -> (i32, i32, i32) {
    %c0_i32 = arith.constant 0 : i32
    %c0_i32_0 = arith.constant 0 : i32
    return %arg0, %c0_i32, %arg1 : i32, i32, i32
  }
  func.func @transform_5(%arg0: i32, %arg1: i32) -> (i32, i32, i32) {
    %c0_i32 = arith.constant 0 : i32
    %c0_i32_0 = arith.constant 0 : i32
    %c0_i32_1 = arith.constant 0 : i32
    return %arg0, %c0_i32, %c0_i32_0 : i32, i32, i32
  }
  func.func @transform_6(%arg0: i32, %arg1: i32) -> (i32, i32, i32) {
    %c0_i32 = arith.constant 0 : i32
    %c0_i32_0 = arith.constant 0 : i32
    %c0_i32_1 = arith.constant 0 : i32
    return %arg0, %c0_i32, %c0_i32_0 : i32, i32, i32
  }
  func.func @transform_7(%arg0: i32, %arg1: i32) -> (i32, i32, i32) {
    %c0_i32 = arith.constant 0 : i32
    %c0_i32_0 = arith.constant 0 : i32
    %c0_i32_1 = arith.constant 0 : i32
    return %arg0, %c0_i32, %c0_i32_0 : i32, i32, i32
  }
  func.func @transform_8(%arg0: i32, %arg1: i32) -> (i32, i32, i32) {
    %c0_i32 = arith.constant 0 : i32
    %c0_i32_0 = arith.constant 0 : i32
    %c0_i32_1 = arith.constant 0 : i32
    return %arg0, %c0_i32, %c0_i32_0 : i32, i32, i32
  }
  func.func @transform_9(%arg0: i32, %arg1: i32) -> (i32, i32, i32) {
    %c0_i32 = arith.constant 0 : i32
    %c0_i32_0 = arith.constant 0 : i32
    %c0_i32_1 = arith.constant 0 : i32
    return %arg0, %c0_i32, %c0_i32_0 : i32, i32, i32
  }
  func.func @transform_10(%arg0: i32, %arg1: i32) -> (i32, i32, i32) {
    %c0_i32 = arith.constant 0 : i32
    %c0_i32_0 = arith.constant 0 : i32
    %c0_i32_1 = arith.constant 0 : i32
    return %arg0, %c0_i32, %c0_i32_0 : i32, i32, i32
  }
  func.func @transform_11(%arg0: i32, %arg1: i32) -> (i32, i32, i32) {
    %c0_i32 = arith.constant 0 : i32
    %c0_i32_0 = arith.constant 0 : i32
    %c0_i32_1 = arith.constant 0 : i32
    return %arg0, %c0_i32, %c0_i32_0 : i32, i32, i32
  }
  func.func @transform_12(%arg0: i32, %arg1: i32) -> (i32, i32, i32) {
    %c0_i32 = arith.constant 0 : i32
    %c0_i32_0 = arith.constant 0 : i32
    %c0_i32_1 = arith.constant 0 : i32
    return %arg0, %c0_i32, %c0_i32_0 : i32, i32, i32
  }
  func.func @transform_13(%arg0: i32, %arg1: i32) -> (i32, i32, i32) {
    %c0_i32 = arith.constant 0 : i32
    %c0_i32_0 = arith.constant 0 : i32
    %c0_i32_1 = arith.constant 0 : i32
    return %arg0, %c0_i32, %c0_i32_0 : i32, i32, i32
  }
}

</mosaic_0001>

<llo_original>
// kernel: tpu_custom_call.1
$region0: #{tpu_custom_call.1}
  #allocation0 [shape = 'u32[]', space=smem, size = 0x4, offset = 0x4, fixed_abs, tag = 'smem constant byte address 0x4 - core index']
  #allocation1 [shape = 'u32[144,128]{1,0:T(1,128)}', space=vmem, size = 0x12000, scoped, tag = 'internal scratch']
  #allocation2 [shape = 'f32[32,128]{1,0:T(8,128)}', space=vmem, size = 0x4000, scoped, tag = 'scratch operand']
  #allocation3 [shape = 'f32[32,1]{1,0:T(8,128)}', space=vmem, size = 0x4000, scoped, tag = 'scratch operand']
  %s0 = inlined_call_operand.vmem [shape: bf16[2,256,128], index: 0, kind: input, shape index: {}]
  %s1 = inlined_call_operand.vmem [shape: bf16[2,256,128], index: 1, kind: input, shape index: {}]
  %s2 = inlined_call_operand.hbm [shape: bf16[2,32,128], index: 2, kind: input, shape index: {}]
  %s3 = inlined_call_operand.vmem [shape: s32[2,256,1], index: 3, kind: input, shape index: {}]
  %s4 = inlined_call_operand.vmem [shape: s32[2,1,256], index: 4, kind: input, shape index: {}]
  %s5 = inlined_call_operand.hbm [shape: bf16[2,128,128], index: 5, kind: input, shape index: {}]
  %s6 = inlined_call_operand.vmem [shape: f32[2,1,128], index: 6, kind: input, shape index: {}]
  %s7 = inlined_call_operand.hbm [shape: bf16[2,128,128], index: 7, kind: input, shape index: {}]
  %s8 = inlined_call_operand.vmem [shape: f32[2,1,128], index: 8, kind: input, shape index: {}]
  %s9 = inlined_call_operand.hbm [shape: bf16[2,128,128], index: 9, kind: input, shape index: {}]
  %s10 = inlined_call_operand.vmem [shape: f32[2,1,128], index: 10, kind: input, shape index: {}]
  %s11 = inlined_call_operand.hbm [shape: bf16[2,128,128], index: 11, kind: input, shape index: {}]
  %s12 = inlined_call_operand.vmem [shape: f32[2,1,128], index: 12, kind: input, shape index: {}]
  %s13 = inlined_call_operand.hbm [shape: f32[2,32,128], index: 13, kind: output, shape index: {}]
  %s14 = sld [smem:[#allocation0]]
  $region113: #{tpu_custom_call.1} parent=0
    _
  %s16 = ssub.s32 1, %s14
  %s17 = scalar_select 0, %s16, %s14
  $region1: #{tpu_custom_call.1} parent=0
    #allocation4 [shape = 'u8[16384]{0}', space=vmem, size = 0x4000, scoped, tag = 'input window, operand 2']
    #allocation5 [shape = 's32[2]{0}', space=sflag, size = 0x8, scoped, tag = 'scoped memory for tpu_custom_call.1']
    #allocation6 [shape = 's32[2]{0}', space=sflag, size = 0x8, scoped, tag = 'scoped memory for tpu_custom_call.1']
    #allocation7 [shape = 'u8[65536]{0}', space=vmem, size = 0x10000, scoped, tag = 'input window, operand 5']
    #allocation8 [shape = 's32[2]{0}', space=sflag, size = 0x8, scoped, tag = 'scoped memory for tpu_custom_call.1']
    #allocation9 [shape = 'u8[65536]{0}', space=vmem, size = 0x10000, scoped, tag = 'input window, operand 7']
    #allocation10 [shape = 'u8[65536]{0}', space=vmem, size = 0x10000, scoped, tag = 'input window, operand 9']
    #allocation11 [shape = 's32[2]{0}', space=sflag, size = 0x8, scoped, tag = 'scoped memory for tpu_custom_call.1']
    #allocation12 [shape = 'u8[65536]{0}', space=vmem, size = 0x10000, scoped, tag = 'input window, operand 11']
    #allocation13 [shape = 'u8[32768]{0}', space=vmem, size = 0x8000, scoped, tag = 'output window, operand 0']
    %18 = vsyncpa [#allocation5], 0
    %s19 = scalar_lea.sflag [#allocation5], 1
    %20 = vsyncpa %s19, 0
    %21 = vsyncpa [#allocation8], 0
    %s22 = scalar_lea.sflag [#allocation8], 1
    %23 = vsyncpa %s22, 0
    %24 = vsyncpa [#allocation11], 0
    %s25 = scalar_lea.sflag [#allocation11], 1
    %26 = vsyncpa %s25, 0
    %27 = vsyncpa [#allocation6], 0
    %s28 = scalar_lea.sflag [#allocation6], 1
    %29 = vsyncpa %s28, 0
    loop: start=0, step=1, limit=4
    $region2: #{tpu_custom_call.1} parent=1 // loop_pre_header
      _
    $region3: #{tpu_custom_call.1} parent=1 // loop_header
      %s31 = sphi 0, %s35
      %p32 = scmp.ge.s32.totalorder %s31, 4
      %s38 = sphi 0, %s50
      %s39 = sphi 0, %s46
      %s40 = sphi 0, %s38
      %s41 = sphi 0, %s39
      %s42 = sphi 0, %s40
      %s43 = sphi 0, %s41
      %s55 = sphi 0, %s57
      %s58 = sphi 0, %s55
      %s59 = sphi 0, %s58
      %s75 = sphi 0, %s59
      %s83 = sphi 0, %s85
      %s86 = sphi 0, %s83
      %s87 = sphi 0, %s86
      %s103 = sphi 0, %s87
      %s109 = sphi 0, %s111
      %s112 = sphi 0, %s109
      %s113 = sphi 0, %s112
      %s129 = sphi 0, %s113
      %s137 = sphi 0, %s139
      %s140 = sphi 0, %s137
      %s141 = sphi 0, %s140
      %s157 = sphi 0, %s141
      %s165 = sphi 0, %s167
      %s168 = sphi 0, %s165
      %s169 = sphi 0, %s168
      %s185 = sphi 0, %s169
      %s191 = sphi 0, %s193
      %s194 = sphi 0, %s191
      %s195 = sphi 0, %s194
      %s211 = sphi 0, %s195
      %s217 = sphi 0, %s219
      %s220 = sphi 0, %s217
      %s221 = sphi 0, %s220
      %s237 = sphi 0, %s221
      %s243 = sphi 0, %s245
      %s246 = sphi 0, %s243
      %s247 = sphi 0, %s246
      %s263 = sphi 0, %s247
      %s269 = sphi 0, %s271
      %s272 = sphi 0, %s269
      %s273 = sphi 0, %s272
      %s289 = sphi 0, %s273
      %s295 = sphi 0, %s297
      %s298 = sphi 0, %s295
      %s299 = sphi 0, %s298
      %s315 = sphi 0, %s299
      %s321 = sphi 0, %s323
      %s324 = sphi 0, %s321
      %s325 = sphi 0, %s324
      %s341 = sphi 0, %s325
      %s347 = sphi 0, %s349
      %s350 = sphi 0, %s347
      %s351 = sphi 0, %s350
      %s367 = sphi 0, %s351
      %s373 = sphi 0, %s375
      %s376 = sphi 0, %s373
      %s377 = sphi 0, %s376
      %s393 = sphi 0, %s377
      %s399 = sphi 0, %s401
      %s402 = sphi 0, %s399
      %s403 = sphi 0, %s402
      %s419 = sphi 0, %s403
    $region4: #{tpu_custom_call.1} parent=1 // loop_header_branch
      %34 = sbr.rel (%p32) target = $region8
    $region5: #{tpu_custom_call.1} parent=1 // loop_body
      %s36 = ssub.s32 %s31, 1
      %s37 = ssub.s32 %s31, 2
      %s44 = sadd.s32 1, %s39
      %p45 = scmp.ge.s32.totalorder %s44, 1
      %s46 = scalar_select %p45, 0, %s44
      %s47 = sadd.s32 1, %s38
      %s48 = scalar_select %p45, %s47, %s38
      %p49 = scmp.ge.s32.totalorder %s48, 2
      %s50 = scalar_select %p49, 0, %s48
      %s51 = ssub.s32 %s38, %s50
      %s52 = ssub.s32 %s39, %s46
      %s53 = sor.u32 %s51, %s52
      %p54 = scmp.eq.s32.totalorder %s53, 0
      %s56 = sadd.s32 %s55, 1
      %s57 = scalar_select %p54, %s55, %s56
      %p60 = pneg %p54
      %p61 = scmp.eq.s32.totalorder %s31, 1
      %p62 = por %p60, %p61
      %p63 = scmp.ne.s32.totalorder %s55, %s58
      %p64 = scmp.eq.s32.totalorder %s31, 0
      %p65 = por %p63, %p64
      %p66 = scmp.ne.s32.totalorder %s55, %s58
      %p67 = scmp.eq.s32.totalorder %s36, 1
      %p68 = por %p66, %p67
      %p69 = scmp.ne.s32.totalorder %s58, %s59
      %p70 = scmp.eq.s32.totalorder %s36, 0
      %p71 = por %p69, %p70
      %p72 = scmp.ne.s32.totalorder %s58, %s59
      %p73 = scmp.eq.s32.totalorder %s37, 1
      %p74 = por %p72, %p73
      %p76 = scmp.ne.s32.totalorder %s59, %s75
      %p77 = scmp.eq.s32.totalorder %s37, 0
      %p78 = por %p76, %p77
      %s79 = ssub.s32 %s38, %s50
      %s80 = ssub.s32 %s39, %s46
      %s81 = sor.u32 %s79, %s80
      %p82 = scmp.eq.s32.totalorder %s81, 0
      %s84 = sadd.s32 %s83, 1
      %s85 = scalar_select %p82, %s83, %s84
      %p88 = pneg %p82
      %p89 = scmp.eq.s32.totalorder %s31, 1
      %p90 = por %p88, %p89
      %p91 = scmp.ne.s32.totalorder %s83, %s86
      %p92 = scmp.eq.s32.totalorder %s31, 0
      %p93 = por %p91, %p92
      %p94 = scmp.ne.s32.totalorder %s83, %s86
      %p95 = scmp.eq.s32.totalorder %s36, 1
      %p96 = por %p94, %p95
      %p97 = scmp.ne.s32.totalorder %s86, %s87
      %p98 = scmp.eq.s32.totalorder %s36, 0
      %p99 = por %p97, %p98
      %p100 = scmp.ne.s32.totalorder %s86, %s87
      %p101 = scmp.eq.s32.totalorder %s37, 1
      %p102 = por %p100, %p101
      %p104 = scmp.ne.s32.totalorder %s87, %s103
      %p105 = scmp.eq.s32.totalorder %s37, 0
      %p106 = por %p104, %p105
      %s107 = ssub.s32 %s38, %s50
      %p108 = scmp.eq.s32.totalorder %s107, 0
      %s110 = sadd.s32 %s109, 1
      %s111 = scalar_select %p108, %s109, %s110
      %p114 = pneg %p108
      %p115 = scmp.eq.s32.totalorder %s31, 1
      %p116 = por %p114, %p115
      %p117 = scmp.ne.s32.totalorder %s109, %s112
      %p118 = scmp.eq.s32.totalorder %s31, 0
      %p119 = por %p117, %p118
      %p120 = scmp.ne.s32.totalorder %s109, %s112
      %p121 = scmp.eq.s32.totalorder %s36, 1
      %p122 = por %p120, %p121
      %p123 = scmp.ne.s32.totalorder %s112, %s113
      %p124 = scmp.eq.s32.totalorder %s36, 0
      %p125 = por %p123, %p124
      %p126 = scmp.ne.s32.totalorder %s112, %s113
      %p127 = scmp.eq.s32.totalorder %s37, 1
      %p128 = por %p126, %p127
      %p130 = scmp.ne.s32.totalorder %s113, %s129
      %p131 = scmp.eq.s32.totalorder %s37, 0
      %p132 = por %p130, %p131
      %s133 = ssub.s32 %s38, %s50
      %s134 = ssub.s32 %s39, %s46
      %s135 = sor.u32 %s133, %s134
      %p136 = scmp.eq.s32.totalorder %s135, 0
      %s138 = sadd.s32 %s137, 1
      %s139 = scalar_select %p136, %s137, %s138
      %p142 = pneg %p136
      %p143 = scmp.eq.s32.totalorder %s31, 1
      %p144 = por %p142, %p143
      %p145 = scmp.ne.s32.totalorder %s137, %s140
      %p146 = scmp.eq.s32.totalorder %s31, 0
      %p147 = por %p145, %p146
      %p148 = scmp.ne.s32.totalorder %s137, %s140
      %p149 = scmp.eq.s32.totalorder %s36, 1
      %p150 = por %p148, %p149
      %p151 = scmp.ne.s32.totalorder %s140, %s141
      %p152 = scmp.eq.s32.totalorder %s36, 0
      %p153 = por %p151, %p152
      %p154 = scmp.ne.s32.totalorder %s140, %s141
      %p155 = scmp.eq.s32.totalorder %s37, 1
      %p156 = por %p154, %p155
      %p158 = scmp.ne.s32.totalorder %s141, %s157
      %p159 = scmp.eq.s32.totalorder %s37, 0
      %p160 = por %p158, %p159
      %s161 = ssub.s32 %s38, %s50
      %s162 = ssub.s32 %s39, %s46
      %s163 = sor.u32 %s161, %s162
      %p164 = scmp.eq.s32.totalorder %s163, 0
      %s166 = sadd.s32 %s165, 1
      %s167 = scalar_select %p164, %s165, %s166
      %p170 = pneg %p164
      %p171 = scmp.eq.s32.totalorder %s31, 1
      %p172 = por %p170, %p171
      %p173 = scmp.ne.s32.totalorder %s165, %s168
      %p174 = scmp.eq.s32.totalorder %s31, 0
      %p175 = por %p173, %p174
      %p176 = scmp.ne.s32.totalorder %s165, %s168
      %p177 = scmp.eq.s32.totalorder %s36, 1
      %p178 = por %p176, %p177
      %p179 = scmp.ne.s32.totalorder %s168, %s169
      %p180 = scmp.eq.s32.totalorder %s36, 0
      %p181 = por %p179, %p180
      %p182 = scmp.ne.s32.totalorder %s168, %s169
      %p183 = scmp.eq.s32.totalorder %s37, 1
      %p184 = por %p182, %p183
      %p186 = scmp.ne.s32.totalorder %s169, %s185
      %p187 = scmp.eq.s32.totalorder %s37, 0
      %p188 = por %p186, %p187
      %s189 = ssub.s32 %s38, %s50
      %p190 = scmp.eq.s32.totalorder %s189, 0
      %s192 = sadd.s32 %s191, 1
      %s193 = scalar_select %p190, %s191, %s192
      %p196 = pneg %p190
      %p197 = scmp.eq.s32.totalorder %s31, 1
      %p198 = por %p196, %p197
      %p199 = scmp.ne.s32.totalorder %s191, %s194
      %p200 = scmp.eq.s32.totalorder %s31, 0
      %p201 = por %p199, %p200
      %p202 = scmp.ne.s32.totalorder %s191, %s194
      %p203 = scmp.eq.s32.totalorder %s36, 1
      %p204 = por %p202, %p203
      %p205 = scmp.ne.s32.totalorder %s194, %s195
      %p206 = scmp.eq.s32.totalorder %s36, 0
      %p207 = por %p205, %p206
      %p208 = scmp.ne.s32.totalorder %s194, %s195
      %p209 = scmp.eq.s32.totalorder %s37, 1
      %p210 = por %p208, %p209
      %p212 = scmp.ne.s32.totalorder %s195, %s211
      %p213 = scmp.eq.s32.totalorder %s37, 0
      %p214 = por %p212, %p213
      %s215 = ssub.s32 %s38, %s50
      %p216 = scmp.eq.s32.totalorder %s215, 0
      %s218 = sadd.s32 %s217, 1
      %s219 = scalar_select %p216, %s217, %s218
      %p222 = pneg %p216
      %p223 = scmp.eq.s32.totalorder %s31, 1
      %p224 = por %p222, %p223
      %p225 = scmp.ne.s32.totalorder %s217, %s220
      %p226 = scmp.eq.s32.totalorder %s31, 0
      %p227 = por %p225, %p226
      %p228 = scmp.ne.s32.totalorder %s217, %s220
      %p229 = scmp.eq.s32.totalorder %s36, 1
      %p230 = por %p228, %p229
      %p231 = scmp.ne.s32.totalorder %s220, %s221
      %p232 = scmp.eq.s32.totalorder %s36, 0
      %p233 = por %p231, %p232
      %p234 = scmp.ne.s32.totalorder %s220, %s221
      %p235 = scmp.eq.s32.totalorder %s37, 1
      %p236 = por %p234, %p235
      %p238 = scmp.ne.s32.totalorder %s221, %s237
      %p239 = scmp.eq.s32.totalorder %s37, 0
      %p240 = por %p238, %p239
      %s241 = ssub.s32 %s38, %s50
      %p242 = scmp.eq.s32.totalorder %s241, 0
      %s244 = sadd.s32 %s243, 1
      %s245 = scalar_select %p242, %s243, %s244
      %p248 = pneg %p242
      %p249 = scmp.eq.s32.totalorder %s31, 1
      %p250 = por %p248, %p249
      %p251 = scmp.ne.s32.totalorder %s243, %s246
      %p252 = scmp.eq.s32.totalorder %s31, 0
      %p253 = por %p251, %p252
      %p254 = scmp.ne.s32.totalorder %s243, %s246
      %p255 = scmp.eq.s32.totalorder %s36, 1
      %p256 = por %p254, %p255
      %p257 = scmp.ne.s32.totalorder %s246, %s247
      %p258 = scmp.eq.s32.totalorder %s36, 0
      %p259 = por %p257, %p258
      %p260 = scmp.ne.s32.totalorder %s246, %s247
      %p261 = scmp.eq.s32.totalorder %s37, 1
      %p262 = por %p260, %p261
      %p264 = scmp.ne.s32.totalorder %s247, %s263
      %p265 = scmp.eq.s32.totalorder %s37, 0
      %p266 = por %p264, %p265
      %s267 = ssub.s32 %s38, %s50
      %p268 = scmp.eq.s32.totalorder %s267, 0
      %s270 = sadd.s32 %s269, 1
      %s271 = scalar_select %p268, %s269, %s270
      %p274 = pneg %p268
      %p275 = scmp.eq.s32.totalorder %s31, 1
      %p276 = por %p274, %p275
      %p277 = scmp.ne.s32.totalorder %s269, %s272
      %p278 = scmp.eq.s32.totalorder %s31, 0
      %p279 = por %p277, %p278
      %p280 = scmp.ne.s32.totalorder %s269, %s272
      %p281 = scmp.eq.s32.totalorder %s36, 1
      %p282 = por %p280, %p281
      %p283 = scmp.ne.s32.totalorder %s272, %s273
      %p284 = scmp.eq.s32.totalorder %s36, 0
      %p285 = por %p283, %p284
      %p286 = scmp.ne.s32.totalorder %s272, %s273
      %p287 = scmp.eq.s32.totalorder %s37, 1
      %p288 = por %p286, %p287
      %p290 = scmp.ne.s32.totalorder %s273, %s289
      %p291 = scmp.eq.s32.totalorder %s37, 0
      %p292 = por %p290, %p291
      %s293 = ssub.s32 %s38, %s50
      %p294 = scmp.eq.s32.totalorder %s293, 0
      %s296 = sadd.s32 %s295, 1
      %s297 = scalar_select %p294, %s295, %s296
      %p300 = pneg %p294
      %p301 = scmp.eq.s32.totalorder %s31, 1
      %p302 = por %p300, %p301
      %p303 = scmp.ne.s32.totalorder %s295, %s298
      %p304 = scmp.eq.s32.totalorder %s31, 0
      %p305 = por %p303, %p304
      %p306 = scmp.ne.s32.totalorder %s295, %s298
      %p307 = scmp.eq.s32.totalorder %s36, 1
      %p308 = por %p306, %p307
      %p309 = scmp.ne.s32.totalorder %s298, %s299
      %p310 = scmp.eq.s32.totalorder %s36, 0
      %p311 = por %p309, %p310
      %p312 = scmp.ne.s32.totalorder %s298, %s299
      %p313 = scmp.eq.s32.totalorder %s37, 1
      %p314 = por %p312, %p313
      %p316 = scmp.ne.s32.totalorder %s299, %s315
      %p317 = scmp.eq.s32.totalorder %s37, 0
      %p318 = por %p316, %p317
      %s319 = ssub.s32 %s38, %s50
      %p320 = scmp.eq.s32.totalorder %s319, 0
      %s322 = sadd.s32 %s321, 1
      %s323 = scalar_select %p320, %s321, %s322
      %p326 = pneg %p320
      %p327 = scmp.eq.s32.totalorder %s31, 1
      %p328 = por %p326, %p327
      %p329 = scmp.ne.s32.totalorder %s321, %s324
      %p330 = scmp.eq.s32.totalorder %s31, 0
      %p331 = por %p329, %p330
      %p332 = scmp.ne.s32.totalorder %s321, %s324
      %p333 = scmp.eq.s32.totalorder %s36, 1
      %p334 = por %p332, %p333
      %p335 = scmp.ne.s32.totalorder %s324, %s325
      %p336 = scmp.eq.s32.totalorder %s36, 0
      %p337 = por %p335, %p336
      %p338 = scmp.ne.s32.totalorder %s324, %s325
      %p339 = scmp.eq.s32.totalorder %s37, 1
      %p340 = por %p338, %p339
      %p342 = scmp.ne.s32.totalorder %s325, %s341
      %p343 = scmp.eq.s32.totalorder %s37, 0
      %p344 = por %p342, %p343
      %s345 = ssub.s32 %s38, %s50
      %p346 = scmp.eq.s32.totalorder %s345, 0
      %s348 = sadd.s32 %s347, 1
      %s349 = scalar_select %p346, %s347, %s348
      %p352 = pneg %p346
      %p353 = scmp.eq.s32.totalorder %s31, 1
      %p354 = por %p352, %p353
      %p355 = scmp.ne.s32.totalorder %s347, %s350
      %p356 = scmp.eq.s32.totalorder %s31, 0
      %p357 = por %p355, %p356
      %p358 = scmp.ne.s32.totalorder %s347, %s350
      %p359 = scmp.eq.s32.totalorder %s36, 1
      %p360 = por %p358, %p359
      %p361 = scmp.ne.s32.totalorder %s350, %s351
      %p362 = scmp.eq.s32.totalorder %s36, 0
      %p363 = por %p361, %p362
      %p364 = scmp.ne.s32.totalorder %s350, %s351
      %p365 = scmp.eq.s32.totalorder %s37, 1
      %p366 = por %p364, %p365
      %p368 = scmp.ne.s32.totalorder %s351, %s367
      %p369 = scmp.eq.s32.totalorder %s37, 0
      %p370 = por %p368, %p369
      %s371 = ssub.s32 %s38, %s50
      %p372 = scmp.eq.s32.totalorder %s371, 0
      %s374 = sadd.s32 %s373, 1
      %s375 = scalar_select %p372, %s373, %s374
      %p378 = pneg %p372
      %p379 = scmp.eq.s32.totalorder %s31, 1
      %p380 = por %p378, %p379
      %p381 = scmp.ne.s32.totalorder %s373, %s376
      %p382 = scmp.eq.s32.totalorder %s31, 0
      %p383 = por %p381, %p382
      %p384 = scmp.ne.s32.totalorder %s373, %s376
      %p385 = scmp.eq.s32.totalorder %s36, 1
      %p386 = por %p384, %p385
      %p387 = scmp.ne.s32.totalorder %s376, %s377
      %p388 = scmp.eq.s32.totalorder %s36, 0
      %p389 = por %p387, %p388
      %p390 = scmp.ne.s32.totalorder %s376, %s377
      %p391 = scmp.eq.s32.totalorder %s37, 1
      %p392 = por %p390, %p391
      %p394 = scmp.ne.s32.totalorder %s377, %s393
      %p395 = scmp.eq.s32.totalorder %s37, 0
      %p396 = por %p394, %p395
      %s397 = ssub.s32 %s38, %s50
      %p398 = scmp.eq.s32.totalorder %s397, 0
      %s400 = sadd.s32 %s399, 1
      %s401 = scalar_select %p398, %s399, %s400
      %p404 = pneg %p398
      %p405 = scmp.eq.s32.totalorder %s31, 1
      %p406 = por %p404, %p405
      %p407 = scmp.ne.s32.totalorder %s399, %s402
      %p408 = scmp.eq.s32.totalorder %s31, 0
      %p409 = por %p407, %p408
      %p410 = scmp.ne.s32.totalorder %s399, %s402
      %p411 = scmp.eq.s32.totalorder %s36, 1
      %p412 = por %p410, %p411
      %p413 = scmp.ne.s32.totalorder %s402, %s403
      %p414 = scmp.eq.s32.totalorder %s36, 0
      %p415 = por %p413, %p414
      %p416 = scmp.ne.s32.totalorder %s402, %s403
      %p417 = scmp.eq.s32.totalorder %s37, 1
      %p418 = por %p416, %p417
      %p420 = scmp.ne.s32.totalorder %s403, %s419
      %p421 = scmp.eq.s32.totalorder %s37, 0
      %p422 = por %p420, %p421
      %p423 = scmp.le.s32.totalorder 1, %s31
      %p424 = scmp.lt.s32.totalorder %s31, 3
      %p425 = pnand %p423, %p424
      %p426 = pneg %p425
      // Predicated region
      $region9: #{tpu_custom_call.1} parent=5 // pred_check
        _
      $region10: #{tpu_custom_call.1} parent=5 // pred_check_branch
        %428 = sbr.rel (%p425) target = $region12
      $region11: #{tpu_custom_call.1} parent=5 // pred_region
        %s429 = ssub.s32 %s31, 1
      $region12: #{tpu_custom_call.1} parent=5 // pred_fallthru
        _
      %p430 = scmp.lt.s32.totalorder %s31, 2
      // Predicated region
      $region13: #{tpu_custom_call.1} parent=5 // pred_check
        %p431 = pneg %p430
      $region14: #{tpu_custom_call.1} parent=5 // pred_check_branch
        %433 = sbr.rel (%p431) target = $region16
      $region15: #{tpu_custom_call.1} parent=5 // pred_region
        // Predicated region
        $region17: #{tpu_custom_call.1} parent=15 // pred_check
          %p434 = pneg %p65
        $region18: #{tpu_custom_call.1} parent=15 // pred_check_branch
          %436 = sbr.rel (%p434) target = $region20
        $region19: #{tpu_custom_call.1} parent=15 // pred_region
          %s437 = smul.u32 32, %s39
          %p438 = scmp.lt.s32.totalorder %s38, 1
          %s439 = scalar_select %p438, %s38, 1
          %p440 = scmp.lt.s32.totalorder %s437, 31
          %s441 = scalar_select %p440, %s437, 31
          %s442 = smul.addr %s439, 32
          %s443 = sadd.s32 %s441, %s442
          %s444 = smul.addr %s443, 4
          %s445 = scalar_lea.vmem %s0, %s444
          %s446 = smul.u32 32, %s39
        $region20: #{tpu_custom_call.1} parent=15 // pred_fallthru
          _
        // Predicated region
        $region21: #{tpu_custom_call.1} parent=15 // pred_check
          %p447 = pneg %p93
        $region22: #{tpu_custom_call.1} parent=15 // pred_check_branch
          %449 = sbr.rel (%p447) target = $region24
        $region23: #{tpu_custom_call.1} parent=15 // pred_region
          %s450 = smul.u32 32, %s39
          %p451 = scmp.lt.s32.totalorder %s38, 1
          %s452 = scalar_select %p451, %s38, 1
          %p453 = scmp.lt.s32.totalorder %s450, 31
          %s454 = scalar_select %p453, %s450, 31
          %s455 = smul.addr %s452, 32
          %s456 = sadd.s32 %s454, %s455
          %s457 = smul.addr %s456, 4
          %s458 = scalar_lea.vmem %s1, %s457
          %s459 = smul.u32 32, %s39
        $region24: #{tpu_custom_call.1} parent=15 // pred_fallthru
          _
        // Predicated region
        $region25: #{tpu_custom_call.1} parent=15 // pred_check
          %p460 = pneg %p119
        $region26: #{tpu_custom_call.1} parent=15 // pred_check_branch
          %462 = sbr.rel (%p460) target = $region28
        $region27: #{tpu_custom_call.1} parent=15 // pred_region
          %s463 = sand.u32 %s109, 1
          %s464 = scalar_lea.sflag [#allocation5], %s463
          %s465 = sand.u32 %s109, 1
          %s466 = smul.addr %s465, 16
          %s467 = scalar_lea.vmem [#allocation4], %s466
          %s469 = ssub.s32 256, 256
          %470 = vsyncadd %s464, %s469
          %s471 = smul.addr %s38, 4
          %s472 = smul.addr %s471, 64
          %s473 = scalar_lea.hbm %s2, %s472
          %s474 = sshll.u32 %s467, 4
          %s475 = int_to_ptr.vmem [resolvable:$true] %s474
          %480 = dma.hbm_to_vmem [thread:$0]  %s473, 256, %s475, %s464, 64, 64, 4
        $region28: #{tpu_custom_call.1} parent=15 // pred_fallthru
          _
        // Predicated region
        $region29: #{tpu_custom_call.1} parent=15 // pred_check
          %p481 = pneg %p147
        $region30: #{tpu_custom_call.1} parent=15 // pred_check_branch
          %483 = sbr.rel (%p481) target = $region32
        $region31: #{tpu_custom_call.1} parent=15 // pred_region
          %s484 = smul.u32 32, %s39
          %p485 = scmp.lt.s32.totalorder %s38, 1
          %s486 = scalar_select %p485, %s38, 1
          %p487 = scmp.lt.s32.totalorder %s484, 31
          %s488 = scalar_select %p487, %s484, 31
          %s489 = smul.addr %s486, 32
          %s490 = sadd.s32 %s488, %s489
          %s491 = smul.addr %s490, 8
          %s492 = scalar_lea.vmem %s3, %s491
          %s493 = smul.u32 32, %s39
        $region32: #{tpu_custom_call.1} parent=15 // pred_fallthru
          _
        // Predicated region
        $region33: #{tpu_custom_call.1} parent=15 // pred_check
          %p494 = pneg %p175
        $region34: #{tpu_custom_call.1} parent=15 // pred_check_branch
          %496 = sbr.rel (%p494) target = $region36
        $region35: #{tpu_custom_call.1} parent=15 // pred_region
          %s497 = smul.u32 2, %s39
          %p498 = scmp.lt.s32.totalorder %s38, 1
          %s499 = scalar_select %p498, %s38, 1
          %p500 = scmp.lt.s32.totalorder %s497, 1
          %s501 = scalar_select %p500, %s497, 1
          %s502 = smul.addr %s499, 2
          %s503 = sadd.s32 %s501, %s502
          %s504 = scalar_lea.vmem %s4, %s503
          %s505 = smul.u32 2, %s39
        $region36: #{tpu_custom_call.1} parent=15 // pred_fallthru
          _
        // Predicated region
        $region37: #{tpu_custom_call.1} parent=15 // pred_check
          %p506 = pneg %p201
        $region38: #{tpu_custom_call.1} parent=15 // pred_check_branch
          %508 = sbr.rel (%p506) target = $region40
        $region39: #{tpu_custom_call.1} parent=15 // pred_region
          %s509 = sand.u32 %s31, 1
          %s510 = scalar_lea.sflag [#allocation8], %s509
          %s511 = sand.u32 %s191, 1
          %s512 = smul.addr %s511, 64
          %s513 = scalar_lea.vmem [#allocation7], %s512
          %s515 = ssub.s32 1024, 1024
          %516 = vsyncadd %s510, %s515
          %s517 = smul.addr %s38, 16
          %s518 = smul.addr %s517, 64
          %s519 = scalar_lea.hbm %s5, %s518
          %s520 = sshll.u32 %s513, 4
          %s521 = int_to_ptr.vmem [resolvable:$true] %s520
          %526 = dma.hbm_to_vmem [thread:$0]  %s519, 1024, %s521, %s510, 64, 64, 4
        $region40: #{tpu_custom_call.1} parent=15 // pred_fallthru
          _
        // Predicated region
        $region41: #{tpu_custom_call.1} parent=15 // pred_check
          %p527 = pneg %p227
        $region42: #{tpu_custom_call.1} parent=15 // pred_check_branch
          %529 = sbr.rel (%p527) target = $region44
        $region43: #{tpu_custom_call.1} parent=15 // pred_region
          %p530 = scmp.lt.s32.totalorder %s38, 1
          %s531 = scalar_select %p530, %s38, 1
          %s532 = scalar_lea.vmem %s6, %s531
        $region44: #{tpu_custom_call.1} parent=15 // pred_fallthru
          _
        // Predicated region
        $region45: #{tpu_custom_call.1} parent=15 // pred_check
          %p533 = pneg %p253
        $region46: #{tpu_custom_call.1} parent=15 // pred_check_branch
          %535 = sbr.rel (%p533) target = $region48
        $region47: #{tpu_custom_call.1} parent=15 // pred_region
          %s536 = sand.u32 %s31, 1
          %s537 = scalar_lea.sflag [#allocation8], %s536
          %s538 = sand.u32 %s243, 1
          %s539 = smul.addr %s538, 64
          %s540 = scalar_lea.vmem [#allocation9], %s539
          %s542 = ssub.s32 1024, 1024
          %543 = vsyncadd %s537, %s542
          %s544 = smul.addr %s38, 16
          %s545 = smul.addr %s544, 64
          %s546 = scalar_lea.hbm %s7, %s545
          %s547 = sshll.u32 %s540, 4
          %s548 = int_to_ptr.vmem [resolvable:$true] %s547
          %553 = dma.hbm_to_vmem [thread:$0]  %s546, 1024, %s548, %s537, 64, 64, 4
        $region48: #{tpu_custom_call.1} parent=15 // pred_fallthru
          _
        // Predicated region
        $region49: #{tpu_custom_call.1} parent=15 // pred_check
          %p554 = pneg %p279
        $region50: #{tpu_custom_call.1} parent=15 // pred_check_branch
          %556 = sbr.rel (%p554) target = $region52
        $region51: #{tpu_custom_call.1} parent=15 // pred_region
          %p557 = scmp.lt.s32.totalorder %s38, 1
          %s558 = scalar_select %p557, %s38, 1
          %s559 = scalar_lea.vmem %s8, %s558
        $region52: #{tpu_custom_call.1} parent=15 // pred_fallthru
          _
        // Predicated region
        $region53: #{tpu_custom_call.1} parent=15 // pred_check
          %p560 = pneg %p305
        $region54: #{tpu_custom_call.1} parent=15 // pred_check_branch
          %562 = sbr.rel (%p560) target = $region56
        $region55: #{tpu_custom_call.1} parent=15 // pred_region
          %s563 = sand.u32 %s31, 1
          %s564 = scalar_lea.sflag [#allocation11], %s563
          %s565 = sand.u32 %s295, 1
          %s566 = smul.addr %s565, 64
          %s567 = scalar_lea.vmem [#allocation10], %s566
          %s569 = ssub.s32 1024, 1024
          %570 = vsyncadd %s564, %s569
          %s571 = smul.addr %s38, 16
          %s572 = smul.addr %s571, 64
          %s573 = scalar_lea.hbm %s9, %s572
          %s574 = sshll.u32 %s567, 4
          %s575 = int_to_ptr.vmem [resolvable:$true] %s574
          %580 = dma.hbm_to_vmem [thread:$0]  %s573, 1024, %s575, %s564, 64, 64, 4
        $region56: #{tpu_custom_call.1} parent=15 // pred_fallthru
          _
        // Predicated region
        $region57: #{tpu_custom_call.1} parent=15 // pred_check
          %p581 = pneg %p331
        $region58: #{tpu_custom_call.1} parent=15 // pred_check_branch
          %583 = sbr.rel (%p581) target = $region60
        $region59: #{tpu_custom_call.1} parent=15 // pred_region
          %p584 = scmp.lt.s32.totalorder %s38, 1
          %s585 = scalar_select %p584, %s38, 1
          %s586 = scalar_lea.vmem %s10, %s585
        $region60: #{tpu_custom_call.1} parent=15 // pred_fallthru
          _
        // Predicated region
        $region61: #{tpu_custom_call.1} parent=15 // pred_check
          %p587 = pneg %p357
        $region62: #{tpu_custom_call.1} parent=15 // pred_check_branch
          %589 = sbr.rel (%p587) target = $region64
        $region63: #{tpu_custom_call.1} parent=15 // pred_region
          %s590 = sand.u32 %s31, 1
          %s591 = scalar_lea.sflag [#allocation11], %s590
          %s592 = sand.u32 %s347, 1
          %s593 = smul.addr %s592, 64
          %s594 = scalar_lea.vmem [#allocation12], %s593
          %s596 = ssub.s32 1024, 1024
          %597 = vsyncadd %s591, %s596
          %s598 = smul.addr %s38, 16
          %s599 = smul.addr %s598, 64
          %s600 = scalar_lea.hbm %s11, %s599
          %s601 = sshll.u32 %s594, 4
          %s602 = int_to_ptr.vmem [resolvable:$true] %s601
          %607 = dma.hbm_to_vmem [thread:$0]  %s600, 1024, %s602, %s591, 64, 64, 4
        $region64: #{tpu_custom_call.1} parent=15 // pred_fallthru
          _
        // Predicated region
        $region65: #{tpu_custom_call.1} parent=15 // pred_check
          %p608 = pneg %p383
        $region66: #{tpu_custom_call.1} parent=15 // pred_check_branch
          %610 = sbr.rel (%p608) target = $region68
        $region67: #{tpu_custom_call.1} parent=15 // pred_region
          %p611 = scmp.lt.s32.totalorder %s38, 1
          %s612 = scalar_select %p611, %s38, 1
          %s613 = scalar_lea.vmem %s12, %s612
        $region68: #{tpu_custom_call.1} parent=15 // pred_fallthru
          _
      $region16: #{tpu_custom_call.1} parent=5 // pred_fallthru
        _
      %p614 = scmp.le.s32.totalorder 1, %s31
      %p615 = scmp.lt.s32.totalorder %s31, 3
      %p616 = pnand %p614, %p615
      %p617 = pneg %p616
      // Predicated region
      $region69: #{tpu_custom_call.1} parent=5 // pred_check
        _
      $region70: #{tpu_custom_call.1} parent=5 // pred_check_branch
        %619 = sbr.rel (%p616) target = $region72
      $region71: #{tpu_custom_call.1} parent=5 // pred_region
        %s620 = ssub.s32 %s31, 1
        %s621 = sand.u32 %s112, 1
        %s622 = scalar_lea.sflag [#allocation5], %s621
        %s623 = sand.u32 %s112, 1
        %s624 = smul.addr %s623, 16
        %s625 = scalar_lea.vmem [#allocation4], %s624
        // Predicated region
        $region73: #{tpu_custom_call.1} parent=71 // pred_check
          %p626 = pneg %p125
        $region74: #{tpu_custom_call.1} parent=71 // pred_check_branch
          %628 = sbr.rel (%p626) target = $region76
        $region75: #{tpu_custom_call.1} parent=71 // pred_region
          %629 = dma.done %s622, 256
        $region76: #{tpu_custom_call.1} parent=71 // pred_fallthru
          _
        %s630 = sand.u32 %s36, 1
        %s631 = scalar_lea.sflag [#allocation8], %s630
        %s632 = sand.u32 %s194, 1
        %s633 = smul.addr %s632, 64
        %s634 = scalar_lea.vmem [#allocation7], %s633
        // Predicated region
        $region77: #{tpu_custom_call.1} parent=71 // pred_check
          %p635 = pneg %p207
        $region78: #{tpu_custom_call.1} parent=71 // pred_check_branch
          %637 = sbr.rel (%p635) target = $region80
        $region79: #{tpu_custom_call.1} parent=71 // pred_region
          %638 = dma.done %s631, 1024
        $region80: #{tpu_custom_call.1} parent=71 // pred_fallthru
          _
        %s639 = sand.u32 %s36, 1
        %s640 = scalar_lea.sflag [#allocation8], %s639
        %s641 = sand.u32 %s246, 1
        %s642 = smul.addr %s641, 64
        %s643 = scalar_lea.vmem [#allocation9], %s642
        // Predicated region
        $region81: #{tpu_custom_call.1} parent=71 // pred_check
          %p644 = pneg %p259
        $region82: #{tpu_custom_call.1} parent=71 // pred_check_branch
          %646 = sbr.rel (%p644) target = $region84
        $region83: #{tpu_custom_call.1} parent=71 // pred_region
          %647 = dma.done %s640, 1024
        $region84: #{tpu_custom_call.1} parent=71 // pred_fallthru
          _
        %s648 = sand.u32 %s36, 1
        %s649 = scalar_lea.sflag [#allocation11], %s648
        %s650 = sand.u32 %s298, 1
        %s651 = smul.addr %s650, 64
        %s652 = scalar_lea.vmem [#allocation10], %s651
        // Predicated region
        $region85: #{tpu_custom_call.1} parent=71 // pred_check
          %p653 = pneg %p311
        $region86: #{tpu_custom_call.1} parent=71 // pred_check_branch
          %655 = sbr.rel (%p653) target = $region88
        $region87: #{tpu_custom_call.1} parent=71 // pred_region
          %656 = dma.done %s649, 1024
        $region88: #{tpu_custom_call.1} parent=71 // pred_fallthru
          _
        %s657 = sand.u32 %s36, 1
        %s658 = scalar_lea.sflag [#allocation11], %s657
        %s659 = sand.u32 %s350, 1
        %s660 = smul.addr %s659, 64
        %s661 = scalar_lea.vmem [#allocation12], %s660
        // Predicated region
        $region89: #{tpu_custom_call.1} parent=71 // pred_check
          %p662 = pneg %p363
        $region90: #{tpu_custom_call.1} parent=71 // pred_check_branch
          %664 = sbr.rel (%p662) target = $region92
        $region91: #{tpu_custom_call.1} parent=71 // pred_region
          %665 = dma.done %s658, 1024
        $region92: #{tpu_custom_call.1} parent=71 // pred_fallthru
          _
        %s666 = smul.u32 32, %s41
        %p667 = scmp.lt.s32.totalorder %s40, 1
        %s668 = scalar_select %p667, %s40, 1
        %p669 = scmp.lt.s32.totalorder %s666, 31
        %s670 = scalar_select %p669, %s666, 31
        %s671 = smul.addr %s668, 32
        %s672 = sadd.s32 %s670, %s671
        %s673 = smul.addr %s672, 4
        %s674 = scalar_lea.vmem %s0, %s673
        %p675 = pneg %p71
        %p676 = pneg %p68
        %s677 = smul.u32 32, %s41
        %p678 = scmp.lt.s32.totalorder %s40, 1
        %s679 = scalar_select %p678, %s40, 1
        %p680 = scmp.lt.s32.totalorder %s677, 31
        %s681 = scalar_select %p680, %s677, 31
        %s682 = smul.addr %s679, 32
        %s683 = sadd.s32 %s681, %s682
        %s684 = smul.addr %s683, 4
        %s685 = scalar_lea.vmem %s1, %s684
        %p686 = pneg %p99
        %p687 = pneg %p96
        %s688 = sand.u32 %s112, 1
        %s689 = scalar_lea.sflag [#allocation5], %s688
        %s690 = sand.u32 %s112, 1
        %s691 = smul.addr %s690, 16
        %s692 = scalar_lea.vmem [#allocation4], %s691
        %p693 = pneg %p125
        %p694 = pneg %p122
        %s695 = smul.u32 32, %s41
        %p696 = scmp.lt.s32.totalorder %s40, 1
        %s697 = scalar_select %p696, %s40, 1
        %p698 = scmp.lt.s32.totalorder %s695, 31
        %s699 = scalar_select %p698, %s695, 31
        %s700 = smul.addr %s697, 32
        %s701 = sadd.s32 %s699, %s700
        %s702 = smul.addr %s701, 8
        %s703 = scalar_lea.vmem %s3, %s702
        %p704 = pneg %p153
        %p705 = pneg %p150
        %s706 = smul.u32 2, %s41
        %p707 = scmp.lt.s32.totalorder %s40, 1
        %s708 = scalar_select %p707, %s40, 1
        %p709 = scmp.lt.s32.totalorder %s706, 1
        %s710 = scalar_select %p709, %s706, 1
        %s711 = smul.addr %s708, 2
        %s712 = sadd.s32 %s710, %s711
        %s713 = scalar_lea.vmem %s4, %s712
        %p714 = pneg %p181
        %p715 = pneg %p178
        %s716 = sand.u32 %s36, 1
        %s717 = scalar_lea.sflag [#allocation8], %s716
        %s718 = sand.u32 %s194, 1
        %s719 = smul.addr %s718, 64
        %s720 = scalar_lea.vmem [#allocation7], %s719
        %p721 = pneg %p207
        %p722 = pneg %p204
        %p723 = scmp.lt.s32.totalorder %s40, 1
        %s724 = scalar_select %p723, %s40, 1
        %s725 = scalar_lea.vmem %s6, %s724
        %p726 = pneg %p233
        %p727 = pneg %p230
        %s728 = sand.u32 %s36, 1
        %s729 = scalar_lea.sflag [#allocation8], %s728
        %s730 = sand.u32 %s246, 1
        %s731 = smul.addr %s730, 64
        %s732 = scalar_lea.vmem [#allocation9], %s731
        %p733 = pneg %p259
        %p734 = pneg %p256
        %p735 = scmp.lt.s32.totalorder %s40, 1
        %s736 = scalar_select %p735, %s40, 1
        %s737 = scalar_lea.vmem %s8, %s736
        %p738 = pneg %p285
        %p739 = pneg %p282
        %s740 = sand.u32 %s36, 1
        %s741 = scalar_lea.sflag [#allocation11], %s740
        %s742 = sand.u32 %s298, 1
        %s743 = smul.addr %s742, 64
        %s744 = scalar_lea.vmem [#allocation10], %s743
        %p745 = pneg %p311
        %p746 = pneg %p308
        %p747 = scmp.lt.s32.totalorder %s40, 1
        %s748 = scalar_select %p747, %s40, 1
        %s749 = scalar_lea.vmem %s10, %s748
        %p750 = pneg %p337
        %p751 = pneg %p334
        %s752 = sand.u32 %s36, 1
        %s753 = scalar_lea.sflag [#allocation11], %s752
        %s754 = sand.u32 %s350, 1
        %s755 = smul.addr %s754, 64
        %s756 = scalar_lea.vmem [#allocation12], %s755
        %p757 = pneg %p363
        %p758 = pneg %p360
        %p759 = scmp.lt.s32.totalorder %s40, 1
        %s760 = scalar_select %p759, %s40, 1
        %s761 = scalar_lea.vmem %s12, %s760
        %p762 = pneg %p389
        %p763 = pneg %p386
        %p764 = pneg %p415
        %p765 = pneg %p412
        %s766 = sand.u32 %s402, 1
        %s767 = scalar_lea.sflag [#allocation6], %s766
        %s768 = sand.u32 %s402, 1
        %s769 = smul.addr %s768, 32
        %s770 = scalar_lea.vmem [#allocation13], %s769
        %s771 = smul.u32 32, %s41
        %p772 = scmp.lt.s32.totalorder %s40, 1
        %s773 = scalar_select %p772, %s40, 1
        %p774 = scmp.lt.s32.totalorder %s771, 31
        %s775 = scalar_select %p774, %s771, 31
        %s776 = smul.addr %s773, 32
        %s777 = sadd.s32 %s775, %s776
        %s778 = smul.addr %s777, 4
        %s779 = scalar_lea.vmem %s0, %s778
        %s780 = smul.u32 32, %s41
        %s781 = smul.u32 32, %s41
        %p782 = scmp.lt.s32.totalorder %s40, 1
        %s783 = scalar_select %p782, %s40, 1
        %p784 = scmp.lt.s32.totalorder %s781, 31
        %s785 = scalar_select %p784, %s781, 31
        %s786 = smul.addr %s783, 32
        %s787 = sadd.s32 %s785, %s786
        %s788 = smul.addr %s787, 4
        %s789 = scalar_lea.vmem %s1, %s788
        %s790 = smul.u32 32, %s41
        %s791 = smul.u32 32, %s41
        %p792 = scmp.lt.s32.totalorder %s40, 1
        %s793 = scalar_select %p792, %s40, 1
        %p794 = scmp.lt.s32.totalorder %s791, 31
        %s795 = scalar_select %p794, %s791, 31
        %s796 = smul.addr %s793, 32
        %s797 = sadd.s32 %s795, %s796
        %s798 = smul.addr %s797, 8
        %s799 = scalar_lea.vmem %s3, %s798
        %s800 = smul.u32 32, %s41
        %s801 = smul.u32 2, %s41
        %p802 = scmp.lt.s32.totalorder %s40, 1
        %s803 = scalar_select %p802, %s40, 1
        %p804 = scmp.lt.s32.totalorder %s801, 1
        %s805 = scalar_select %p804, %s801, 1
        %s806 = smul.addr %s803, 2
        %s807 = sadd.s32 %s805, %s806
        %s808 = scalar_lea.vmem %s4, %s807
        %s809 = smul.u32 2, %s41
        %p810 = scmp.lt.s32.totalorder %s40, 1
        %s811 = scalar_select %p810, %s40, 1
        %s812 = scalar_lea.vmem %s6, %s811
        %p813 = scmp.lt.s32.totalorder %s40, 1
        %s814 = scalar_select %p813, %s40, 1
        %s815 = scalar_lea.vmem %s8, %s814
        %p816 = scmp.lt.s32.totalorder %s40, 1
        %s817 = scalar_select %p816, %s40, 1
        %s818 = scalar_lea.vmem %s10, %s817
        %p819 = scmp.lt.s32.totalorder %s40, 1
        %s820 = scalar_select %p819, %s40, 1
        %s821 = scalar_lea.vmem %s12, %s820
        %p823 = scmp.eq.s32.totalorder %s41, 0
        // Predicated region
        $region93: #{tpu_custom_call.1} parent=71 // pred_check
          %p824 = pneg %p823
        $region94: #{tpu_custom_call.1} parent=71 // pred_check_branch
          %826 = sbr.rel (%p824) target = $region96
        $region95: #{tpu_custom_call.1} parent=71 // pred_region
          %827 = vst [vmem:[#allocation2] sm:$0xff] 0.0
          %828 = vst [vmem:[#allocation2 + $0x8] sm:$0xff] 0.0
          %829 = vst [vmem:[#allocation2 + $0x10] sm:$0xff] 0.0
          %830 = vst [vmem:[#allocation2 + $0x18] sm:$0xff] 0.0
          %vm831 = vcmask 7168
          %832 = vst.msk [vmem:[#allocation3] sm:$0xff] %vm831, 0.0
          %833 = vst.msk [vmem:[#allocation3 + $0x8] sm:$0xff] %vm831, 0.0
          %834 = vst.msk [vmem:[#allocation3 + $0x10] sm:$0xff] %vm831, 0.0
          %835 = vst.msk [vmem:[#allocation3 + $0x18] sm:$0xff] %vm831, 0.0
        $region96: #{tpu_custom_call.1} parent=71 // pred_fallthru
          _
        %v836 = vld [vmem:[%s779] sm:$0xf]
        %v837 = vld [vmem:[%s779 + $0x4] sm:$0xf]
        %v838 = vld [vmem:[%s779 + $0x8] sm:$0xf]
        %v839 = vld [vmem:[%s779 + $0xc] sm:$0xf]
        %v840 = vld [vmem:[%s779 + $0x10] sm:$0xf]
        %v841 = vld [vmem:[%s779 + $0x14] sm:$0xf]
        %v842 = vld [vmem:[%s779 + $0x18] sm:$0xf]
        %v843 = vld [vmem:[%s779 + $0x1c] sm:$0xf]
        %v844 = vld [vmem:[%s779 + $0x20] sm:$0xf]
        %v845 = vld [vmem:[%s779 + $0x24] sm:$0xf]
        %v846 = vld [vmem:[%s779 + $0x28] sm:$0xf]
        %v847 = vld [vmem:[%s779 + $0x2c] sm:$0xf]
        %v848 = vld [vmem:[%s779 + $0x30] sm:$0xf]
        %v849 = vld [vmem:[%s779 + $0x34] sm:$0xf]
        %v850 = vld [vmem:[%s779 + $0x38] sm:$0xf]
        %v851 = vld [vmem:[%s779 + $0x3c] sm:$0xf]
        %v852 = vld [vmem:[%s779 + $0x40] sm:$0xf]
        %v853 = vld [vmem:[%s779 + $0x44] sm:$0xf]
        %v854 = vld [vmem:[%s779 + $0x48] sm:$0xf]
        %v855 = vld [vmem:[%s779 + $0x4c] sm:$0xf]
        %v856 = vld [vmem:[%s779 + $0x50] sm:$0xf]
        %v857 = vld [vmem:[%s779 + $0x54] sm:$0xf]
        %v858 = vld [vmem:[%s779 + $0x58] sm:$0xf]
        %v859 = vld [vmem:[%s779 + $0x5c] sm:$0xf]
        %v860 = vld [vmem:[%s779 + $0x60] sm:$0xf]
        %v861 = vld [vmem:[%s779 + $0x64] sm:$0xf]
        %v862 = vld [vmem:[%s779 + $0x68] sm:$0xf]
        %v863 = vld [vmem:[%s779 + $0x6c] sm:$0xf]
        %v864 = vld [vmem:[%s779 + $0x70] sm:$0xf]
        %v865 = vld [vmem:[%s779 + $0x74] sm:$0xf]
        %v866 = vld [vmem:[%s779 + $0x78] sm:$0xf]
        %v867 = vld [vmem:[%s779 + $0x7c] sm:$0xf]
        %v868 = vld [vmem:[%s634] sm:$0xf]
        %v869 = vld [vmem:[%s634 + $0x4] sm:$0xf]
        %v870 = vld [vmem:[%s634 + $0x8] sm:$0xf]
        %v871 = vld [vmem:[%s634 + $0xc] sm:$0xf]
        %v872 = vld [vmem:[%s634 + $0x10] sm:$0xf]
        %v873 = vld [vmem:[%s634 + $0x14] sm:$0xf]
        %v874 = vld [vmem:[%s634 + $0x18] sm:$0xf]
        %v875 = vld [vmem:[%s634 + $0x1c] sm:$0xf]
        %v876 = vld [vmem:[%s634 + $0x20] sm:$0xf]
        %v877 = vld [vmem:[%s634 + $0x24] sm:$0xf]
        %v878 = vld [vmem:[%s634 + $0x28] sm:$0xf]
        %v879 = vld [vmem:[%s634 + $0x2c] sm:$0xf]
        %v880 = vld [vmem:[%s634 + $0x30] sm:$0xf]
        %v881 = vld [vmem:[%s634 + $0x34] sm:$0xf]
        %v882 = vld [vmem:[%s634 + $0x38] sm:$0xf]
        %v883 = vld [vmem:[%s634 + $0x3c] sm:$0xf]
        %v884 = vld [vmem:[%s812] sm:$0x1]
        %v886 = vlaneseq
        %v887 = vshrl.u32 %v886, 7
        %v888 = vsub.s32 0, %v887
        %v889 = vrot.slane %v884, %v888
        %v923 = vunpack.c.l.b16 %v836
        %v924 = vunpack.c.l.b16 %v837
        %v925 = vunpack.c.l.b16 %v838
        %v926 = vunpack.c.l.b16 %v839
        %v927 = vunpack.c.l.b16 %v840
        %v928 = vunpack.c.l.b16 %v841
        %v929 = vunpack.c.l.b16 %v842
        %v930 = vunpack.c.l.b16 %v843
        %v931 = vunpack.c.l.b16 %v844
        %v932 = vunpack.c.l.b16 %v845
        %v933 = vunpack.c.l.b16 %v846
        %v934 = vunpack.c.l.b16 %v847
        %v935 = vunpack.c.l.b16 %v848
        %v936 = vunpack.c.l.b16 %v849
        %v937 = vunpack.c.l.b16 %v850
        %v938 = vunpack.c.l.b16 %v851
        %v939 = vunpack.c.l.b16 %v852
        %v940 = vunpack.c.l.b16 %v853
        %v941 = vunpack.c.l.b16 %v854
        %v942 = vunpack.c.l.b16 %v855
        %v943 = vunpack.c.l.b16 %v856
        %v944 = vunpack.c.l.b16 %v857
        %v945 = vunpack.c.l.b16 %v858
        %v946 = vunpack.c.l.b16 %v859
        %v947 = vunpack.c.l.b16 %v860
        %v948 = vunpack.c.l.b16 %v861
        %v949 = vunpack.c.l.b16 %v862
        %v950 = vunpack.c.l.b16 %v863
        %v951 = vunpack.c.l.b16 %v864
        %v952 = vunpack.c.l.b16 %v865
        %v953 = vunpack.c.l.b16 %v866
        %v954 = vunpack.c.l.b16 %v867
        %v955 = vpack.c.b16 %v924, %v923
        %v956 = vpack.c.b16 %v926, %v925
        %v957 = vpack.c.b16 %v928, %v927
        %v958 = vpack.c.b16 %v930, %v929
        %v959 = vpack.c.b16 %v932, %v931
        %v960 = vpack.c.b16 %v934, %v933
        %v961 = vpack.c.b16 %v936, %v935
        %v962 = vpack.c.b16 %v938, %v937
        %v963 = vpack.c.b16 %v940, %v939
        %v964 = vpack.c.b16 %v942, %v941
        %v965 = vpack.c.b16 %v944, %v943
        %v966 = vpack.c.b16 %v946, %v945
        %v967 = vpack.c.b16 %v948, %v947
        %v968 = vpack.c.b16 %v950, %v949
        %v969 = vpack.c.b16 %v952, %v951
        %v970 = vpack.c.b16 %v954, %v953
        %v1003 = vunpack.c.l.b16 %v868
        %v1004 = vunpack.c.l.b16 %v869
        %v1005 = vunpack.c.l.b16 %v870
        %v1006 = vunpack.c.l.b16 %v871
        %v1007 = vunpack.c.l.b16 %v872
        %v1008 = vunpack.c.l.b16 %v873
        %v1009 = vunpack.c.l.b16 %v874
        %v1010 = vunpack.c.l.b16 %v875
        %v1011 = vunpack.c.l.b16 %v876
        %v1012 = vunpack.c.l.b16 %v877
        %v1013 = vunpack.c.l.b16 %v878
        %v1014 = vunpack.c.l.b16 %v879
        %v1015 = vunpack.c.l.b16 %v880
        %v1016 = vunpack.c.l.b16 %v881
        %v1017 = vunpack.c.l.b16 %v882
        %v1018 = vunpack.c.l.b16 %v883
        %v1019 = vpack.c.b16 %v1004, %v1003
        %v1020 = vpack.c.b16 %v1006, %v1005
        %v1021 = vpack.c.b16 %v1008, %v1007
        %v1022 = vpack.c.b16 %v1010, %v1009
        %v1023 = vpack.c.b16 %v1012, %v1011
        %v1024 = vpack.c.b16 %v1014, %v1013
        %v1025 = vpack.c.b16 %v1016, %v1015
        %v1026 = vpack.c.b16 %v1018, %v1017
        %1035 = vmatprep.subr.bf16.mxu0 0
        %1036 = vmatpush1.bf16.msra.mxu0 %v1026
        %1037 = vmatprep.subr.bf16.mxu0 0
        %1038 = vmatpush1.bf16.msra.mxu0 %v1025
        %1039 = vmatprep.subr.bf16.mxu0 0
        %1040 = vmatpush1.bf16.msra.mxu0 %v1024
        %1041 = vmatprep.subr.bf16.mxu0 0
        %1042 = vmatpush1.bf16.msra.mxu0 %v1023
        %1043 = vmatprep.subr.bf16.mxu0 0
        %1044 = vmatpush1.bf16.msra.mxu0 %v1022
        %1045 = vmatprep.subr.bf16.mxu0 0
        %1046 = vmatpush1.bf16.msra.mxu0 %v1021
        %1047 = vmatprep.subr.bf16.mxu0 0
        %1048 = vmatpush1.bf16.msra.mxu0 %v1020
        %1049 = vmatprep.subr.bf16.mxu0 0
        %1050 = vmatpush1.bf16.msra.mxu0 %v1019
        %1051 = vmatprep.subr.bf16.mxu0 0
        %1052 = vmatpush2.bf16.msra.mxu0 0
        %1053 = vmatprep.subr.bf16.mxu0 0
        %1054 = vmatpush2.bf16.msra.mxu0 0
        %1055 = vmatprep.subr.bf16.mxu0 0
        %1056 = vmatpush2.bf16.msra.mxu0 0
        %1057 = vmatprep.subr.bf16.mxu0 0
        %1058 = vmatpush2.bf16.msra.mxu0 0
        %1059 = vmatprep.subr.bf16.mxu0 0
        %1060 = vmatpush2.bf16.msra.mxu0 0
        %1061 = vmatprep.subr.bf16.mxu0 0
        %1062 = vmatpush2.bf16.msra.mxu0 0
        %1063 = vmatprep.subr.bf16.mxu0 0
        %1064 = vmatpush2.bf16.msra.mxu0 0
        %1065 = vmatprep.subr.bf16.mxu0 0
        %1066 = vmatpush2.bf16.msra.mxu0 0
        %1067 = vmatprep.mubr.bf16.mxu0 0
        %1068 = vmatmul.mubr.bf16.gmra.mxu0 %v955
        %v1069 = vpop.f32.mrf.mxu0
        %v1070 = vadd.f32 %v889, %v1069
        %v1071 = vpop.f32.mrf.mxu0
        %v1072 = vpop.f32.mrf.mxu0
        %v1073 = vadd.f32 %v889, %v1072
        %v1074 = vpop.f32.mrf.mxu0
        %1075 = vmatprep.mubr.bf16.mxu0 0
        %1076 = vmatmul.mubr.bf16.gmra.mxu0 %v956
        %v1077 = vpop.f32.mrf.mxu0
        %v1078 = vadd.f32 %v889, %v1077
        %v1079 = vpop.f32.mrf.mxu0
        %v1080 = vpop.f32.mrf.mxu0
        %v1081 = vadd.f32 %v889, %v1080
        %v1082 = vpop.f32.mrf.mxu0
        %1083 = vmatprep.mubr.bf16.mxu0 0
        %1084 = vmatmul.mubr.bf16.gmra.mxu0 %v957
        %v1085 = vpop.f32.mrf.mxu0
        %v1086 = vadd.f32 %v889, %v1085
        %v1087 = vpop.f32.mrf.mxu0
        %v1088 = vpop.f32.mrf.mxu0
        %v1089 = vadd.f32 %v889, %v1088
        %v1090 = vpop.f32.mrf.mxu0
        %1091 = vmatprep.mubr.bf16.mxu0 0
        %1092 = vmatmul.mubr.bf16.gmra.mxu0 %v958
        %v1093 = vpop.f32.mrf.mxu0
        %v1094 = vadd.f32 %v889, %v1093
        %v1095 = vpop.f32.mrf.mxu0
        %v1096 = vpop.f32.mrf.mxu0
        %v1097 = vadd.f32 %v889, %v1096
        %v1098 = vpop.f32.mrf.mxu0
        %1099 = vmatprep.mubr.bf16.mxu0 0
        %1100 = vmatmul.mubr.bf16.gmra.mxu0 %v959
        %v1101 = vpop.f32.mrf.mxu0
        %v1102 = vadd.f32 %v889, %v1101
        %v1103 = vpop.f32.mrf.mxu0
        %v1104 = vpop.f32.mrf.mxu0
        %v1105 = vadd.f32 %v889, %v1104
        %v1106 = vpop.f32.mrf.mxu0
        %1107 = vmatprep.mubr.bf16.mxu0 0
        %1108 = vmatmul.mubr.bf16.gmra.mxu0 %v960
        %v1109 = vpop.f32.mrf.mxu0
        %v1110 = vadd.f32 %v889, %v1109
        %v1111 = vpop.f32.mrf.mxu0
        %v1112 = vpop.f32.mrf.mxu0
        %v1113 = vadd.f32 %v889, %v1112
        %v1114 = vpop.f32.mrf.mxu0
        %1115 = vmatprep.mubr.bf16.mxu0 0
        %1116 = vmatmul.mubr.bf16.gmra.mxu0 %v961
        %v1117 = vpop.f32.mrf.mxu0
        %v1118 = vadd.f32 %v889, %v1117
        %v1119 = vpop.f32.mrf.mxu0
        %v1120 = vpop.f32.mrf.mxu0
        %v1121 = vadd.f32 %v889, %v1120
        %v1122 = vpop.f32.mrf.mxu0
        %1123 = vmatprep.mubr.bf16.mxu0 0
        %1124 = vmatmul.mubr.bf16.gmra.mxu0 %v962
        %v1125 = vpop.f32.mrf.mxu0
        %v1126 = vadd.f32 %v889, %v1125
        %v1127 = vpop.f32.mrf.mxu0
        %v1128 = vpop.f32.mrf.mxu0
        %v1129 = vadd.f32 %v889, %v1128
        %v1130 = vpop.f32.mrf.mxu0
        %1131 = vmatprep.mubr.bf16.mxu0 0
        %1132 = vmatmul.mubr.bf16.gmra.mxu0 %v963
        %v1133 = vpop.f32.mrf.mxu0
        %v1134 = vadd.f32 %v889, %v1133
        %v1135 = vpop.f32.mrf.mxu0
        %v1136 = vpop.f32.mrf.mxu0
        %v1137 = vadd.f32 %v889, %v1136
        %v1138 = vpop.f32.mrf.mxu0
        %1139 = vmatprep.mubr.bf16.mxu0 0
        %1140 = vmatmul.mubr.bf16.gmra.mxu0 %v964
        %v1141 = vpop.f32.mrf.mxu0
        %v1142 = vadd.f32 %v889, %v1141
        %v1143 = vpop.f32.mrf.mxu0
        %v1144 = vpop.f32.mrf.mxu0
        %v1145 = vadd.f32 %v889, %v1144
        %v1146 = vpop.f32.mrf.mxu0
        %1147 = vmatprep.mubr.bf16.mxu0 0
        %1148 = vmatmul.mubr.bf16.gmra.mxu0 %v965
        %v1149 = vpop.f32.mrf.mxu0
        %v1150 = vadd.f32 %v889, %v1149
        %v1151 = vpop.f32.mrf.mxu0
        %v1152 = vpop.f32.mrf.mxu0
        %v1153 = vadd.f32 %v889, %v1152
        %v1154 = vpop.f32.mrf.mxu0
        %1155 = vmatprep.mubr.bf16.mxu0 0
        %1156 = vmatmul.mubr.bf16.gmra.mxu0 %v966
        %v1157 = vpop.f32.mrf.mxu0
        %v1158 = vadd.f32 %v889, %v1157
        %v1159 = vpop.f32.mrf.mxu0
        %v1160 = vpop.f32.mrf.mxu0
        %v1161 = vadd.f32 %v889, %v1160
        %v1162 = vpop.f32.mrf.mxu0
        %1163 = vmatprep.mubr.bf16.mxu0 0
        %1164 = vmatmul.mubr.bf16.gmra.mxu0 %v967
        %v1165 = vpop.f32.mrf.mxu0
        %v1166 = vadd.f32 %v889, %v1165
        %v1167 = vpop.f32.mrf.mxu0
        %v1168 = vpop.f32.mrf.mxu0
        %v1169 = vadd.f32 %v889, %v1168
        %v1170 = vpop.f32.mrf.mxu0
        %1171 = vmatprep.mubr.bf16.mxu0 0
        %1172 = vmatmul.mubr.bf16.gmra.mxu0 %v968
        %v1173 = vpop.f32.mrf.mxu0
        %v1174 = vadd.f32 %v889, %v1173
        %v1175 = vpop.f32.mrf.mxu0
        %v1176 = vpop.f32.mrf.mxu0
        %v1177 = vadd.f32 %v889, %v1176
        %v1178 = vpop.f32.mrf.mxu0
        %1179 = vmatprep.mubr.bf16.mxu0 0
        %1180 = vmatmul.mubr.bf16.gmra.mxu0 %v969
        %v1181 = vpop.f32.mrf.mxu0
        %v1182 = vadd.f32 %v889, %v1181
        %v1183 = vpop.f32.mrf.mxu0
        %v1184 = vpop.f32.mrf.mxu0
        %v1185 = vadd.f32 %v889, %v1184
        %v1186 = vpop.f32.mrf.mxu0
        %1187 = vmatprep.mubr.bf16.mxu0 0
        %1188 = vmatmul.mubr.bf16.gmra.mxu0 %v970
        %v1189 = vpop.f32.mrf.mxu0
        %v1190 = vadd.f32 %v889, %v1189
        %v1191 = vpop.f32.mrf.mxu0
        %v1192 = vpop.f32.mrf.mxu0
        %v1193 = vadd.f32 %v889, %v1192
        %v1194 = vpop.f32.mrf.mxu0
        %1195 = vdwg.mxu0
        %v1196 = vxor.u32 %v1070, 2147483648
        %v1197 = vxor.u32 %v1073, 2147483648
        %v1198 = vxor.u32 %v1078, 2147483648
        %v1199 = vxor.u32 %v1081, 2147483648
        %v1200 = vxor.u32 %v1086, 2147483648
        %v1201 = vxor.u32 %v1089, 2147483648
        %v1202 = vxor.u32 %v1094, 2147483648
        %v1203 = vxor.u32 %v1097, 2147483648
        %v1204 = vxor.u32 %v1102, 2147483648
        %v1205 = vxor.u32 %v1105, 2147483648
        %v1206 = vxor.u32 %v1110, 2147483648
        %v1207 = vxor.u32 %v1113, 2147483648
        %v1208 = vxor.u32 %v1118, 2147483648
        %v1209 = vxor.u32 %v1121, 2147483648
        %v1210 = vxor.u32 %v1126, 2147483648
        %v1211 = vxor.u32 %v1129, 2147483648
        %v1212 = vxor.u32 %v1134, 2147483648
        %v1213 = vxor.u32 %v1137, 2147483648
        %v1214 = vxor.u32 %v1142, 2147483648
        %v1215 = vxor.u32 %v1145, 2147483648
        %v1216 = vxor.u32 %v1150, 2147483648
        %v1217 = vxor.u32 %v1153, 2147483648
        %v1218 = vxor.u32 %v1158, 2147483648
        %v1219 = vxor.u32 %v1161, 2147483648
        %v1220 = vxor.u32 %v1166, 2147483648
        %v1221 = vxor.u32 %v1169, 2147483648
        %v1222 = vxor.u32 %v1174, 2147483648
        %v1223 = vxor.u32 %v1177, 2147483648
        %v1224 = vxor.u32 %v1182, 2147483648
        %v1225 = vxor.u32 %v1185, 2147483648
        %v1226 = vxor.u32 %v1190, 2147483648
        %v1227 = vxor.u32 %v1193, 2147483648
        %v1228 = vmul.f32 %v1196, 1.442695
        %v1229 = vpow.pop %v1228
        %v1230 = vmul.f32 %v1197, 1.442695
        %v1231 = vpow.pop %v1230
        %v1232 = vmul.f32 %v1198, 1.442695
        %v1233 = vpow.pop %v1232
        %v1234 = vmul.f32 %v1199, 1.442695
        %v1235 = vpow.pop %v1234
        %v1236 = vmul.f32 %v1200, 1.442695
        %v1237 = vpow.pop %v1236
        %v1238 = vmul.f32 %v1201, 1.442695
        %v1239 = vpow.pop %v1238
        %v1240 = vmul.f32 %v1202, 1.442695
        %v1241 = vpow.pop %v1240
        %v1242 = vmul.f32 %v1203, 1.442695
        %v1243 = vpow.pop %v1242
        %v1244 = vmul.f32 %v1204, 1.442695
        %v1245 = vpow.pop %v1244
        %v1246 = vmul.f32 %v1205, 1.442695
        %v1247 = vpow.pop %v1246
        %v1248 = vmul.f32 %v1206, 1.442695
        %v1249 = vpow.pop %v1248
        %v1250 = vmul.f32 %v1207, 1.442695
        %v1251 = vpow.pop %v1250
        %v1252 = vmul.f32 %v1208, 1.442695
        %v1253 = vpow.pop %v1252
        %v1254 = vmul.f32 %v1209, 1.442695
        %v1255 = vpow.pop %v1254
        %v1256 = vmul.f32 %v1210, 1.442695
        %v1257 = vpow.pop %v1256
        %v1258 = vmul.f32 %v1211, 1.442695
        %v1259 = vpow.pop %v1258
        %v1260 = vmul.f32 %v1212, 1.442695
        %v1261 = vpow.pop %v1260
        %v1262 = vmul.f32 %v1213, 1.442695
        %v1263 = vpow.pop %v1262
        %v1264 = vmul.f32 %v1214, 1.442695
        %v1265 = vpow.pop %v1264
        %v1266 = vmul.f32 %v1215, 1.442695
        %v1267 = vpow.pop %v1266
        %v1268 = vmul.f32 %v1216, 1.442695
        %v1269 = vpow.pop %v1268
        %v1270 = vmul.f32 %v1217, 1.442695
        %v1271 = vpow.pop %v1270
        %v1272 = vmul.f32 %v1218, 1.442695
        %v1273 = vpow.pop %v1272
        %v1274 = vmul.f32 %v1219, 1.442695
        %v1275 = vpow.pop %v1274
        %v1276 = vmul.f32 %v1220, 1.442695
        %v1277 = vpow.pop %v1276
        %v1278 = vmul.f32 %v1221, 1.442695
        %v1279 = vpow.pop %v1278
        %v1280 = vmul.f32 %v1222, 1.442695
        %v1281 = vpow.pop %v1280
        %v1282 = vmul.f32 %v1223, 1.442695
        %v1283 = vpow.pop %v1282
        %v1284 = vmul.f32 %v1224, 1.442695
        %v1285 = vpow.pop %v1284
        %v1286 = vmul.f32 %v1225, 1.442695
        %v1287 = vpow.pop %v1286
        %v1288 = vmul.f32 %v1226, 1.442695
        %v1289 = vpow.pop %v1288
        %v1290 = vmul.f32 %v1227, 1.442695
        %v1291 = vpow.pop %v1290
        %v1292 = vadd.f32 %v1229, 1.0
        %v1293 = vadd.f32 %v1231, 1.0
        %v1294 = vadd.f32 %v1233, 1.0
        %v1295 = vadd.f32 %v1235, 1.0
        %v1296 = vadd.f32 %v1237, 1.0
        %v1297 = vadd.f32 %v1239, 1.0
        %v1298 = vadd.f32 %v1241, 1.0
        %v1299 = vadd.f32 %v1243, 1.0
        %v1300 = vadd.f32 %v1245, 1.0
        %v1301 = vadd.f32 %v1247, 1.0
        %v1302 = vadd.f32 %v1249, 1.0
        %v1303 = vadd.f32 %v1251, 1.0
        %v1304 = vadd.f32 %v1253, 1.0
        %v1305 = vadd.f32 %v1255, 1.0
        %v1306 = vadd.f32 %v1257, 1.0
        %v1307 = vadd.f32 %v1259, 1.0
        %v1308 = vadd.f32 %v1261, 1.0
        %v1309 = vadd.f32 %v1263, 1.0
        %v1310 = vadd.f32 %v1265, 1.0
        %v1311 = vadd.f32 %v1267, 1.0
        %v1312 = vadd.f32 %v1269, 1.0
        %v1313 = vadd.f32 %v1271, 1.0
        %v1314 = vadd.f32 %v1273, 1.0
        %v1315 = vadd.f32 %v1275, 1.0
        %v1316 = vadd.f32 %v1277, 1.0
        %v1317 = vadd.f32 %v1279, 1.0
        %v1318 = vadd.f32 %v1281, 1.0
        %v1319 = vadd.f32 %v1283, 1.0
        %v1320 = vadd.f32 %v1285, 1.0
        %v1321 = vadd.f32 %v1287, 1.0
        %v1322 = vadd.f32 %v1289, 1.0
        %v1323 = vadd.f32 %v1291, 1.0
        %v1324 = vrcp.pop %v1292
        %v1325 = vmul.f32 1.0, %v1324
        %v1326 = vrcp.pop %v1293
        %v1327 = vmul.f32 1.0, %v1326
        %v1328 = vrcp.pop %v1294
        %v1329 = vmul.f32 1.0, %v1328
        %v1330 = vrcp.pop %v1295
        %v1331 = vmul.f32 1.0, %v1330
        %v1332 = vrcp.pop %v1296
        %v1333 = vmul.f32 1.0, %v1332
        %v1334 = vrcp.pop %v1297
        %v1335 = vmul.f32 1.0, %v1334
        %v1336 = vrcp.pop %v1298
        %v1337 = vmul.f32 1.0, %v1336
        %v1338 = vrcp.pop %v1299
        %v1339 = vmul.f32 1.0, %v1338
        %v1340 = vrcp.pop %v1300
        %v1341 = vmul.f32 1.0, %v1340
        %v1342 = vrcp.pop %v1301
        %v1343 = vmul.f32 1.0, %v1342
        %v1344 = vrcp.pop %v1302
        %v1345 = vmul.f32 1.0, %v1344
        %v1346 = vrcp.pop %v1303
        %v1347 = vmul.f32 1.0, %v1346
        %v1348 = vrcp.pop %v1304
        %v1349 = vmul.f32 1.0, %v1348
        %v1350 = vrcp.pop %v1305
        %v1351 = vmul.f32 1.0, %v1350
        %v1352 = vrcp.pop %v1306
        %v1353 = vmul.f32 1.0, %v1352
        %v1354 = vrcp.pop %v1307
        %v1355 = vmul.f32 1.0, %v1354
        %v1356 = vrcp.pop %v1308
        %v1357 = vmul.f32 1.0, %v1356
        %v1358 = vrcp.pop %v1309
        %v1359 = vmul.f32 1.0, %v1358
        %v1360 = vrcp.pop %v1310
        %v1361 = vmul.f32 1.0, %v1360
        %v1362 = vrcp.pop %v1311
        %v1363 = vmul.f32 1.0, %v1362
        %v1364 = vrcp.pop %v1312
        %v1365 = vmul.f32 1.0, %v1364
        %v1366 = vrcp.pop %v1313
        %v1367 = vmul.f32 1.0, %v1366
        %v1368 = vrcp.pop %v1314
        %v1369 = vmul.f32 1.0, %v1368
        %v1370 = vrcp.pop %v1315
        %v1371 = vmul.f32 1.0, %v1370
        %v1372 = vrcp.pop %v1316
        %v1373 = vmul.f32 1.0, %v1372
        %v1374 = vrcp.pop %v1317
        %v1375 = vmul.f32 1.0, %v1374
        %v1376 = vrcp.pop %v1318
        %v1377 = vmul.f32 1.0, %v1376
        %v1378 = vrcp.pop %v1319
        %v1379 = vmul.f32 1.0, %v1378
        %v1380 = vrcp.pop %v1320
        %v1381 = vmul.f32 1.0, %v1380
        %v1382 = vrcp.pop %v1321
        %v1383 = vmul.f32 1.0, %v1382
        %v1384 = vrcp.pop %v1322
        %v1385 = vmul.f32 1.0, %v1384
        %v1386 = vrcp.pop %v1323
        %v1387 = vmul.f32 1.0, %v1386
        %v1388 = vmul.f32 %v1070, %v1325
        %v1389 = vmul.f32 %v1073, %v1327
        %v1390 = vmul.f32 %v1078, %v1329
        %v1391 = vmul.f32 %v1081, %v1331
        %v1392 = vmul.f32 %v1086, %v1333
        %v1393 = vmul.f32 %v1089, %v1335
        %v1394 = vmul.f32 %v1094, %v1337
        %v1395 = vmul.f32 %v1097, %v1339
        %v1396 = vmul.f32 %v1102, %v1341
        %v1397 = vmul.f32 %v1105, %v1343
        %v1398 = vmul.f32 %v1110, %v1345
        %v1399 = vmul.f32 %v1113, %v1347
        %v1400 = vmul.f32 %v1118, %v1349
        %v1401 = vmul.f32 %v1121, %v1351
        %v1402 = vmul.f32 %v1126, %v1353
        %v1403 = vmul.f32 %v1129, %v1355
        %v1404 = vmul.f32 %v1134, %v1357
        %v1405 = vmul.f32 %v1137, %v1359
        %v1406 = vmul.f32 %v1142, %v1361
        %v1407 = vmul.f32 %v1145, %v1363
        %v1408 = vmul.f32 %v1150, %v1365
        %v1409 = vmul.f32 %v1153, %v1367
        %v1410 = vmul.f32 %v1158, %v1369
        %v1411 = vmul.f32 %v1161, %v1371
        %v1412 = vmul.f32 %v1166, %v1373
        %v1413 = vmul.f32 %v1169, %v1375
        %v1414 = vmul.f32 %v1174, %v1377
        %v1415 = vmul.f32 %v1177, %v1379
        %v1416 = vmul.f32 %v1182, %v1381
        %v1417 = vmul.f32 %v1185, %v1383
        %v1418 = vmul.f32 %v1190, %v1385
        %v1419 = vmul.f32 %v1193, %v1387
        %v1420 = vpack.c.bf16 %v1389, %v1388
        %v1421 = vpack.c.bf16 %v1391, %v1390
        %v1422 = vpack.c.bf16 %v1393, %v1392
        %v1423 = vpack.c.bf16 %v1395, %v1394
        %v1424 = vpack.c.bf16 %v1397, %v1396
        %v1425 = vpack.c.bf16 %v1399, %v1398
        %v1426 = vpack.c.bf16 %v1401, %v1400
        %v1427 = vpack.c.bf16 %v1403, %v1402
        %v1428 = vpack.c.bf16 %v1405, %v1404
        %v1429 = vpack.c.bf16 %v1407, %v1406
        %v1430 = vpack.c.bf16 %v1409, %v1408
        %v1431 = vpack.c.bf16 %v1411, %v1410
        %v1432 = vpack.c.bf16 %v1413, %v1412
        %v1433 = vpack.c.bf16 %v1415, %v1414
        %v1434 = vpack.c.bf16 %v1417, %v1416
        %v1435 = vpack.c.bf16 %v1419, %v1418
        %v1436 = vld [vmem:[%s643] sm:$0xf]
        %v1437 = vld [vmem:[%s643 + $0x4] sm:$0xf]
        %v1438 = vld [vmem:[%s643 + $0x8] sm:$0xf]
        %v1439 = vld [vmem:[%s643 + $0xc] sm:$0xf]
        %v1440 = vld [vmem:[%s643 + $0x10] sm:$0xf]
        %v1441 = vld [vmem:[%s643 + $0x14] sm:$0xf]
        %v1442 = vld [vmem:[%s643 + $0x18] sm:$0xf]
        %v1443 = vld [vmem:[%s643 + $0x1c] sm:$0xf]
        %v1444 = vld [vmem:[%s643 + $0x20] sm:$0xf]
        %v1445 = vld [vmem:[%s643 + $0x24] sm:$0xf]
        %v1446 = vld [vmem:[%s643 + $0x28] sm:$0xf]
        %v1447 = vld [vmem:[%s643 + $0x2c] sm:$0xf]
        %v1448 = vld [vmem:[%s643 + $0x30] sm:$0xf]
        %v1449 = vld [vmem:[%s643 + $0x34] sm:$0xf]
        %v1450 = vld [vmem:[%s643 + $0x38] sm:$0xf]
        %v1451 = vld [vmem:[%s643 + $0x3c] sm:$0xf]
        %v1452 = vld [vmem:[%s815] sm:$0x1]
        %v1454 = vlaneseq
        %v1455 = vshrl.u32 %v1454, 7
        %v1456 = vsub.s32 0, %v1455
        %v1457 = vrot.slane %v1452, %v1456
        %v1475 = vunpack.c.l.b16 %v1436
        %v1476 = vunpack.c.l.b16 %v1437
        %v1477 = vunpack.c.l.b16 %v1438
        %v1478 = vunpack.c.l.b16 %v1439
        %v1479 = vunpack.c.l.b16 %v1440
        %v1480 = vunpack.c.l.b16 %v1441
        %v1481 = vunpack.c.l.b16 %v1442
        %v1482 = vunpack.c.l.b16 %v1443
        %v1483 = vunpack.c.l.b16 %v1444
        %v1484 = vunpack.c.l.b16 %v1445
        %v1485 = vunpack.c.l.b16 %v1446
        %v1486 = vunpack.c.l.b16 %v1447
        %v1487 = vunpack.c.l.b16 %v1448
        %v1488 = vunpack.c.l.b16 %v1449
        %v1489 = vunpack.c.l.b16 %v1450
        %v1490 = vunpack.c.l.b16 %v1451
        %v1491 = vpack.c.b16 %v1476, %v1475
        %v1492 = vpack.c.b16 %v1478, %v1477
        %v1493 = vpack.c.b16 %v1480, %v1479
        %v1494 = vpack.c.b16 %v1482, %v1481
        %v1495 = vpack.c.b16 %v1484, %v1483
        %v1496 = vpack.c.b16 %v1486, %v1485
        %v1497 = vpack.c.b16 %v1488, %v1487
        %v1498 = vpack.c.b16 %v1490, %v1489
        %1507 = vmatprep.subr.bf16.mxu0 0
        %1508 = vmatpush1.bf16.msra.mxu0 %v1498
        %1509 = vmatprep.subr.bf16.mxu0 0
        %1510 = vmatpush1.bf16.msra.mxu0 %v1497
        %1511 = vmatprep.subr.bf16.mxu0 0
        %1512 = vmatpush1.bf16.msra.mxu0 %v1496
        %1513 = vmatprep.subr.bf16.mxu0 0
        %1514 = vmatpush1.bf16.msra.mxu0 %v1495
        %1515 = vmatprep.subr.bf16.mxu0 0
        %1516 = vmatpush1.bf16.msra.mxu0 %v1494
        %1517 = vmatprep.subr.bf16.mxu0 0
        %1518 = vmatpush1.bf16.msra.mxu0 %v1493
        %1519 = vmatprep.subr.bf16.mxu0 0
        %1520 = vmatpush1.bf16.msra.mxu0 %v1492
        %1521 = vmatprep.subr.bf16.mxu0 0
        %1522 = vmatpush1.bf16.msra.mxu0 %v1491
        %1523 = vmatprep.subr.bf16.mxu0 0
        %1524 = vmatpush2.bf16.msra.mxu0 0
        %1525 = vmatprep.subr.bf16.mxu0 0
        %1526 = vmatpush2.bf16.msra.mxu0 0
        %1527 = vmatprep.subr.bf16.mxu0 0
        %1528 = vmatpush2.bf16.msra.mxu0 0
        %1529 = vmatprep.subr.bf16.mxu0 0
        %1530 = vmatpush2.bf16.msra.mxu0 0
        %1531 = vmatprep.subr.bf16.mxu0 0
        %1532 = vmatpush2.bf16.msra.mxu0 0
        %1533 = vmatprep.subr.bf16.mxu0 0
        %1534 = vmatpush2.bf16.msra.mxu0 0
        %1535 = vmatprep.subr.bf16.mxu0 0
        %1536 = vmatpush2.bf16.msra.mxu0 0
        %1537 = vmatprep.subr.bf16.mxu0 0
        %1538 = vmatpush2.bf16.msra.mxu0 0
        %1539 = vmatprep.mubr.bf16.mxu0 0
        %1540 = vmatmul.mubr.bf16.gmra.mxu0 %v1420
        %v1541 = vpop.f32.mrf.mxu0
        %v1542 = vadd.f32 %v1457, %v1541
        %v1543 = vpop.f32.mrf.mxu0
        %v1544 = vpop.f32.mrf.mxu0
        %v1545 = vadd.f32 %v1457, %v1544
        %v1546 = vpop.f32.mrf.mxu0
        %1547 = vmatprep.mubr.bf16.mxu0 0
        %1548 = vmatmul.mubr.bf16.gmra.mxu0 %v1421
        %v1549 = vpop.f32.mrf.mxu0
        %v1550 = vadd.f32 %v1457, %v1549
        %v1551 = vpop.f32.mrf.mxu0
        %v1552 = vpop.f32.mrf.mxu0
        %v1553 = vadd.f32 %v1457, %v1552
        %v1554 = vpop.f32.mrf.mxu0
        %1555 = vmatprep.mubr.bf16.mxu0 0
        %1556 = vmatmul.mubr.bf16.gmra.mxu0 %v1422
        %v1557 = vpop.f32.mrf.mxu0
        %v1558 = vadd.f32 %v1457, %v1557
        %v1559 = vpop.f32.mrf.mxu0
        %v1560 = vpop.f32.mrf.mxu0
        %v1561 = vadd.f32 %v1457, %v1560
        %v1562 = vpop.f32.mrf.mxu0
        %1563 = vmatprep.mubr.bf16.mxu0 0
        %1564 = vmatmul.mubr.bf16.gmra.mxu0 %v1423
        %v1565 = vpop.f32.mrf.mxu0
        %v1566 = vadd.f32 %v1457, %v1565
        %v1567 = vpop.f32.mrf.mxu0
        %v1568 = vpop.f32.mrf.mxu0
        %v1569 = vadd.f32 %v1457, %v1568
        %v1570 = vpop.f32.mrf.mxu0
        %1571 = vmatprep.mubr.bf16.mxu0 0
        %1572 = vmatmul.mubr.bf16.gmra.mxu0 %v1424
        %v1573 = vpop.f32.mrf.mxu0
        %v1574 = vadd.f32 %v1457, %v1573
        %v1575 = vpop.f32.mrf.mxu0
        %v1576 = vpop.f32.mrf.mxu0
        %v1577 = vadd.f32 %v1457, %v1576
        %v1578 = vpop.f32.mrf.mxu0
        %1579 = vmatprep.mubr.bf16.mxu0 0
        %1580 = vmatmul.mubr.bf16.gmra.mxu0 %v1425
        %v1581 = vpop.f32.mrf.mxu0
        %v1582 = vadd.f32 %v1457, %v1581
        %v1583 = vpop.f32.mrf.mxu0
        %v1584 = vpop.f32.mrf.mxu0
        %v1585 = vadd.f32 %v1457, %v1584
        %v1586 = vpop.f32.mrf.mxu0
        %1587 = vmatprep.mubr.bf16.mxu0 0
        %1588 = vmatmul.mubr.bf16.gmra.mxu0 %v1426
        %v1589 = vpop.f32.mrf.mxu0
        %v1590 = vadd.f32 %v1457, %v1589
        %v1591 = vpop.f32.mrf.mxu0
        %v1592 = vpop.f32.mrf.mxu0
        %v1593 = vadd.f32 %v1457, %v1592
        %v1594 = vpop.f32.mrf.mxu0
        %1595 = vmatprep.mubr.bf16.mxu0 0
        %1596 = vmatmul.mubr.bf16.gmra.mxu0 %v1427
        %v1597 = vpop.f32.mrf.mxu0
        %v1598 = vadd.f32 %v1457, %v1597
        %v1599 = vpop.f32.mrf.mxu0
        %v1600 = vpop.f32.mrf.mxu0
        %v1601 = vadd.f32 %v1457, %v1600
        %v1602 = vpop.f32.mrf.mxu0
        %1603 = vmatprep.mubr.bf16.mxu0 0
        %1604 = vmatmul.mubr.bf16.gmra.mxu0 %v1428
        %v1605 = vpop.f32.mrf.mxu0
        %v1606 = vadd.f32 %v1457, %v1605
        %v1607 = vpop.f32.mrf.mxu0
        %v1608 = vpop.f32.mrf.mxu0
        %v1609 = vadd.f32 %v1457, %v1608
        %v1610 = vpop.f32.mrf.mxu0
        %1611 = vmatprep.mubr.bf16.mxu0 0
        %1612 = vmatmul.mubr.bf16.gmra.mxu0 %v1429
        %v1613 = vpop.f32.mrf.mxu0
        %v1614 = vadd.f32 %v1457, %v1613
        %v1615 = vpop.f32.mrf.mxu0
        %v1616 = vpop.f32.mrf.mxu0
        %v1617 = vadd.f32 %v1457, %v1616
        %v1618 = vpop.f32.mrf.mxu0
        %1619 = vmatprep.mubr.bf16.mxu0 0
        %1620 = vmatmul.mubr.bf16.gmra.mxu0 %v1430
        %v1621 = vpop.f32.mrf.mxu0
        %v1622 = vadd.f32 %v1457, %v1621
        %v1623 = vpop.f32.mrf.mxu0
        %v1624 = vpop.f32.mrf.mxu0
        %v1625 = vadd.f32 %v1457, %v1624
        %v1626 = vpop.f32.mrf.mxu0
        %1627 = vmatprep.mubr.bf16.mxu0 0
        %1628 = vmatmul.mubr.bf16.gmra.mxu0 %v1431
        %v1629 = vpop.f32.mrf.mxu0
        %v1630 = vadd.f32 %v1457, %v1629
        %v1631 = vpop.f32.mrf.mxu0
        %v1632 = vpop.f32.mrf.mxu0
        %v1633 = vadd.f32 %v1457, %v1632
        %v1634 = vpop.f32.mrf.mxu0
        %1635 = vmatprep.mubr.bf16.mxu0 0
        %1636 = vmatmul.mubr.bf16.gmra.mxu0 %v1432
        %v1637 = vpop.f32.mrf.mxu0
        %v1638 = vadd.f32 %v1457, %v1637
        %v1639 = vpop.f32.mrf.mxu0
        %v1640 = vpop.f32.mrf.mxu0
        %v1641 = vadd.f32 %v1457, %v1640
        %v1642 = vpop.f32.mrf.mxu0
        %1643 = vmatprep.mubr.bf16.mxu0 0
        %1644 = vmatmul.mubr.bf16.gmra.mxu0 %v1433
        %v1645 = vpop.f32.mrf.mxu0
        %v1646 = vadd.f32 %v1457, %v1645
        %v1647 = vpop.f32.mrf.mxu0
        %v1648 = vpop.f32.mrf.mxu0
        %v1649 = vadd.f32 %v1457, %v1648
        %v1650 = vpop.f32.mrf.mxu0
        %1651 = vmatprep.mubr.bf16.mxu0 0
        %1652 = vmatmul.mubr.bf16.gmra.mxu0 %v1434
        %v1653 = vpop.f32.mrf.mxu0
        %v1654 = vadd.f32 %v1457, %v1653
        %v1655 = vpop.f32.mrf.mxu0
        %v1656 = vpop.f32.mrf.mxu0
        %v1657 = vadd.f32 %v1457, %v1656
        %v1658 = vpop.f32.mrf.mxu0
        %1659 = vmatprep.mubr.bf16.mxu0 0
        %1660 = vmatmul.mubr.bf16.gmra.mxu0 %v1435
        %v1661 = vpop.f32.mrf.mxu0
        %v1662 = vadd.f32 %v1457, %v1661
        %v1663 = vpop.f32.mrf.mxu0
        %v1664 = vpop.f32.mrf.mxu0
        %v1665 = vadd.f32 %v1457, %v1664
        %v1666 = vpop.f32.mrf.mxu0
        %1667 = vdwg.mxu0
        %v1668 = vxor.u32 %v1542, 2147483648
        %v1669 = vxor.u32 %v1545, 2147483648
        %v1670 = vxor.u32 %v1550, 2147483648
        %v1671 = vxor.u32 %v1553, 2147483648
        %v1672 = vxor.u32 %v1558, 2147483648
        %v1673 = vxor.u32 %v1561, 2147483648
        %v1674 = vxor.u32 %v1566, 2147483648
        %v1675 = vxor.u32 %v1569, 2147483648
        %v1676 = vxor.u32 %v1574, 2147483648
        %v1677 = vxor.u32 %v1577, 2147483648
        %v1678 = vxor.u32 %v1582, 2147483648
        %v1679 = vxor.u32 %v1585, 2147483648
        %v1680 = vxor.u32 %v1590, 2147483648
        %v1681 = vxor.u32 %v1593, 2147483648
        %v1682 = vxor.u32 %v1598, 2147483648
        %v1683 = vxor.u32 %v1601, 2147483648
        %v1684 = vxor.u32 %v1606, 2147483648
        %v1685 = vxor.u32 %v1609, 2147483648
        %v1686 = vxor.u32 %v1614, 2147483648
        %v1687 = vxor.u32 %v1617, 2147483648
        %v1688 = vxor.u32 %v1622, 2147483648
        %v1689 = vxor.u32 %v1625, 2147483648
        %v1690 = vxor.u32 %v1630, 2147483648
        %v1691 = vxor.u32 %v1633, 2147483648
        %v1692 = vxor.u32 %v1638, 2147483648
        %v1693 = vxor.u32 %v1641, 2147483648
        %v1694 = vxor.u32 %v1646, 2147483648
        %v1695 = vxor.u32 %v1649, 2147483648
        %v1696 = vxor.u32 %v1654, 2147483648
        %v1697 = vxor.u32 %v1657, 2147483648
        %v1698 = vxor.u32 %v1662, 2147483648
        %v1699 = vxor.u32 %v1665, 2147483648
        %v1700 = vmul.f32 %v1668, 1.442695
        %v1701 = vpow.pop %v1700
        %v1702 = vmul.f32 %v1669, 1.442695
        %v1703 = vpow.pop %v1702
        %v1704 = vmul.f32 %v1670, 1.442695
        %v1705 = vpow.pop %v1704
        %v1706 = vmul.f32 %v1671, 1.442695
        %v1707 = vpow.pop %v1706
        %v1708 = vmul.f32 %v1672, 1.442695
        %v1709 = vpow.pop %v1708
        %v1710 = vmul.f32 %v1673, 1.442695
        %v1711 = vpow.pop %v1710
        %v1712 = vmul.f32 %v1674, 1.442695
        %v1713 = vpow.pop %v1712
        %v1714 = vmul.f32 %v1675, 1.442695
        %v1715 = vpow.pop %v1714
        %v1716 = vmul.f32 %v1676, 1.442695
        %v1717 = vpow.pop %v1716
        %v1718 = vmul.f32 %v1677, 1.442695
        %v1719 = vpow.pop %v1718
        %v1720 = vmul.f32 %v1678, 1.442695
        %v1721 = vpow.pop %v1720
        %v1722 = vmul.f32 %v1679, 1.442695
        %v1723 = vpow.pop %v1722
        %v1724 = vmul.f32 %v1680, 1.442695
        %v1725 = vpow.pop %v1724
        %v1726 = vmul.f32 %v1681, 1.442695
        %v1727 = vpow.pop %v1726
        %v1728 = vmul.f32 %v1682, 1.442695
        %v1729 = vpow.pop %v1728
        %v1730 = vmul.f32 %v1683, 1.442695
        %v1731 = vpow.pop %v1730
        %v1732 = vmul.f32 %v1684, 1.442695
        %v1733 = vpow.pop %v1732
        %v1734 = vmul.f32 %v1685, 1.442695
        %v1735 = vpow.pop %v1734
        %v1736 = vmul.f32 %v1686, 1.442695
        %v1737 = vpow.pop %v1736
        %v1738 = vmul.f32 %v1687, 1.442695
        %v1739 = vpow.pop %v1738
        %v1740 = vmul.f32 %v1688, 1.442695
        %v1741 = vpow.pop %v1740
        %v1742 = vmul.f32 %v1689, 1.442695
        %v1743 = vpow.pop %v1742
        %v1744 = vmul.f32 %v1690, 1.442695
        %v1745 = vpow.pop %v1744
        %v1746 = vmul.f32 %v1691, 1.442695
        %v1747 = vpow.pop %v1746
        %v1748 = vmul.f32 %v1692, 1.442695
        %v1749 = vpow.pop %v1748
        %v1750 = vmul.f32 %v1693, 1.442695
        %v1751 = vpow.pop %v1750
        %v1752 = vmul.f32 %v1694, 1.442695
        %v1753 = vpow.pop %v1752
        %v1754 = vmul.f32 %v1695, 1.442695
        %v1755 = vpow.pop %v1754
        %v1756 = vmul.f32 %v1696, 1.442695
        %v1757 = vpow.pop %v1756
        %v1758 = vmul.f32 %v1697, 1.442695
        %v1759 = vpow.pop %v1758
        %v1760 = vmul.f32 %v1698, 1.442695
        %v1761 = vpow.pop %v1760
        %v1762 = vmul.f32 %v1699, 1.442695
        %v1763 = vpow.pop %v1762
        %v1764 = vadd.f32 %v1701, 1.0
        %v1765 = vadd.f32 %v1703, 1.0
        %v1766 = vadd.f32 %v1705, 1.0
        %v1767 = vadd.f32 %v1707, 1.0
        %v1768 = vadd.f32 %v1709, 1.0
        %v1769 = vadd.f32 %v1711, 1.0
        %v1770 = vadd.f32 %v1713, 1.0
        %v1771 = vadd.f32 %v1715, 1.0
        %v1772 = vadd.f32 %v1717, 1.0
        %v1773 = vadd.f32 %v1719, 1.0
        %v1774 = vadd.f32 %v1721, 1.0
        %v1775 = vadd.f32 %v1723, 1.0
        %v1776 = vadd.f32 %v1725, 1.0
        %v1777 = vadd.f32 %v1727, 1.0
        %v1778 = vadd.f32 %v1729, 1.0
        %v1779 = vadd.f32 %v1731, 1.0
        %v1780 = vadd.f32 %v1733, 1.0
        %v1781 = vadd.f32 %v1735, 1.0
        %v1782 = vadd.f32 %v1737, 1.0
        %v1783 = vadd.f32 %v1739, 1.0
        %v1784 = vadd.f32 %v1741, 1.0
        %v1785 = vadd.f32 %v1743, 1.0
        %v1786 = vadd.f32 %v1745, 1.0
        %v1787 = vadd.f32 %v1747, 1.0
        %v1788 = vadd.f32 %v1749, 1.0
        %v1789 = vadd.f32 %v1751, 1.0
        %v1790 = vadd.f32 %v1753, 1.0
        %v1791 = vadd.f32 %v1755, 1.0
        %v1792 = vadd.f32 %v1757, 1.0
        %v1793 = vadd.f32 %v1759, 1.0
        %v1794 = vadd.f32 %v1761, 1.0
        %v1795 = vadd.f32 %v1763, 1.0
        %v1796 = vrcp.pop %v1764
        %v1797 = vmul.f32 1.0, %v1796
        %v1798 = vrcp.pop %v1765
        %v1799 = vmul.f32 1.0, %v1798
        %v1800 = vrcp.pop %v1766
        %v1801 = vmul.f32 1.0, %v1800
        %v1802 = vrcp.pop %v1767
        %v1803 = vmul.f32 1.0, %v1802
        %v1804 = vrcp.pop %v1768
        %v1805 = vmul.f32 1.0, %v1804
        %v1806 = vrcp.pop %v1769
        %v1807 = vmul.f32 1.0, %v1806
        %v1808 = vrcp.pop %v1770
        %v1809 = vmul.f32 1.0, %v1808
        %v1810 = vrcp.pop %v1771
        %v1811 = vmul.f32 1.0, %v1810
        %v1812 = vrcp.pop %v1772
        %v1813 = vmul.f32 1.0, %v1812
        %v1814 = vrcp.pop %v1773
        %v1815 = vmul.f32 1.0, %v1814
        %v1816 = vrcp.pop %v1774
        %v1817 = vmul.f32 1.0, %v1816
        %v1818 = vrcp.pop %v1775
        %v1819 = vmul.f32 1.0, %v1818
        %v1820 = vrcp.pop %v1776
        %v1821 = vmul.f32 1.0, %v1820
        %v1822 = vrcp.pop %v1777
        %v1823 = vmul.f32 1.0, %v1822
        %v1824 = vrcp.pop %v1778
        %v1825 = vmul.f32 1.0, %v1824
        %v1826 = vrcp.pop %v1779
        %v1827 = vmul.f32 1.0, %v1826
        %v1828 = vrcp.pop %v1780
        %v1829 = vmul.f32 1.0, %v1828
        %v1830 = vrcp.pop %v1781
        %v1831 = vmul.f32 1.0, %v1830
        %v1832 = vrcp.pop %v1782
        %v1833 = vmul.f32 1.0, %v1832
        %v1834 = vrcp.pop %v1783
        %v1835 = vmul.f32 1.0, %v1834
        %v1836 = vrcp.pop %v1784
        %v1837 = vmul.f32 1.0, %v1836
        %v1838 = vrcp.pop %v1785
        %v1839 = vmul.f32 1.0, %v1838
        %v1840 = vrcp.pop %v1786
        %v1841 = vmul.f32 1.0, %v1840
        %v1842 = vrcp.pop %v1787
        %v1843 = vmul.f32 1.0, %v1842
        %v1844 = vrcp.pop %v1788
        %v1845 = vmul.f32 1.0, %v1844
        %v1846 = vrcp.pop %v1789
        %v1847 = vmul.f32 1.0, %v1846
        %v1848 = vrcp.pop %v1790
        %v1849 = vmul.f32 1.0, %v1848
        %v1850 = vrcp.pop %v1791
        %v1851 = vmul.f32 1.0, %v1850
        %v1852 = vrcp.pop %v1792
        %v1853 = vmul.f32 1.0, %v1852
        %v1854 = vrcp.pop %v1793
        %v1855 = vmul.f32 1.0, %v1854
        %v1856 = vrcp.pop %v1794
        %v1857 = vmul.f32 1.0, %v1856
        %v1858 = vrcp.pop %v1795
        %v1859 = vmul.f32 1.0, %v1858
        %v1860 = vmul.f32 %v1542, %v1797
        %v1861 = vmul.f32 %v1545, %v1799
        %v1862 = vmul.f32 %v1550, %v1801
        %v1863 = vmul.f32 %v1553, %v1803
        %v1864 = vmul.f32 %v1558, %v1805
        %v1865 = vmul.f32 %v1561, %v1807
        %v1866 = vmul.f32 %v1566, %v1809
        %v1867 = vmul.f32 %v1569, %v1811
        %v1868 = vmul.f32 %v1574, %v1813
        %v1869 = vmul.f32 %v1577, %v1815
        %v1870 = vmul.f32 %v1582, %v1817
        %v1871 = vmul.f32 %v1585, %v1819
        %v1872 = vmul.f32 %v1590, %v1821
        %v1873 = vmul.f32 %v1593, %v1823
        %v1874 = vmul.f32 %v1598, %v1825
        %v1875 = vmul.f32 %v1601, %v1827
        %v1876 = vmul.f32 %v1606, %v1829
        %v1877 = vmul.f32 %v1609, %v1831
        %v1878 = vmul.f32 %v1614, %v1833
        %v1879 = vmul.f32 %v1617, %v1835
        %v1880 = vmul.f32 %v1622, %v1837
        %v1881 = vmul.f32 %v1625, %v1839
        %v1882 = vmul.f32 %v1630, %v1841
        %v1883 = vmul.f32 %v1633, %v1843
        %v1884 = vmul.f32 %v1638, %v1845
        %v1885 = vmul.f32 %v1641, %v1847
        %v1886 = vmul.f32 %v1646, %v1849
        %v1887 = vmul.f32 %v1649, %v1851
        %v1888 = vmul.f32 %v1654, %v1853
        %v1889 = vmul.f32 %v1657, %v1855
        %v1890 = vmul.f32 %v1662, %v1857
        %v1891 = vmul.f32 %v1665, %v1859
        %v1892 = vld [vmem:[%s789] sm:$0xf]
        %v1893 = vld [vmem:[%s789 + $0x4] sm:$0xf]
        %v1894 = vld [vmem:[%s789 + $0x8] sm:$0xf]
        %v1895 = vld [vmem:[%s789 + $0xc] sm:$0xf]
        %v1896 = vld [vmem:[%s789 + $0x10] sm:$0xf]
        %v1897 = vld [vmem:[%s789 + $0x14] sm:$0xf]
        %v1898 = vld [vmem:[%s789 + $0x18] sm:$0xf]
        %v1899 = vld [vmem:[%s789 + $0x1c] sm:$0xf]
        %v1900 = vld [vmem:[%s789 + $0x20] sm:$0xf]
        %v1901 = vld [vmem:[%s789 + $0x24] sm:$0xf]
        %v1902 = vld [vmem:[%s789 + $0x28] sm:$0xf]
        %v1903 = vld [vmem:[%s789 + $0x2c] sm:$0xf]
        %v1904 = vld [vmem:[%s789 + $0x30] sm:$0xf]
        %v1905 = vld [vmem:[%s789 + $0x34] sm:$0xf]
        %v1906 = vld [vmem:[%s789 + $0x38] sm:$0xf]
        %v1907 = vld [vmem:[%s789 + $0x3c] sm:$0xf]
        %v1908 = vld [vmem:[%s789 + $0x40] sm:$0xf]
        %v1909 = vld [vmem:[%s789 + $0x44] sm:$0xf]
        %v1910 = vld [vmem:[%s789 + $0x48] sm:$0xf]
        %v1911 = vld [vmem:[%s789 + $0x4c] sm:$0xf]
        %v1912 = vld [vmem:[%s789 + $0x50] sm:$0xf]
        %v1913 = vld [vmem:[%s789 + $0x54] sm:$0xf]
        %v1914 = vld [vmem:[%s789 + $0x58] sm:$0xf]
        %v1915 = vld [vmem:[%s789 + $0x5c] sm:$0xf]
        %v1916 = vld [vmem:[%s789 + $0x60] sm:$0xf]
        %v1917 = vld [vmem:[%s789 + $0x64] sm:$0xf]
        %v1918 = vld [vmem:[%s789 + $0x68] sm:$0xf]
        %v1919 = vld [vmem:[%s789 + $0x6c] sm:$0xf]
        %v1920 = vld [vmem:[%s789 + $0x70] sm:$0xf]
        %v1921 = vld [vmem:[%s789 + $0x74] sm:$0xf]
        %v1922 = vld [vmem:[%s789 + $0x78] sm:$0xf]
        %v1923 = vld [vmem:[%s789 + $0x7c] sm:$0xf]
        %v1924 = vunpack.c.l.bf16 %v1892
        %v1925 = vunpack.c.l.bf16 %v1893
        %v1926 = vunpack.c.l.bf16 %v1894
        %v1927 = vunpack.c.l.bf16 %v1895
        %v1928 = vunpack.c.l.bf16 %v1896
        %v1929 = vunpack.c.l.bf16 %v1897
        %v1930 = vunpack.c.l.bf16 %v1898
        %v1931 = vunpack.c.l.bf16 %v1899
        %v1932 = vunpack.c.l.bf16 %v1900
        %v1933 = vunpack.c.l.bf16 %v1901
        %v1934 = vunpack.c.l.bf16 %v1902
        %v1935 = vunpack.c.l.bf16 %v1903
        %v1936 = vunpack.c.l.bf16 %v1904
        %v1937 = vunpack.c.l.bf16 %v1905
        %v1938 = vunpack.c.l.bf16 %v1906
        %v1939 = vunpack.c.l.bf16 %v1907
        %v1940 = vunpack.c.l.bf16 %v1908
        %v1941 = vunpack.c.l.bf16 %v1909
        %v1942 = vunpack.c.l.bf16 %v1910
        %v1943 = vunpack.c.l.bf16 %v1911
        %v1944 = vunpack.c.l.bf16 %v1912
        %v1945 = vunpack.c.l.bf16 %v1913
        %v1946 = vunpack.c.l.bf16 %v1914
        %v1947 = vunpack.c.l.bf16 %v1915
        %v1948 = vunpack.c.l.bf16 %v1916
        %v1949 = vunpack.c.l.bf16 %v1917
        %v1950 = vunpack.c.l.bf16 %v1918
        %v1951 = vunpack.c.l.bf16 %v1919
        %v1952 = vunpack.c.l.bf16 %v1920
        %v1953 = vunpack.c.l.bf16 %v1921
        %v1954 = vunpack.c.l.bf16 %v1922
        %v1955 = vunpack.c.l.bf16 %v1923
        %v1956 = vmul.f32 %v1860, %v1924
        %v1957 = vmul.f32 %v1861, %v1925
        %v1958 = vmul.f32 %v1862, %v1926
        %v1959 = vmul.f32 %v1863, %v1927
        %v1960 = vmul.f32 %v1864, %v1928
        %v1961 = vmul.f32 %v1865, %v1929
        %v1962 = vmul.f32 %v1866, %v1930
        %v1963 = vmul.f32 %v1867, %v1931
        %v1964 = vmul.f32 %v1868, %v1932
        %v1965 = vmul.f32 %v1869, %v1933
        %v1966 = vmul.f32 %v1870, %v1934
        %v1967 = vmul.f32 %v1871, %v1935
        %v1968 = vmul.f32 %v1872, %v1936
        %v1969 = vmul.f32 %v1873, %v1937
        %v1970 = vmul.f32 %v1874, %v1938
        %v1971 = vmul.f32 %v1875, %v1939
        %v1972 = vmul.f32 %v1876, %v1940
        %v1973 = vmul.f32 %v1877, %v1941
        %v1974 = vmul.f32 %v1878, %v1942
        %v1975 = vmul.f32 %v1879, %v1943
        %v1976 = vmul.f32 %v1880, %v1944
        %v1977 = vmul.f32 %v1881, %v1945
        %v1978 = vmul.f32 %v1882, %v1946
        %v1979 = vmul.f32 %v1883, %v1947
        %v1980 = vmul.f32 %v1884, %v1948
        %v1981 = vmul.f32 %v1885, %v1949
        %v1982 = vmul.f32 %v1886, %v1950
        %v1983 = vmul.f32 %v1887, %v1951
        %v1984 = vmul.f32 %v1888, %v1952
        %v1985 = vmul.f32 %v1889, %v1953
        %v1986 = vmul.f32 %v1890, %v1954
        %v1987 = vmul.f32 %v1891, %v1955
        %v1988 = vlaneseq
        %v1989 = vand.u32 %v1988, 127
        %v1990 = vld [vmem:[%s799] sm:$0xff]
        %v1991 = vld [vmem:[%s799 + $0x8] sm:$0xff]
        %v1992 = vld [vmem:[%s799 + $0x10] sm:$0xff]
        %v1993 = vld [vmem:[%s799 + $0x18] sm:$0xff]
        %v1994 = vld [vmem:[%s799 + $0x20] sm:$0xff]
        %v1995 = vld [vmem:[%s799 + $0x28] sm:$0xff]
        %v1996 = vld [vmem:[%s799 + $0x30] sm:$0xff]
        %v1997 = vld [vmem:[%s799 + $0x38] sm:$0xff]
        %v1998 = vld [vmem:[%s799 + $0x40] sm:$0xff]
        %v1999 = vld [vmem:[%s799 + $0x48] sm:$0xff]
        %v2000 = vld [vmem:[%s799 + $0x50] sm:$0xff]
        %v2001 = vld [vmem:[%s799 + $0x58] sm:$0xff]
        %v2002 = vld [vmem:[%s799 + $0x60] sm:$0xff]
        %v2003 = vld [vmem:[%s799 + $0x68] sm:$0xff]
        %v2004 = vld [vmem:[%s799 + $0x70] sm:$0xff]
        %v2005 = vld [vmem:[%s799 + $0x78] sm:$0xff]
        %v2006 = vld [vmem:[%s799 + $0x80] sm:$0xff]
        %v2007 = vld [vmem:[%s799 + $0x88] sm:$0xff]
        %v2008 = vld [vmem:[%s799 + $0x90] sm:$0xff]
        %v2009 = vld [vmem:[%s799 + $0x98] sm:$0xff]
        %v2010 = vld [vmem:[%s799 + $0xa0] sm:$0xff]
        %v2011 = vld [vmem:[%s799 + $0xa8] sm:$0xff]
        %v2012 = vld [vmem:[%s799 + $0xb0] sm:$0xff]
        %v2013 = vld [vmem:[%s799 + $0xb8] sm:$0xff]
        %v2014 = vld [vmem:[%s799 + $0xc0] sm:$0xff]
        %v2015 = vld [vmem:[%s799 + $0xc8] sm:$0xff]
        %v2016 = vld [vmem:[%s799 + $0xd0] sm:$0xff]
        %v2017 = vld [vmem:[%s799 + $0xd8] sm:$0xff]
        %v2018 = vld [vmem:[%s799 + $0xe0] sm:$0xff]
        %v2019 = vld [vmem:[%s799 + $0xe8] sm:$0xff]
        %v2020 = vld [vmem:[%s799 + $0xf0] sm:$0xff]
        %v2021 = vld [vmem:[%s799 + $0xf8] sm:$0xff]
        %2022 = vset.pattern.permute.xlu0 0
        %2023 = vperm.xlu0 %2022, %v1990
        %v2024 = vpop.permute.xlu0 %2023
        %2025 = vset.pattern.permute.xlu0 0
        %2026 = vperm.xlu0 %2025, %v1991
        %v2027 = vpop.permute.xlu0 %2026
        %2028 = vset.pattern.permute.xlu0 0
        %2029 = vperm.xlu0 %2028, %v1992
        %v2030 = vpop.permute.xlu0 %2029
        %2031 = vset.pattern.permute.xlu0 0
        %2032 = vperm.xlu0 %2031, %v1993
        %v2033 = vpop.permute.xlu0 %2032
        %2034 = vset.pattern.permute.xlu0 0
        %2035 = vperm.xlu0 %2034, %v1994
        %v2036 = vpop.permute.xlu0 %2035
        %2037 = vset.pattern.permute.xlu0 0
        %2038 = vperm.xlu0 %2037, %v1995
        %v2039 = vpop.permute.xlu0 %2038
        %2040 = vset.pattern.permute.xlu0 0
        %2041 = vperm.xlu0 %2040, %v1996
        %v2042 = vpop.permute.xlu0 %2041
        %2043 = vset.pattern.permute.xlu0 0
        %2044 = vperm.xlu0 %2043, %v1997
        %v2045 = vpop.permute.xlu0 %2044
        %2046 = vset.pattern.permute.xlu0 0
        %2047 = vperm.xlu0 %2046, %v1998
        %v2048 = vpop.permute.xlu0 %2047
        %2049 = vset.pattern.permute.xlu0 0
        %2050 = vperm.xlu0 %2049, %v1999
        %v2051 = vpop.permute.xlu0 %2050
        %2052 = vset.pattern.permute.xlu0 0
        %2053 = vperm.xlu0 %2052, %v2000
        %v2054 = vpop.permute.xlu0 %2053
        %2055 = vset.pattern.permute.xlu0 0
        %2056 = vperm.xlu0 %2055, %v2001
        %v2057 = vpop.permute.xlu0 %2056
        %2058 = vset.pattern.permute.xlu0 0
        %2059 = vperm.xlu0 %2058, %v2002
        %v2060 = vpop.permute.xlu0 %2059
        %2061 = vset.pattern.permute.xlu0 0
        %2062 = vperm.xlu0 %2061, %v2003
        %v2063 = vpop.permute.xlu0 %2062
        %2064 = vset.pattern.permute.xlu0 0
        %2065 = vperm.xlu0 %2064, %v2004
        %v2066 = vpop.permute.xlu0 %2065
        %2067 = vset.pattern.permute.xlu0 0
        %2068 = vperm.xlu0 %2067, %v2005
        %v2069 = vpop.permute.xlu0 %2068
        %2070 = vset.pattern.permute.xlu0 0
        %2071 = vperm.xlu0 %2070, %v2006
        %v2072 = vpop.permute.xlu0 %2071
        %2073 = vset.pattern.permute.xlu0 0
        %2074 = vperm.xlu0 %2073, %v2007
        %v2075 = vpop.permute.xlu0 %2074
        %2076 = vset.pattern.permute.xlu0 0
        %2077 = vperm.xlu0 %2076, %v2008
        %v2078 = vpop.permute.xlu0 %2077
        %2079 = vset.pattern.permute.xlu0 0
        %2080 = vperm.xlu0 %2079, %v2009
        %v2081 = vpop.permute.xlu0 %2080
        %2082 = vset.pattern.permute.xlu0 0
        %2083 = vperm.xlu0 %2082, %v2010
        %v2084 = vpop.permute.xlu0 %2083
        %2085 = vset.pattern.permute.xlu0 0
        %2086 = vperm.xlu0 %2085, %v2011
        %v2087 = vpop.permute.xlu0 %2086
        %2088 = vset.pattern.permute.xlu0 0
        %2089 = vperm.xlu0 %2088, %v2012
        %v2090 = vpop.permute.xlu0 %2089
        %2091 = vset.pattern.permute.xlu0 0
        %2092 = vperm.xlu0 %2091, %v2013
        %v2093 = vpop.permute.xlu0 %2092
        %2094 = vset.pattern.permute.xlu0 0
        %2095 = vperm.xlu0 %2094, %v2014
        %v2096 = vpop.permute.xlu0 %2095
        %2097 = vset.pattern.permute.xlu0 0
        %2098 = vperm.xlu0 %2097, %v2015
        %v2099 = vpop.permute.xlu0 %2098
        %2100 = vset.pattern.permute.xlu0 0
        %2101 = vperm.xlu0 %2100, %v2016
        %v2102 = vpop.permute.xlu0 %2101
        %2103 = vset.pattern.permute.xlu0 0
        %2104 = vperm.xlu0 %2103, %v2017
        %v2105 = vpop.permute.xlu0 %2104
        %2106 = vset.pattern.permute.xlu0 0
        %2107 = vperm.xlu0 %2106, %v2018
        %v2108 = vpop.permute.xlu0 %2107
        %2109 = vset.pattern.permute.xlu0 0
        %2110 = vperm.xlu0 %2109, %v2019
        %v2111 = vpop.permute.xlu0 %2110
        %2112 = vset.pattern.permute.xlu0 0
        %2113 = vperm.xlu0 %2112, %v2020
        %v2114 = vpop.permute.xlu0 %2113
        %2115 = vset.pattern.permute.xlu0 0
        %2116 = vperm.xlu0 %2115, %v2021
        %v2117 = vpop.permute.xlu0 %2116
        %vm2118 = vcmp.eq.s32.totalorder %v1989, %v2024
        %vm2119 = vcmp.eq.s32.totalorder %v1989, %v2027
        %vm2120 = vcmp.eq.s32.totalorder %v1989, %v2030
        %vm2121 = vcmp.eq.s32.totalorder %v1989, %v2033
        %vm2122 = vcmp.eq.s32.totalorder %v1989, %v2036
        %vm2123 = vcmp.eq.s32.totalorder %v1989, %v2039
        %vm2124 = vcmp.eq.s32.totalorder %v1989, %v2042
        %vm2125 = vcmp.eq.s32.totalorder %v1989, %v2045
        %vm2126 = vcmp.eq.s32.totalorder %v1989, %v2048
        %vm2127 = vcmp.eq.s32.totalorder %v1989, %v2051
        %vm2128 = vcmp.eq.s32.totalorder %v1989, %v2054
        %vm2129 = vcmp.eq.s32.totalorder %v1989, %v2057
        %vm2130 = vcmp.eq.s32.totalorder %v1989, %v2060
        %vm2131 = vcmp.eq.s32.totalorder %v1989, %v2063
        %vm2132 = vcmp.eq.s32.totalorder %v1989, %v2066
        %vm2133 = vcmp.eq.s32.totalorder %v1989, %v2069
        %vm2134 = vcmp.eq.s32.totalorder %v1989, %v2072
        %vm2135 = vcmp.eq.s32.totalorder %v1989, %v2075
        %vm2136 = vcmp.eq.s32.totalorder %v1989, %v2078
        %vm2137 = vcmp.eq.s32.totalorder %v1989, %v2081
        %vm2138 = vcmp.eq.s32.totalorder %v1989, %v2084
        %vm2139 = vcmp.eq.s32.totalorder %v1989, %v2087
        %vm2140 = vcmp.eq.s32.totalorder %v1989, %v2090
        %vm2141 = vcmp.eq.s32.totalorder %v1989, %v2093
        %vm2142 = vcmp.eq.s32.totalorder %v1989, %v2096
        %vm2143 = vcmp.eq.s32.totalorder %v1989, %v2099
        %vm2144 = vcmp.eq.s32.totalorder %v1989, %v2102
        %vm2145 = vcmp.eq.s32.totalorder %v1989, %v2105
        %vm2146 = vcmp.eq.s32.totalorder %v1989, %v2108
        %vm2147 = vcmp.eq.s32.totalorder %v1989, %v2111
        %vm2148 = vcmp.eq.s32.totalorder %v1989, %v2114
        %vm2149 = vcmp.eq.s32.totalorder %v1989, %v2117
        %v2150 = vsel %vm2118, 1, 0
        %v2151 = vsel %vm2119, 1, 0
        %v2152 = vsel %vm2120, 1, 0
        %v2153 = vsel %vm2121, 1, 0
        %v2154 = vsel %vm2122, 1, 0
        %v2155 = vsel %vm2123, 1, 0
        %v2156 = vsel %vm2124, 1, 0
        %v2157 = vsel %vm2125, 1, 0
        %v2158 = vsel %vm2126, 1, 0
        %v2159 = vsel %vm2127, 1, 0
        %v2160 = vsel %vm2128, 1, 0
        %v2161 = vsel %vm2129, 1, 0
        %v2162 = vsel %vm2130, 1, 0
        %v2163 = vsel %vm2131, 1, 0
        %v2164 = vsel %vm2132, 1, 0
        %v2165 = vsel %vm2133, 1, 0
        %v2166 = vsel %vm2134, 1, 0
        %v2167 = vsel %vm2135, 1, 0
        %v2168 = vsel %vm2136, 1, 0
        %v2169 = vsel %vm2137, 1, 0
        %v2170 = vsel %vm2138, 1, 0
        %v2171 = vsel %vm2139, 1, 0
        %v2172 = vsel %vm2140, 1, 0
        %v2173 = vsel %vm2141, 1, 0
        %v2174 = vsel %vm2142, 1, 0
        %v2175 = vsel %vm2143, 1, 0
        %v2176 = vsel %vm2144, 1, 0
        %v2177 = vsel %vm2145, 1, 0
        %v2178 = vsel %vm2146, 1, 0
        %v2179 = vsel %vm2147, 1, 0
        %v2180 = vsel %vm2148, 1, 0
        %v2181 = vsel %vm2149, 1, 0
        %v2182 = vcvt.s32.f32 %v2150
        %v2183 = vcvt.s32.f32 %v2151
        %v2184 = vcvt.s32.f32 %v2152
        %v2185 = vcvt.s32.f32 %v2153
        %v2186 = vcvt.s32.f32 %v2154
        %v2187 = vcvt.s32.f32 %v2155
        %v2188 = vcvt.s32.f32 %v2156
        %v2189 = vcvt.s32.f32 %v2157
        %v2190 = vcvt.s32.f32 %v2158
        %v2191 = vcvt.s32.f32 %v2159
        %v2192 = vcvt.s32.f32 %v2160
        %v2193 = vcvt.s32.f32 %v2161
        %v2194 = vcvt.s32.f32 %v2162
        %v2195 = vcvt.s32.f32 %v2163
        %v2196 = vcvt.s32.f32 %v2164
        %v2197 = vcvt.s32.f32 %v2165
        %v2198 = vcvt.s32.f32 %v2166
        %v2199 = vcvt.s32.f32 %v2167
        %v2200 = vcvt.s32.f32 %v2168
        %v2201 = vcvt.s32.f32 %v2169
        %v2202 = vcvt.s32.f32 %v2170
        %v2203 = vcvt.s32.f32 %v2171
        %v2204 = vcvt.s32.f32 %v2172
        %v2205 = vcvt.s32.f32 %v2173
        %v2206 = vcvt.s32.f32 %v2174
        %v2207 = vcvt.s32.f32 %v2175
        %v2208 = vcvt.s32.f32 %v2176
        %v2209 = vcvt.s32.f32 %v2177
        %v2210 = vcvt.s32.f32 %v2178
        %v2211 = vcvt.s32.f32 %v2179
        %v2212 = vcvt.s32.f32 %v2180
        %v2213 = vcvt.s32.f32 %v2181
        %v2214 = vpack.c.bf16 %v2183, %v2182
        %v2215 = vpack.c.bf16 %v2185, %v2184
        %v2216 = vpack.c.bf16 %v2187, %v2186
        %v2217 = vpack.c.bf16 %v2189, %v2188
        %v2218 = vpack.c.bf16 %v2191, %v2190
        %v2219 = vpack.c.bf16 %v2193, %v2192
        %v2220 = vpack.c.bf16 %v2195, %v2194
        %v2221 = vpack.c.bf16 %v2197, %v2196
        %v2222 = vpack.c.bf16 %v2199, %v2198
        %v2223 = vpack.c.bf16 %v2201, %v2200
        %v2224 = vpack.c.bf16 %v2203, %v2202
        %v2225 = vpack.c.bf16 %v2205, %v2204
        %v2226 = vpack.c.bf16 %v2207, %v2206
        %v2227 = vpack.c.bf16 %v2209, %v2208
        %v2228 = vpack.c.bf16 %v2211, %v2210
        %v2229 = vpack.c.bf16 %v2213, %v2212
        %v2230 = vld [vmem:[%s625] sm:$0xf]
        %v2231 = vld [vmem:[%s625 + $0x4] sm:$0xf]
        %v2232 = vld [vmem:[%s625 + $0x8] sm:$0xf]
        %v2233 = vld [vmem:[%s625 + $0xc] sm:$0xf]
        %v2238 = vunpack.c.l.b16 %v2230
        %v2239 = vunpack.c.l.b16 %v2231
        %v2240 = vunpack.c.l.b16 %v2232
        %v2241 = vunpack.c.l.b16 %v2233
        %v2242 = vpack.c.b16 %v2239, %v2238
        %v2243 = vpack.c.b16 %v2241, %v2240
        %vm2246 = vcmask 261120
        %v2248 = vsel %vm2246, %v2214, 0
        %v2251 = vsel %vm2246, %v2215, 0
        %v2254 = vsel %vm2246, %v2216, 0
        %v2257 = vsel %vm2246, %v2217, 0
        %v2260 = vsel %vm2246, %v2218, 0
        %v2263 = vsel %vm2246, %v2219, 0
        %v2266 = vsel %vm2246, %v2220, 0
        %v2269 = vsel %vm2246, %v2221, 0
        %v2272 = vsel %vm2246, %v2222, 0
        %v2275 = vsel %vm2246, %v2223, 0
        %v2278 = vsel %vm2246, %v2224, 0
        %v2281 = vsel %vm2246, %v2225, 0
        %v2284 = vsel %vm2246, %v2226, 0
        %v2287 = vsel %vm2246, %v2227, 0
        %v2290 = vsel %vm2246, %v2228, 0
        %v2293 = vsel %vm2246, %v2229, 0
        %2295 = vmatprep.subr.bf16.mxu0 0
        %2296 = vmatpush1.bf16.msra.mxu0 0
        %2297 = vmatprep.subr.bf16.mxu0 0
        %2298 = vmatpush1.bf16.msra.mxu0 0
        %2299 = vmatprep.subr.bf16.mxu0 0
        %2300 = vmatpush1.bf16.msra.mxu0 0
        %2301 = vmatprep.subr.bf16.mxu0 0
        %2302 = vmatpush1.bf16.msra.mxu0 0
        %2303 = vmatprep.subr.bf16.mxu0 0
        %2304 = vmatpush1.bf16.msra.mxu0 0
        %2305 = vmatprep.subr.bf16.mxu0 0
        %2306 = vmatpush1.bf16.msra.mxu0 0
        %2307 = vmatprep.subr.bf16.mxu0 0
        %2308 = vmatpush1.bf16.msra.mxu0 %v2243
        %2309 = vmatprep.subr.bf16.mxu0 0
        %2310 = vmatpush1.bf16.msra.mxu0 %v2242
        %2311 = vmatprep.subr.bf16.mxu0 0
        %2312 = vmatpush2.bf16.msra.mxu0 0
        %2313 = vmatprep.subr.bf16.mxu0 0
        %2314 = vmatpush2.bf16.msra.mxu0 0
        %2315 = vmatprep.subr.bf16.mxu0 0
        %2316 = vmatpush2.bf16.msra.mxu0 0
        %2317 = vmatprep.subr.bf16.mxu0 0
        %2318 = vmatpush2.bf16.msra.mxu0 0
        %2319 = vmatprep.subr.bf16.mxu0 0
        %2320 = vmatpush2.bf16.msra.mxu0 0
        %2321 = vmatprep.subr.bf16.mxu0 0
        %2322 = vmatpush2.bf16.msra.mxu0 0
        %2323 = vmatprep.subr.bf16.mxu0 0
        %2324 = vmatpush2.bf16.msra.mxu0 0
        %2325 = vmatprep.subr.bf16.mxu0 0
        %2326 = vmatpush2.bf16.msra.mxu0 0
        %2327 = vmatprep.mubr.bf16.mxu0 0
        %2328 = vmatmul.mubr.bf16.gmra.mxu0 %v2248
        %v2329 = vpop.f32.mrf.mxu0
        %v2330 = vadd.f32 0.0, %v2329
        %v2331 = vpop.f32.mrf.mxu0
        %v2332 = vpop.f32.mrf.mxu0
        %v2333 = vadd.f32 0.0, %v2332
        %v2334 = vpop.f32.mrf.mxu0
        %2335 = vmatprep.mubr.bf16.mxu0 0
        %2336 = vmatmul.mubr.bf16.gmra.mxu0 %v2251
        %v2337 = vpop.f32.mrf.mxu0
        %v2338 = vadd.f32 0.0, %v2337
        %v2339 = vpop.f32.mrf.mxu0
        %v2340 = vpop.f32.mrf.mxu0
        %v2341 = vadd.f32 0.0, %v2340
        %v2342 = vpop.f32.mrf.mxu0
        %2343 = vmatprep.mubr.bf16.mxu0 0
        %2344 = vmatmul.mubr.bf16.gmra.mxu0 %v2254
        %v2345 = vpop.f32.mrf.mxu0
        %v2346 = vadd.f32 0.0, %v2345
        %v2347 = vpop.f32.mrf.mxu0
        %v2348 = vpop.f32.mrf.mxu0
        %v2349 = vadd.f32 0.0, %v2348
        %v2350 = vpop.f32.mrf.mxu0
        %2351 = vmatprep.mubr.bf16.mxu0 0
        %2352 = vmatmul.mubr.bf16.gmra.mxu0 %v2257
        %v2353 = vpop.f32.mrf.mxu0
        %v2354 = vadd.f32 0.0, %v2353
        %v2355 = vpop.f32.mrf.mxu0
        %v2356 = vpop.f32.mrf.mxu0
        %v2357 = vadd.f32 0.0, %v2356
        %v2358 = vpop.f32.mrf.mxu0
        %2359 = vmatprep.mubr.bf16.mxu0 0
        %2360 = vmatmul.mubr.bf16.gmra.mxu0 %v2260
        %v2361 = vpop.f32.mrf.mxu0
        %v2362 = vadd.f32 0.0, %v2361
        %v2363 = vpop.f32.mrf.mxu0
        %v2364 = vpop.f32.mrf.mxu0
        %v2365 = vadd.f32 0.0, %v2364
        %v2366 = vpop.f32.mrf.mxu0
        %2367 = vmatprep.mubr.bf16.mxu0 0
        %2368 = vmatmul.mubr.bf16.gmra.mxu0 %v2263
        %v2369 = vpop.f32.mrf.mxu0
        %v2370 = vadd.f32 0.0, %v2369
        %v2371 = vpop.f32.mrf.mxu0
        %v2372 = vpop.f32.mrf.mxu0
        %v2373 = vadd.f32 0.0, %v2372
        %v2374 = vpop.f32.mrf.mxu0
        %2375 = vmatprep.mubr.bf16.mxu0 0
        %2376 = vmatmul.mubr.bf16.gmra.mxu0 %v2266
        %v2377 = vpop.f32.mrf.mxu0
        %v2378 = vadd.f32 0.0, %v2377
        %v2379 = vpop.f32.mrf.mxu0
        %v2380 = vpop.f32.mrf.mxu0
        %v2381 = vadd.f32 0.0, %v2380
        %v2382 = vpop.f32.mrf.mxu0
        %2383 = vmatprep.mubr.bf16.mxu0 0
        %2384 = vmatmul.mubr.bf16.gmra.mxu0 %v2269
        %v2385 = vpop.f32.mrf.mxu0
        %v2386 = vadd.f32 0.0, %v2385
        %v2387 = vpop.f32.mrf.mxu0
        %v2388 = vpop.f32.mrf.mxu0
        %v2389 = vadd.f32 0.0, %v2388
        %v2390 = vpop.f32.mrf.mxu0
        %2391 = vmatprep.mubr.bf16.mxu0 0
        %2392 = vmatmul.mubr.bf16.gmra.mxu0 %v2272
        %v2393 = vpop.f32.mrf.mxu0
        %v2394 = vadd.f32 0.0, %v2393
        %v2395 = vpop.f32.mrf.mxu0
        %v2396 = vpop.f32.mrf.mxu0
        %v2397 = vadd.f32 0.0, %v2396
        %v2398 = vpop.f32.mrf.mxu0
        %2399 = vmatprep.mubr.bf16.mxu0 0
        %2400 = vmatmul.mubr.bf16.gmra.mxu0 %v2275
        %v2401 = vpop.f32.mrf.mxu0
        %v2402 = vadd.f32 0.0, %v2401
        %v2403 = vpop.f32.mrf.mxu0
        %v2404 = vpop.f32.mrf.mxu0
        %v2405 = vadd.f32 0.0, %v2404
        %v2406 = vpop.f32.mrf.mxu0
        %2407 = vmatprep.mubr.bf16.mxu0 0
        %2408 = vmatmul.mubr.bf16.gmra.mxu0 %v2278
        %v2409 = vpop.f32.mrf.mxu0
        %v2410 = vadd.f32 0.0, %v2409
        %v2411 = vpop.f32.mrf.mxu0
        %v2412 = vpop.f32.mrf.mxu0
        %v2413 = vadd.f32 0.0, %v2412
        %v2414 = vpop.f32.mrf.mxu0
        %2415 = vmatprep.mubr.bf16.mxu0 0
        %2416 = vmatmul.mubr.bf16.gmra.mxu0 %v2281
        %v2417 = vpop.f32.mrf.mxu0
        %v2418 = vadd.f32 0.0, %v2417
        %v2419 = vpop.f32.mrf.mxu0
        %v2420 = vpop.f32.mrf.mxu0
        %v2421 = vadd.f32 0.0, %v2420
        %v2422 = vpop.f32.mrf.mxu0
        %2423 = vmatprep.mubr.bf16.mxu0 0
        %2424 = vmatmul.mubr.bf16.gmra.mxu0 %v2284
        %v2425 = vpop.f32.mrf.mxu0
        %v2426 = vadd.f32 0.0, %v2425
        %v2427 = vpop.f32.mrf.mxu0
        %v2428 = vpop.f32.mrf.mxu0
        %v2429 = vadd.f32 0.0, %v2428
        %v2430 = vpop.f32.mrf.mxu0
        %2431 = vmatprep.mubr.bf16.mxu0 0
        %2432 = vmatmul.mubr.bf16.gmra.mxu0 %v2287
        %v2433 = vpop.f32.mrf.mxu0
        %v2434 = vadd.f32 0.0, %v2433
        %v2435 = vpop.f32.mrf.mxu0
        %v2436 = vpop.f32.mrf.mxu0
        %v2437 = vadd.f32 0.0, %v2436
        %v2438 = vpop.f32.mrf.mxu0
        %2439 = vmatprep.mubr.bf16.mxu0 0
        %2440 = vmatmul.mubr.bf16.gmra.mxu0 %v2290
        %v2441 = vpop.f32.mrf.mxu0
        %v2442 = vadd.f32 0.0, %v2441
        %v2443 = vpop.f32.mrf.mxu0
        %v2444 = vpop.f32.mrf.mxu0
        %v2445 = vadd.f32 0.0, %v2444
        %v2446 = vpop.f32.mrf.mxu0
        %2447 = vmatprep.mubr.bf16.mxu0 0
        %2448 = vmatmul.mubr.bf16.gmra.mxu0 %v2293
        %v2449 = vpop.f32.mrf.mxu0
        %v2450 = vadd.f32 0.0, %v2449
        %v2451 = vpop.f32.mrf.mxu0
        %v2452 = vpop.f32.mrf.mxu0
        %v2453 = vadd.f32 0.0, %v2452
        %v2454 = vpop.f32.mrf.mxu0
        %2455 = vdwg.mxu0
        %v2456 = vmul.f32 %v2330, %v1956
        %v2457 = vmul.f32 %v2333, %v1957
        %v2458 = vmul.f32 %v2338, %v1958
        %v2459 = vmul.f32 %v2341, %v1959
        %v2460 = vmul.f32 %v2346, %v1960
        %v2461 = vmul.f32 %v2349, %v1961
        %v2462 = vmul.f32 %v2354, %v1962
        %v2463 = vmul.f32 %v2357, %v1963
        %v2464 = vmul.f32 %v2362, %v1964
        %v2465 = vmul.f32 %v2365, %v1965
        %v2466 = vmul.f32 %v2370, %v1966
        %v2467 = vmul.f32 %v2373, %v1967
        %v2468 = vmul.f32 %v2378, %v1968
        %v2469 = vmul.f32 %v2381, %v1969
        %v2470 = vmul.f32 %v2386, %v1970
        %v2471 = vmul.f32 %v2389, %v1971
        %v2472 = vmul.f32 %v2394, %v1972
        %v2473 = vmul.f32 %v2397, %v1973
        %v2474 = vmul.f32 %v2402, %v1974
        %v2475 = vmul.f32 %v2405, %v1975
        %v2476 = vmul.f32 %v2410, %v1976
        %v2477 = vmul.f32 %v2413, %v1977
        %v2478 = vmul.f32 %v2418, %v1978
        %v2479 = vmul.f32 %v2421, %v1979
        %v2480 = vmul.f32 %v2426, %v1980
        %v2481 = vmul.f32 %v2429, %v1981
        %v2482 = vmul.f32 %v2434, %v1982
        %v2483 = vmul.f32 %v2437, %v1983
        %v2484 = vmul.f32 %v2442, %v1984
        %v2485 = vmul.f32 %v2445, %v1985
        %v2486 = vmul.f32 %v2450, %v1986
        %v2487 = vmul.f32 %v2453, %v1987
        %v2488 = vlaneseq
        %v2489 = vshrl.u32 %v2488, 7
        %v2490 = vadd.s32 %v2489, 8
        %v2491 = vadd.s32 %v2489, 16
        %v2492 = vadd.s32 %v2489, 24
        %v2493 = vld [vmem:[%s808] sm:$0x3]
        %v2494 = vlaneseq
        %v2495 = vshrl.u32 %v2494, 7
        %v2496 = vsub.s32 0, %v2495
        %v2497 = vrot.slane %v2493, %v2496
        %v2498 = vlaneseq
        %v2499 = vshrl.u32 %v2498, 7
        %v2500 = vsub.s32 1, %v2499
        %v2501 = vrot.slane %v2493, %v2500
        %vm2502 = vcmp.eq.s32.totalorder %v2489, %v2497
        %vm2503 = vcmp.eq.s32.totalorder %v2489, %v2501
        %vm2504 = vcmp.eq.s32.totalorder %v2490, %v2497
        %vm2505 = vcmp.eq.s32.totalorder %v2490, %v2501
        %vm2506 = vcmp.eq.s32.totalorder %v2491, %v2497
        %vm2507 = vcmp.eq.s32.totalorder %v2491, %v2501
        %vm2508 = vcmp.eq.s32.totalorder %v2492, %v2497
        %vm2509 = vcmp.eq.s32.totalorder %v2492, %v2501
        %v2510 = vsel %vm2502, 1, 0
        %v2511 = vsel %vm2503, 1, 0
        %v2512 = vsel %vm2504, 1, 0
        %v2513 = vsel %vm2505, 1, 0
        %v2514 = vsel %vm2506, 1, 0
        %v2515 = vsel %vm2507, 1, 0
        %v2516 = vsel %vm2508, 1, 0
        %v2517 = vsel %vm2509, 1, 0
        %v2518 = vcvt.s32.f32 %v2510
        %v2519 = vcvt.s32.f32 %v2511
        %v2520 = vcvt.s32.f32 %v2512
        %v2521 = vcvt.s32.f32 %v2513
        %v2522 = vcvt.s32.f32 %v2514
        %v2523 = vcvt.s32.f32 %v2515
        %v2524 = vcvt.s32.f32 %v2516
        %v2525 = vcvt.s32.f32 %v2517
        %v2526 = vld [vmem:[#allocation2] sm:$0xff]
        %v2527 = vld [vmem:[#allocation2 + $0x8] sm:$0xff]
        %v2528 = vld [vmem:[#allocation2 + $0x10] sm:$0xff]
        %v2529 = vld [vmem:[#allocation2 + $0x18] sm:$0xff]
        %v2530 = vpack.c.bf16 %v2520, %v2518
        %v2531 = vpack.c.bf16 %v2521, %v2519
        %v2532 = vpack.c.bf16 %v2524, %v2522
        %v2533 = vpack.c.bf16 %v2525, %v2523
        %v2534 = vpack.c.bf16 %v2457, %v2456
        %v2535 = vpack.c.bf16 %v2459, %v2458
        %v2536 = vpack.c.bf16 %v2461, %v2460
        %v2537 = vpack.c.bf16 %v2463, %v2462
        %v2538 = vpack.c.bf16 %v2465, %v2464
        %v2539 = vpack.c.bf16 %v2467, %v2466
        %v2540 = vpack.c.bf16 %v2469, %v2468
        %v2541 = vpack.c.bf16 %v2471, %v2470
        %v2542 = vpack.c.bf16 %v2473, %v2472
        %v2543 = vpack.c.bf16 %v2475, %v2474
        %v2544 = vpack.c.bf16 %v2477, %v2476
        %v2545 = vpack.c.bf16 %v2479, %v2478
        %v2546 = vpack.c.bf16 %v2481, %v2480
        %v2547 = vpack.c.bf16 %v2483, %v2482
        %v2548 = vpack.c.bf16 %v2485, %v2484
        %v2549 = vpack.c.bf16 %v2487, %v2486
        %2550 = vmatprep.subr.bf16.mxu0 0
        %2551 = vmatpush1.bf16.msra.mxu0 %v2541
        %2552 = vmatprep.subr.bf16.mxu0 0
        %2553 = vmatpush1.bf16.msra.mxu0 %v2540
        %2554 = vmatprep.subr.bf16.mxu0 0
        %2555 = vmatpush1.bf16.msra.mxu0 %v2539
        %2556 = vmatprep.subr.bf16.mxu0 0
        %2557 = vmatpush1.bf16.msra.mxu0 %v2538
        %2558 = vmatprep.subr.bf16.mxu0 0
        %2559 = vmatpush1.bf16.msra.mxu0 %v2537
        %2560 = vmatprep.subr.bf16.mxu0 0
        %2561 = vmatpush1.bf16.msra.mxu0 %v2536
        %2562 = vmatprep.subr.bf16.mxu0 0
        %2563 = vmatpush1.bf16.msra.mxu0 %v2535
        %2564 = vmatprep.subr.bf16.mxu0 0
        %2565 = vmatpush1.bf16.msra.mxu0 %v2534
        %2566 = vmatprep.subr.bf16.mxu0 0
        %2567 = vmatpush2.bf16.msra.mxu0 %v2549
        %2568 = vmatprep.subr.bf16.mxu0 0
        %2569 = vmatpush2.bf16.msra.mxu0 %v2548
        %2570 = vmatprep.subr.bf16.mxu0 0
        %2571 = vmatpush2.bf16.msra.mxu0 %v2547
        %2572 = vmatprep.subr.bf16.mxu0 0
        %2573 = vmatpush2.bf16.msra.mxu0 %v2546
        %2574 = vmatprep.subr.bf16.mxu0 0
        %2575 = vmatpush2.bf16.msra.mxu0 %v2545
        %2576 = vmatprep.subr.bf16.mxu0 0
        %2577 = vmatpush2.bf16.msra.mxu0 %v2544
        %2578 = vmatprep.subr.bf16.mxu0 0
        %2579 = vmatpush2.bf16.msra.mxu0 %v2543
        %2580 = vmatprep.subr.bf16.mxu0 0
        %2581 = vmatpush2.bf16.msra.mxu0 %v2542
        %2582 = vmatprep.mubr.bf16.mxu0 %v2531
        %2583 = vmatmul.mubr.bf16.gmra.mxu0 %v2530
        %v2584 = vpop.f32.mrf.mxu0
        %v2585 = vadd.f32 0.0, %v2584
        %v2586 = vpop.f32.mrf.mxu0
        %v2587 = vpop.f32.mrf.mxu0
        %v2588 = vadd.f32 0.0, %v2587
        %v2589 = vpop.f32.mrf.mxu0
        %2590 = vmatprep.mubr.bf16.mxu0 %v2533
        %2591 = vmatmul.mubr.bf16.gmra.mxu0 %v2532
        %v2592 = vpop.f32.mrf.mxu0
        %v2593 = vadd.f32 0.0, %v2592
        %v2594 = vpop.f32.mrf.mxu0
        %v2595 = vpop.f32.mrf.mxu0
        %v2596 = vadd.f32 0.0, %v2595
        %v2597 = vpop.f32.mrf.mxu0
        %2598 = vdwg.mxu0
        %v2599 = vadd.f32 %v2526, %v2585
        %v2600 = vadd.f32 %v2527, %v2588
        %v2601 = vadd.f32 %v2528, %v2593
        %v2602 = vadd.f32 %v2529, %v2596
        %2603 = vst [vmem:[#allocation2] sm:$0xff] %v2599
        %2604 = vst [vmem:[#allocation2 + $0x8] sm:$0xff] %v2600
        %2605 = vst [vmem:[#allocation2 + $0x10] sm:$0xff] %v2601
        %2606 = vst [vmem:[#allocation2 + $0x18] sm:$0xff] %v2602
        %v2607 = vld [vmem:[#allocation3] sm:$0xff]
        %v2608 = vld [vmem:[#allocation3 + $0x8] sm:$0xff]
        %v2609 = vld [vmem:[#allocation3 + $0x10] sm:$0xff]
        %v2610 = vld [vmem:[#allocation3 + $0x18] sm:$0xff]
        %v2611 = vadd.f32 %v2518, %v2519
        %2612 = vadd.xlane.f32.xlu0 %v2611
        %v2613 = vpop.xlane.xlu0 %2612
        %v2614 = vadd.f32 %v2520, %v2521
        %2615 = vadd.xlane.f32.xlu0 %v2614
        %v2616 = vpop.xlane.xlu0 %2615
        %v2617 = vadd.f32 %v2522, %v2523
        %2618 = vadd.xlane.f32.xlu0 %v2617
        %v2619 = vpop.xlane.xlu0 %2618
        %v2620 = vadd.f32 %v2524, %v2525
        %2621 = vadd.xlane.f32.xlu0 %v2620
        %v2622 = vpop.xlane.xlu0 %2621
        %v2623 = vadd.f32 %v2607, %v2613
        %v2624 = vadd.f32 %v2608, %v2616
        %v2625 = vadd.f32 %v2609, %v2619
        %v2626 = vadd.f32 %v2610, %v2622
        %vm2627 = vcmask 7168
        %2628 = vst.msk [vmem:[#allocation3] sm:$0xff] %vm2627, %v2623
        %2629 = vst.msk [vmem:[#allocation3 + $0x8] sm:$0xff] %vm2627, %v2624
        %2630 = vst.msk [vmem:[#allocation3 + $0x10] sm:$0xff] %vm2627, %v2625
        %2631 = vst.msk [vmem:[#allocation3 + $0x18] sm:$0xff] %vm2627, %v2626
        // Predicated region
        $region97: #{tpu_custom_call.1} parent=71 // pred_check
          %p2632 = pneg %p823
        $region98: #{tpu_custom_call.1} parent=71 // pred_check_branch
          %2634 = sbr.rel (%p2632) target = $region100
        $region99: #{tpu_custom_call.1} parent=71 // pred_region
          %v2635 = vld [vmem:[#allocation2] sm:$0xff]
          %v2636 = vld [vmem:[#allocation2 + $0x8] sm:$0xff]
          %v2637 = vld [vmem:[#allocation2 + $0x10] sm:$0xff]
          %v2638 = vld [vmem:[#allocation2 + $0x18] sm:$0xff]
          %v2639 = vld [vmem:[#allocation3] sm:$0xff]
          %v2640 = vld [vmem:[#allocation3 + $0x8] sm:$0xff]
          %v2641 = vld [vmem:[#allocation3 + $0x10] sm:$0xff]
          %v2642 = vld [vmem:[#allocation3 + $0x18] sm:$0xff]
          %v2643 = vmax.f32 %v2639, 1.0
          %v2644 = vmax.f32 %v2640, 1.0
          %v2645 = vmax.f32 %v2641, 1.0
          %v2646 = vmax.f32 %v2642, 1.0
          %2648 = vset.pattern.permute.xlu0 0
          %2649 = vperm.xlu0 %2648, %v2643
          %v2650 = vpop.permute.xlu0 %2649
          %2653 = vset.pattern.permute.xlu0 0
          %2654 = vperm.xlu0 %2653, %v2644
          %v2655 = vpop.permute.xlu0 %2654
          %2658 = vset.pattern.permute.xlu0 0
          %2659 = vperm.xlu0 %2658, %v2645
          %v2660 = vpop.permute.xlu0 %2659
          %2663 = vset.pattern.permute.xlu0 0
          %2664 = vperm.xlu0 %2663, %v2646
          %v2665 = vpop.permute.xlu0 %2664
          %v2667 = vrcp.pop %v2650
          %v2668 = vmul.f32 %v2635, %v2667
          %v2669 = vrcp.pop %v2655
          %v2670 = vmul.f32 %v2636, %v2669
          %v2671 = vrcp.pop %v2660
          %v2672 = vmul.f32 %v2637, %v2671
          %v2673 = vrcp.pop %v2665
          %v2674 = vmul.f32 %v2638, %v2673
          %v2675 = vpack.c.bf16 %v2670, %v2668
          %v2676 = vpack.c.bf16 %v2674, %v2672
          %v2677 = vld [vmem:[%s652] sm:$0xf]
          %v2678 = vld [vmem:[%s652 + $0x4] sm:$0xf]
          %v2679 = vld [vmem:[%s652 + $0x8] sm:$0xf]
          %v2680 = vld [vmem:[%s652 + $0xc] sm:$0xf]
          %v2681 = vld [vmem:[%s652 + $0x10] sm:$0xf]
          %v2682 = vld [vmem:[%s652 + $0x14] sm:$0xf]
          %v2683 = vld [vmem:[%s652 + $0x18] sm:$0xf]
          %v2684 = vld [vmem:[%s652 + $0x1c] sm:$0xf]
          %v2685 = vld [vmem:[%s652 + $0x20] sm:$0xf]
          %v2686 = vld [vmem:[%s652 + $0x24] sm:$0xf]
          %v2687 = vld [vmem:[%s652 + $0x28] sm:$0xf]
          %v2688 = vld [vmem:[%s652 + $0x2c] sm:$0xf]
          %v2689 = vld [vmem:[%s652 + $0x30] sm:$0xf]
          %v2690 = vld [vmem:[%s652 + $0x34] sm:$0xf]
          %v2691 = vld [vmem:[%s652 + $0x38] sm:$0xf]
          %v2692 = vld [vmem:[%s652 + $0x3c] sm:$0xf]
          %v2693 = vld [vmem:[%s818] sm:$0x1]
          %v2695 = vlaneseq
          %v2696 = vshrl.u32 %v2695, 7
          %v2697 = vsub.s32 0, %v2696
          %v2698 = vrot.slane %v2693, %v2697
          %v2716 = vunpack.c.l.b16 %v2677
          %v2717 = vunpack.c.l.b16 %v2678
          %v2718 = vunpack.c.l.b16 %v2679
          %v2719 = vunpack.c.l.b16 %v2680
          %v2720 = vunpack.c.l.b16 %v2681
          %v2721 = vunpack.c.l.b16 %v2682
          %v2722 = vunpack.c.l.b16 %v2683
          %v2723 = vunpack.c.l.b16 %v2684
          %v2724 = vunpack.c.l.b16 %v2685
          %v2725 = vunpack.c.l.b16 %v2686
          %v2726 = vunpack.c.l.b16 %v2687
          %v2727 = vunpack.c.l.b16 %v2688
          %v2728 = vunpack.c.l.b16 %v2689
          %v2729 = vunpack.c.l.b16 %v2690
          %v2730 = vunpack.c.l.b16 %v2691
          %v2731 = vunpack.c.l.b16 %v2692
          %v2732 = vpack.c.b16 %v2717, %v2716
          %v2733 = vpack.c.b16 %v2719, %v2718
          %v2734 = vpack.c.b16 %v2721, %v2720
          %v2735 = vpack.c.b16 %v2723, %v2722
          %v2736 = vpack.c.b16 %v2725, %v2724
          %v2737 = vpack.c.b16 %v2727, %v2726
          %v2738 = vpack.c.b16 %v2729, %v2728
          %v2739 = vpack.c.b16 %v2731, %v2730
          %2748 = vmatprep.subr.bf16.mxu0 0
          %2749 = vmatpush1.bf16.msra.mxu0 %v2739
          %2750 = vmatprep.subr.bf16.mxu0 0
          %2751 = vmatpush1.bf16.msra.mxu0 %v2738
          %2752 = vmatprep.subr.bf16.mxu0 0
          %2753 = vmatpush1.bf16.msra.mxu0 %v2737
          %2754 = vmatprep.subr.bf16.mxu0 0
          %2755 = vmatpush1.bf16.msra.mxu0 %v2736
          %2756 = vmatprep.subr.bf16.mxu0 0
          %2757 = vmatpush1.bf16.msra.mxu0 %v2735
          %2758 = vmatprep.subr.bf16.mxu0 0
          %2759 = vmatpush1.bf16.msra.mxu0 %v2734
          %2760 = vmatprep.subr.bf16.mxu0 0
          %2761 = vmatpush1.bf16.msra.mxu0 %v2733
          %2762 = vmatprep.subr.bf16.mxu0 0
          %2763 = vmatpush1.bf16.msra.mxu0 %v2732
          %2764 = vmatprep.subr.bf16.mxu0 0
          %2765 = vmatpush2.bf16.msra.mxu0 0
          %2766 = vmatprep.subr.bf16.mxu0 0
          %2767 = vmatpush2.bf16.msra.mxu0 0
          %2768 = vmatprep.subr.bf16.mxu0 0
          %2769 = vmatpush2.bf16.msra.mxu0 0
          %2770 = vmatprep.subr.bf16.mxu0 0
          %2771 = vmatpush2.bf16.msra.mxu0 0
          %2772 = vmatprep.subr.bf16.mxu0 0
          %2773 = vmatpush2.bf16.msra.mxu0 0
          %2774 = vmatprep.subr.bf16.mxu0 0
          %2775 = vmatpush2.bf16.msra.mxu0 0
          %2776 = vmatprep.subr.bf16.mxu0 0
          %2777 = vmatpush2.bf16.msra.mxu0 0
          %2778 = vmatprep.subr.bf16.mxu0 0
          %2779 = vmatpush2.bf16.msra.mxu0 0
          %2780 = vmatprep.mubr.bf16.mxu0 0
          %2781 = vmatmul.mubr.bf16.gmra.mxu0 %v2675
          %v2782 = vpop.f32.mrf.mxu0
          %v2783 = vadd.f32 %v2698, %v2782
          %v2784 = vpop.f32.mrf.mxu0
          %v2785 = vpop.f32.mrf.mxu0
          %v2786 = vadd.f32 %v2698, %v2785
          %v2787 = vpop.f32.mrf.mxu0
          %2788 = vmatprep.mubr.bf16.mxu0 0
          %2789 = vmatmul.mubr.bf16.gmra.mxu0 %v2676
          %v2790 = vpop.f32.mrf.mxu0
          %v2791 = vadd.f32 %v2698, %v2790
          %v2792 = vpop.f32.mrf.mxu0
          %v2793 = vpop.f32.mrf.mxu0
          %v2794 = vadd.f32 %v2698, %v2793
          %v2795 = vpop.f32.mrf.mxu0
          %2796 = vdwg.mxu0
          %v2797 = vxor.u32 %v2783, 2147483648
          %v2798 = vxor.u32 %v2786, 2147483648
          %v2799 = vxor.u32 %v2791, 2147483648
          %v2800 = vxor.u32 %v2794, 2147483648
          %v2801 = vmul.f32 %v2797, 1.442695
          %v2802 = vpow.pop %v2801
          %v2803 = vmul.f32 %v2798, 1.442695
          %v2804 = vpow.pop %v2803
          %v2805 = vmul.f32 %v2799, 1.442695
          %v2806 = vpow.pop %v2805
          %v2807 = vmul.f32 %v2800, 1.442695
          %v2808 = vpow.pop %v2807
          %v2809 = vadd.f32 %v2802, 1.0
          %v2810 = vadd.f32 %v2804, 1.0
          %v2811 = vadd.f32 %v2806, 1.0
          %v2812 = vadd.f32 %v2808, 1.0
          %v2813 = vrcp.pop %v2809
          %v2814 = vmul.f32 1.0, %v2813
          %v2815 = vrcp.pop %v2810
          %v2816 = vmul.f32 1.0, %v2815
          %v2817 = vrcp.pop %v2811
          %v2818 = vmul.f32 1.0, %v2817
          %v2819 = vrcp.pop %v2812
          %v2820 = vmul.f32 1.0, %v2819
          %v2821 = vmul.f32 %v2783, %v2814
          %v2822 = vmul.f32 %v2786, %v2816
          %v2823 = vmul.f32 %v2791, %v2818
          %v2824 = vmul.f32 %v2794, %v2820
          %v2825 = vpack.c.bf16 %v2822, %v2821
          %v2826 = vpack.c.bf16 %v2824, %v2823
          %v2827 = vld [vmem:[%s661] sm:$0xf]
          %v2828 = vld [vmem:[%s661 + $0x4] sm:$0xf]
          %v2829 = vld [vmem:[%s661 + $0x8] sm:$0xf]
          %v2830 = vld [vmem:[%s661 + $0xc] sm:$0xf]
          %v2831 = vld [vmem:[%s661 + $0x10] sm:$0xf]
          %v2832 = vld [vmem:[%s661 + $0x14] sm:$0xf]
          %v2833 = vld [vmem:[%s661 + $0x18] sm:$0xf]
          %v2834 = vld [vmem:[%s661 + $0x1c] sm:$0xf]
          %v2835 = vld [vmem:[%s661 + $0x20] sm:$0xf]
          %v2836 = vld [vmem:[%s661 + $0x24] sm:$0xf]
          %v2837 = vld [vmem:[%s661 + $0x28] sm:$0xf]
          %v2838 = vld [vmem:[%s661 + $0x2c] sm:$0xf]
          %v2839 = vld [vmem:[%s661 + $0x30] sm:$0xf]
          %v2840 = vld [vmem:[%s661 + $0x34] sm:$0xf]
          %v2841 = vld [vmem:[%s661 + $0x38] sm:$0xf]
          %v2842 = vld [vmem:[%s661 + $0x3c] sm:$0xf]
          %v2843 = vld [vmem:[%s821] sm:$0x1]
          %v2845 = vlaneseq
          %v2846 = vshrl.u32 %v2845, 7
          %v2847 = vsub.s32 0, %v2846
          %v2848 = vrot.slane %v2843, %v2847
          %v2866 = vunpack.c.l.b16 %v2827
          %v2867 = vunpack.c.l.b16 %v2828
          %v2868 = vunpack.c.l.b16 %v2829
          %v2869 = vunpack.c.l.b16 %v2830
          %v2870 = vunpack.c.l.b16 %v2831
          %v2871 = vunpack.c.l.b16 %v2832
          %v2872 = vunpack.c.l.b16 %v2833
          %v2873 = vunpack.c.l.b16 %v2834
          %v2874 = vunpack.c.l.b16 %v2835
          %v2875 = vunpack.c.l.b16 %v2836
          %v2876 = vunpack.c.l.b16 %v2837
          %v2877 = vunpack.c.l.b16 %v2838
          %v2878 = vunpack.c.l.b16 %v2839
          %v2879 = vunpack.c.l.b16 %v2840
          %v2880 = vunpack.c.l.b16 %v2841
          %v2881 = vunpack.c.l.b16 %v2842
          %v2882 = vpack.c.b16 %v2867, %v2866
          %v2883 = vpack.c.b16 %v2869, %v2868
          %v2884 = vpack.c.b16 %v2871, %v2870
          %v2885 = vpack.c.b16 %v2873, %v2872
          %v2886 = vpack.c.b16 %v2875, %v2874
          %v2887 = vpack.c.b16 %v2877, %v2876
          %v2888 = vpack.c.b16 %v2879, %v2878
          %v2889 = vpack.c.b16 %v2881, %v2880
          %2898 = vmatprep.subr.bf16.mxu0 0
          %2899 = vmatpush1.bf16.msra.mxu0 %v2889
          %2900 = vmatprep.subr.bf16.mxu0 0
          %2901 = vmatpush1.bf16.msra.mxu0 %v2888
          %2902 = vmatprep.subr.bf16.mxu0 0
          %2903 = vmatpush1.bf16.msra.mxu0 %v2887
          %2904 = vmatprep.subr.bf16.mxu0 0
          %2905 = vmatpush1.bf16.msra.mxu0 %v2886
          %2906 = vmatprep.subr.bf16.mxu0 0
          %2907 = vmatpush1.bf16.msra.mxu0 %v2885
          %2908 = vmatprep.subr.bf16.mxu0 0
          %2909 = vmatpush1.bf16.msra.mxu0 %v2884
          %2910 = vmatprep.subr.bf16.mxu0 0
          %2911 = vmatpush1.bf16.msra.mxu0 %v2883
          %2912 = vmatprep.subr.bf16.mxu0 0
          %2913 = vmatpush1.bf16.msra.mxu0 %v2882
          %2914 = vmatprep.subr.bf16.mxu0 0
          %2915 = vmatpush2.bf16.msra.mxu0 0
          %2916 = vmatprep.subr.bf16.mxu0 0
          %2917 = vmatpush2.bf16.msra.mxu0 0
          %2918 = vmatprep.subr.bf16.mxu0 0
          %2919 = vmatpush2.bf16.msra.mxu0 0
          %2920 = vmatprep.subr.bf16.mxu0 0
          %2921 = vmatpush2.bf16.msra.mxu0 0
          %2922 = vmatprep.subr.bf16.mxu0 0
          %2923 = vmatpush2.bf16.msra.mxu0 0
          %2924 = vmatprep.subr.bf16.mxu0 0
          %2925 = vmatpush2.bf16.msra.mxu0 0
          %2926 = vmatprep.subr.bf16.mxu0 0
          %2927 = vmatpush2.bf16.msra.mxu0 0
          %2928 = vmatprep.subr.bf16.mxu0 0
          %2929 = vmatpush2.bf16.msra.mxu0 0
          %2930 = vmatprep.mubr.bf16.mxu0 0
          %2931 = vmatmul.mubr.bf16.gmra.mxu0 %v2825
          %v2932 = vpop.f32.mrf.mxu0
          %v2933 = vadd.f32 %v2848, %v2932
          %v2934 = vpop.f32.mrf.mxu0
          %v2935 = vpop.f32.mrf.mxu0
          %v2936 = vadd.f32 %v2848, %v2935
          %v2937 = vpop.f32.mrf.mxu0
          %2938 = vmatprep.mubr.bf16.mxu0 0
          %2939 = vmatmul.mubr.bf16.gmra.mxu0 %v2826
          %v2940 = vpop.f32.mrf.mxu0
          %v2941 = vadd.f32 %v2848, %v2940
          %v2942 = vpop.f32.mrf.mxu0
          %v2943 = vpop.f32.mrf.mxu0
          %v2944 = vadd.f32 %v2848, %v2943
          %v2945 = vpop.f32.mrf.mxu0
          %2946 = vdwg.mxu0
          %v2947 = vxor.u32 %v2933, 2147483648
          %v2948 = vxor.u32 %v2936, 2147483648
          %v2949 = vxor.u32 %v2941, 2147483648
          %v2950 = vxor.u32 %v2944, 2147483648
          %v2951 = vmul.f32 %v2947, 1.442695
          %v2952 = vpow.pop %v2951
          %v2953 = vmul.f32 %v2948, 1.442695
          %v2954 = vpow.pop %v2953
          %v2955 = vmul.f32 %v2949, 1.442695
          %v2956 = vpow.pop %v2955
          %v2957 = vmul.f32 %v2950, 1.442695
          %v2958 = vpow.pop %v2957
          %v2959 = vadd.f32 %v2952, 1.0
          %v2960 = vadd.f32 %v2954, 1.0
          %v2961 = vadd.f32 %v2956, 1.0
          %v2962 = vadd.f32 %v2958, 1.0
          %v2963 = vrcp.pop %v2959
          %v2964 = vmul.f32 1.0, %v2963
          %v2965 = vrcp.pop %v2960
          %v2966 = vmul.f32 1.0, %v2965
          %v2967 = vrcp.pop %v2961
          %v2968 = vmul.f32 1.0, %v2967
          %v2969 = vrcp.pop %v2962
          %v2970 = vmul.f32 1.0, %v2969
          %v2971 = vmul.f32 %v2933, %v2964
          %v2972 = vmul.f32 %v2936, %v2966
          %v2973 = vmul.f32 %v2941, %v2968
          %v2974 = vmul.f32 %v2944, %v2970
          %2975 = vst [vmem:[%s770] sm:$0xff] %v2971
          %2976 = vst [vmem:[%s770 + $0x8] sm:$0xff] %v2972
          %2977 = vst [vmem:[%s770 + $0x10] sm:$0xff] %v2973
          %2978 = vst [vmem:[%s770 + $0x18] sm:$0xff] %v2974
        $region100: #{tpu_custom_call.1} parent=71 // pred_fallthru
          _
        %s2979 = sand.u32 %s402, 1
        %s2980 = scalar_lea.sflag [#allocation6], %s2979
        %s2981 = sand.u32 %s402, 1
        %s2982 = smul.addr %s2981, 32
        %s2983 = scalar_lea.vmem [#allocation13], %s2982
        // Predicated region
        $region101: #{tpu_custom_call.1} parent=71 // pred_check
          %p2984 = pneg %p412
        $region102: #{tpu_custom_call.1} parent=71 // pred_check_branch
          %2986 = sbr.rel (%p2984) target = $region104
        $region103: #{tpu_custom_call.1} parent=71 // pred_region
          %s2988 = ssub.s32 512, 512
          %2989 = vsyncadd %s2980, %s2988
          %s2990 = smul.addr %s40, 4
          %s2991 = smul.addr %s2990, 128
          %s2992 = scalar_lea.hbm %s13, %s2991
          %s2993 = sshll.u32 %s2983, 4
          %s2994 = int_to_ptr.vmem [resolvable:$true] %s2993
          %2999 = dma.vmem_to_hbm [thread:$0]  %s2994, 512, %s2992, %s2980, 128, 128, 8
        $region104: #{tpu_custom_call.1} parent=71 // pred_fallthru
          _
      $region72: #{tpu_custom_call.1} parent=5 // pred_fallthru
        _
      %p3000 = scmp.le.s32.totalorder 2, %s31
      // Predicated region
      $region105: #{tpu_custom_call.1} parent=5 // pred_check
        %p3001 = pneg %p3000
      $region106: #{tpu_custom_call.1} parent=5 // pred_check_branch
        %3003 = sbr.rel (%p3001) target = $region108
      $region107: #{tpu_custom_call.1} parent=5 // pred_region
        %s3004 = ssub.s32 %s31, 2
        // Predicated region
        $region109: #{tpu_custom_call.1} parent=107 // pred_check
          %p3005 = pneg %p418
        $region110: #{tpu_custom_call.1} parent=107 // pred_check_branch
          %3007 = sbr.rel (%p3005) target = $region112
        $region111: #{tpu_custom_call.1} parent=107 // pred_region
          %s3008 = sand.u32 %s403, 1
          %s3009 = scalar_lea.sflag [#allocation6], %s3008
          %s3010 = sand.u32 %s403, 1
          %s3011 = smul.addr %s3010, 32
          %s3012 = scalar_lea.vmem [#allocation13], %s3011
          %3013 = dma.done %s3009, 512
        $region112: #{tpu_custom_call.1} parent=107 // pred_fallthru
          _
      $region108: #{tpu_custom_call.1} parent=5 // pred_fallthru
        _
    $region6: #{tpu_custom_call.1} parent=1 // loop_footer
      %s35 = sadd.s32 1, %s31
    $region7: #{tpu_custom_call.1} parent=1 // loop_footer_branch
      %30 = sbr.rel target = $region3
    $region8: #{tpu_custom_call.1} parent=1 // loop_exit
      _
    %3014 = vsyncpa [#allocation5], 1
    %s3015 = scalar_lea.sflag [#allocation5], 1
    %3016 = vsyncpa %s3015, 1
    %3017 = vsyncpa [#allocation8], 1
    %s3018 = scalar_lea.sflag [#allocation8], 1
    %3019 = vsyncpa %s3018, 1
    %3020 = vsyncpa [#allocation11], 1
    %s3021 = scalar_lea.sflag [#allocation11], 1
    %3022 = vsyncpa %s3021, 1
    %3023 = vsyncpa [#allocation6], 1
    %s3024 = scalar_lea.sflag [#allocation6], 1
    %3025 = vsyncpa %s3024, 1

</llo_original>
